<compile_context>
chip_gen: v7x
topology: tpu7x:2x2x1
jax: 0.10.0
libtpu: 0.0.40
codegen_flags: <defaults>
</compile_context>

<pallas_src>
import functools

import jax
import jax.numpy as jnp
from jax.experimental import pallas as pl
from jax.experimental.pallas import tpu as pltpu

EPS = 1e-5                      # nn.BatchNorm2d default eps
COMPUTE_DTYPE = jnp.float32     # jnp.bfloat16 halves operand DMA (relax test tol if used)
OUT_LANES = 128                 # lane-dense output slab; wrapper slices column 0


# ----------------------------- Pallas kernel -------------------------------

def fused_net_kernel(x_ref, w1_ref, b1_ref, pmask_ref,
                     w2_ref, b2_ref,
                     w3_ref, b3_ref,
                     w4_ref, b4_ref,
                     fw1_ref, fb1_ref, fw2_ref, fb2_ref,
                     o_ref, *, H, W):
    """Whole Net forward for one batch element.

    x_ref     : (NROWS, Cin_p)   zero-padded image, row-flattened (Hp*Wp + tail pad)
    w1_ref    : (9, Cin_p, 64)   conv1 weight per 3x3 tap, (dy, dx) major; BN1 scale
                                 already folded into the output-channel columns
    b*_ref    : (1, C)           folded BatchNorm bias (conv bias folded in)
    pmask_ref : (1, H*Wp)        1.0 on rows that are real output pixels, 0.0 on the
                                 wrap-around rows produced by the shifted-slab trick
    w2/3/4    : (Cin, Cout)      center taps of conv2/3/4 (1x1 spatial), BN scale
                                 folded into columns; w2 also carries the 1/HW factor
    fw1/fw2   : fc weights (fw2/fb2 zero-padded to OUT_LANES cols -> lane-dense store)
    o_ref     : (1, OUT_LANES)   sigmoid output; only column 0 is meaningful
    """
    Wp = W + 2
    L = H * Wp
    c1 = w1_ref.shape[-1]

    # conv1 as 9 shifted-slab matmuls: in-kernel im2col, no 9x HBM expansion.
    acc = jnp.zeros((L, c1), jnp.float32)
    for k in range(9):
        dy, dx = divmod(k, 3)
        start = dy * Wp + dx
        slab = x_ref[start:start + L, :]                            # (L, Cin_p)
        acc = acc + jnp.dot(slab, w1_ref[k],
                            preferred_element_type=jnp.float32)
    y = jnp.maximum(acc + b1_ref[...], 0.0)                         # folded BN1 + ReLU

    # AdaptiveAvgPool2d((1,1)): masked row-sum on the MXU; 1/HW is folded into w2.
    pooled = jnp.dot(pmask_ref[...], y, preferred_element_type=jnp.float32)   # (1, 64)

    def mm_bias_relu(h, w_ref, b_ref):
        z = jnp.dot(h.astype(w_ref.dtype), w_ref[...],
                    preferred_element_type=jnp.float32)
        return jnp.maximum(z + b_ref[...], 0.0)

    # conv2/3/4 on 1x1 spatial reduce to their center tap (padding only adds zeros);
    # the extra AdaptiveAvgPool2d((1,1)) calls are identities at 1x1.
    h = mm_bias_relu(pooled, w2_ref, b2_ref)                        # (1, 128)
    h = mm_bias_relu(h, w3_ref, b3_ref)                             # (1, 256)
    h = mm_bias_relu(h, w4_ref, b4_ref)                             # (1, 512)

    # fc1 -> ReLU -> dropout -> fc2 -> sigmoid
    h = mm_bias_relu(h, fw1_ref, fb1_ref)                           # (1, 256)
    # TODO(synk): Dropout(0.5) is implemented as identity (eval/inference semantics).
    z = jnp.dot(h.astype(fw2_ref.dtype), fw2_ref[...],
                preferred_element_type=jnp.float32) + fb2_ref[...]
    o_ref[...] = jax.nn.sigmoid(z)                                  # (1, OUT_LANES)


# ----------------------------- JAX glue ------------------------------------

def fold_bn(conv_bias, gamma, beta, mean, var):
    scale = gamma / jnp.sqrt(var + EPS)
    bias = (conv_bias - mean) * scale + beta
    return scale, bias


def net_forward(x_nchw, params):
    B, Cin, H, W = x_nchw.shape
    Hp, Wp = H + 2, W + 2
    HW = H * W
    L = H * Wp
    C1, C2, C3, C4, F1 = 64, 128, 256, 512, 256
    cin_p = max(8, Cin)                        # sublane-align conv1's contraction dim
    nrows = -(-(Hp * Wp + 2) // 8) * 8         # shifted slabs start up to 2*Wp+2 rows in

    # NCHW -> NHWC, zero-pad spatially (conv padding=1), flatten to (Hp*Wp, Cin_p).
    x = jnp.transpose(x_nchw, (0, 2, 3, 1)).astype(jnp.float32)
    xp = jnp.pad(x, ((0, 0), (1, 1), (1, 1), (0, 0)))
    xflat = jnp.pad(xp.reshape(B, Hp * Wp, Cin),
                    ((0, 0), (0, nrows - Hp * Wp), (0, cin_p - Cin)))
    xflat = xflat.astype(COMPUTE_DTYPE)

    # conv1 weight OIHW -> (tap, Cin_p, Cout), (dy, dx) major to match the kernel loop;
    # BN1 scale is folded into the output-channel columns (linear op, pre-ReLU).
    s1, b1 = fold_bn(params['conv1_b'], params['bn1_gamma'], params['bn1_beta'],
                     params['bn1_mean'], params['bn1_var'])
    w1 = jnp.transpose(params['conv1_w'], (2, 3, 1, 0))             # (3, 3, Cin, C1)
    w1 = jnp.pad(w1, ((0, 0), (0, 0), (0, cin_p - Cin), (0, 0)))
    w1 = (w1.reshape(9, cin_p, C1) * s1[None, None, :]).astype(COMPUTE_DTYPE)

    # Pool mask: 1 on rows h*Wp + w with w < W (real pixels), 0 on wrap-around rows.
    pmask = ((jnp.arange(L, dtype=jnp.int32) % Wp) < W).astype(jnp.float32).reshape(1, L)

    def center(w):                              # torch OIHW -> (Cin, Cout) center tap
        return jnp.transpose(w[:, :, 1, 1], (1, 0))

    # 1/HW from the average pool and the BN scales are folded into the weights
    # (both are per-output-channel, applied before the ReLU; biases untouched).
    s2, b2 = fold_bn(params['conv2_b'], params['bn2_gamma'], params['bn2_beta'],
                     params['bn2_mean'], params['bn2_var'])
    w2 = (center(params['conv2_w']) * s2[None, :] / HW).astype(COMPUTE_DTYPE)
    s3, b3 = fold_bn(params['conv3_b'], params['bn3_gamma'], params['bn3_beta'],
                     params['bn3_mean'], params['bn3_var'])
    w3 = (center(params['conv3_w']) * s3[None, :]).astype(COMPUTE_DTYPE)
    s4, b4 = fold_bn(params['conv4_b'], params['bn4_gamma'], params['bn4_beta'],
                     params['bn4_mean'], params['bn4_var'])
    w4 = (center(params['conv4_w']) * s4[None, :]).astype(COMPUTE_DTYPE)

    fw1 = params['fc1_w'].T.astype(COMPUTE_DTYPE)                   # (512, 256)
    fb1 = params['fc1_b'].reshape(1, F1)
    fw2 = jnp.pad(params['fc2_w'].T, ((0, 0), (0, OUT_LANES - 1))).astype(COMPUTE_DTYPE)
    fb2 = jnp.pad(params['fc2_b'].reshape(1, 1), ((0, 0), (0, OUT_LANES - 1)))

    kernel = functools.partial(fused_net_kernel, H=H, W=W)

    def full(shape):
        return pl.BlockSpec(shape, lambda b, _nd=len(shape): (0,) * _nd)

    out = pl.pallas_call(
        kernel,
        out_shape=jax.ShapeDtypeStruct((B, 1, OUT_LANES), jnp.float32),
        grid=(B,),
        in_specs=[
            pl.BlockSpec((None, nrows, cin_p), lambda b: (b, 0, 0)),
            full((9, cin_p, C1)),
            full((1, C1)),
            full((1, L)),
            full((C1, C2)), full((1, C2)),
            full((C2, C3)), full((1, C3)),
            full((C3, C4)), full((1, C4)),
            full((C4, F1)), full((1, F1)),
            full((F1, OUT_LANES)), full((1, OUT_LANES)),
        ],
        out_specs=pl.BlockSpec((None, 1, OUT_LANES), lambda b: (b, 0, 0)),
        compiler_params=pltpu.CompilerParams(
            dimension_semantics=("parallel",),      # batch steps shard across v7x's 2 TCs
            vmem_limit_bytes=32 * 1024 * 1024),
    )(xflat, w1, b1.reshape(1, C1), pmask,
      w2, b2.reshape(1, C2),
      w3, b3.reshape(1, C3),
      w4, b4.reshape(1, C4),
      fw1, fb1, fw2, fb2)

    return out.reshape(B, OUT_LANES)[:, :1]


# ----------------------------- Parameters ----------------------------------

def init_params(key):
    """Deterministic parameter init matching the shapes of Net.__init__."""
    keys = jax.random.split(key, 12)

    def u(k, shape, fan_in):
        bound = 1.0 / jnp.sqrt(jnp.float32(fan_in))
        return jax.random.uniform(k, shape, jnp.float32, -bound, bound)

    p = {
        'conv1_w': u(keys[0], (64, 3, 3, 3), 3 * 9),
        'conv1_b': u(keys[1], (64,), 3 * 9),
        'conv2_w': u(keys[2], (128, 64, 3, 3), 64 * 9),
        'conv2_b': u(keys[3], (128,), 64 * 9),
        'conv3_w': u(keys[4], (256, 128, 3, 3), 128 * 9),
        'conv3_b': u(keys[5], (256,), 128 * 9),
        'conv4_w': u(keys[6], (512, 256, 3, 3), 256 * 9),
        'conv4_b': u(keys[7], (512,), 256 * 9),
        'fc1_w': u(keys[8], (256, 512), 512),
        'fc1_b': u(keys[9], (256,), 512),
        'fc2_w': u(keys[10], (1, 256), 256),
        'fc2_b': u(keys[11], (1,), 256),
    }
    # BatchNorm2d defaults (eval mode uses running stats): gamma=1, beta=0, mean=0, var=1
    for i, c in zip((1, 2, 3, 4), (64, 128, 256, 512)):
        p[f'bn{i}_gamma'] = jnp.ones((c,), jnp.float32)
        p[f'bn{i}_beta'] = jnp.zeros((c,), jnp.float32)
        p[f'bn{i}_mean'] = jnp.zeros((c,), jnp.float32)
        p[f'bn{i}_var'] = jnp.ones((c,), jnp.float32)
    return p


# ----------------------------- Pure-JAX reference --------------------------

def reference_forward(x_nchw, p):
    def bn4d(z, g, b, m, v):
        return ((z - m[None, :, None, None]) / jnp.sqrt(v[None, :, None, None] + EPS)
                * g[None, :, None, None] + b[None, :, None, None])

    z = jax.lax.conv_general_dilated(
        x_nchw.astype(jnp.float32), p['conv1_w'], (1, 1), [(1, 1), (1, 1)],
        dimension_numbers=('NCHW', 'OIHW', 'NCHW'))
    z = z + p['conv1_b'][None, :, None, None]
    z = jnp.maximum(bn4d(z, p['bn1_gamma'], p['bn1_beta'], p['bn1_mean'], p['bn1_var']), 0.0)
    h = jnp.mean(z, axis=(2, 3))                                    # adaptive avg pool

    for i, name in ((2, 'conv2'), (3, 'conv3'), (4, 'conv4')):
        wc = p[f'{name}_w'][:, :, 1, 1]                             # (Cout, Cin) center tap
        z = h @ wc.T + p[f'{name}_b'][None, :]
        z = ((z - p[f'bn{i}_mean'][None, :]) / jnp.sqrt(p[f'bn{i}_var'][None, :] + EPS)
             * p[f'bn{i}_gamma'][None, :] + p[f'bn{i}_beta'][None, :])
        h = jnp.maximum(z, 0.0)

    h = jnp.maximum(h @ p['fc1_w'].T + p['fc1_b'][None, :], 0.0)
    z = h @ p['fc2_w'].T + p['fc2_b'][None, :]
    return jax.nn.sigmoid(z)


# ----------------------------- main ----------------------------------------

if __name__ == "__main__":
    key = jax.random.PRNGKey(0)
    pkey, xkey = jax.random.split(key)
    params = init_params(pkey)

    # PyTorch-style NCHW input, small shapes.
    x = jax.random.normal(xkey, (2, 3, 16, 16), jnp.float32)

    fwd = jax.jit(net_forward)
    out = jax.block_until_ready(fwd(x, params))

    ref = reference_forward(x, params)
    assert out.shape == (2, 1), out.shape
    assert jnp.allclose(out, ref, atol=1e-4, rtol=1e-4), (out, ref)

    print("KERNEL_OK")
</pallas_src>

<mosaic_0001>
module attributes {stable_mosaic.version = 11 : i64} {
  func.func @fused_net_kernel(%arg0: i32, %arg1: memref<1x328x8xf32, #tpu.memory_space<vmem>>, %arg2: memref<9x8x64xf32, #tpu.memory_space<vmem>>, %arg3: memref<1x64xf32, #tpu.memory_space<vmem>>, %arg4: memref<1x288xf32, #tpu.memory_space<vmem>>, %arg5: memref<64x128xf32, #tpu.memory_space<vmem>>, %arg6: memref<1x128xf32, #tpu.memory_space<vmem>>, %arg7: memref<128x256xf32, #tpu.memory_space<vmem>>, %arg8: memref<1x256xf32, #tpu.memory_space<vmem>>, %arg9: memref<256x512xf32, #tpu.memory_space<vmem>>, %arg10: memref<1x512xf32, #tpu.memory_space<vmem>>, %arg11: memref<512x256xf32, #tpu.memory_space<vmem>>, %arg12: memref<1x256xf32, #tpu.memory_space<vmem>>, %arg13: memref<256x128xf32, #tpu.memory_space<vmem>>, %arg14: memref<1x128xf32, #tpu.memory_space<vmem>>, %arg15: memref<1x1x128xf32, #tpu.memory_space<vmem>>) attributes {dimension_semantics = [#tpu.dimension_semantics<parallel>], iteration_bounds = array<i64: 2>, scalar_prefetch = 0 : i64, scratch_operands = 0 : i64, tpu.core_type = #tpu.core_type<tc>, window_params = [{transform_indices = @transform_0, window_bounds = array<i64: 1, 328, 8>}, {pipeline_mode = #tpu.pipeline_mode<synchronous>, transform_indices = @transform_1, window_bounds = array<i64: 9, 8, 64>}, {pipeline_mode = #tpu.pipeline_mode<synchronous>, transform_indices = @transform_2, window_bounds = array<i64: 1, 64>}, {pipeline_mode = #tpu.pipeline_mode<synchronous>, transform_indices = @transform_3, window_bounds = array<i64: 1, 288>}, {pipeline_mode = #tpu.pipeline_mode<synchronous>, transform_indices = @transform_4, window_bounds = array<i64: 64, 128>}, {pipeline_mode = #tpu.pipeline_mode<synchronous>, transform_indices = @transform_5, window_bounds = array<i64: 1, 128>}, {pipeline_mode = #tpu.pipeline_mode<synchronous>, transform_indices = @transform_6, window_bounds = array<i64: 128, 256>}, {pipeline_mode = #tpu.pipeline_mode<synchronous>, transform_indices = @transform_7, window_bounds = array<i64: 1, 256>}, {pipeline_mode = #tpu.pipeline_mode<synchronous>, transform_indices = @transform_8, window_bounds = array<i64: 256, 512>}, {pipeline_mode = #tpu.pipeline_mode<synchronous>, transform_indices = @transform_9, window_bounds = array<i64: 1, 512>}, {pipeline_mode = #tpu.pipeline_mode<synchronous>, transform_indices = @transform_10, window_bounds = array<i64: 512, 256>}, {pipeline_mode = #tpu.pipeline_mode<synchronous>, transform_indices = @transform_11, window_bounds = array<i64: 1, 256>}, {pipeline_mode = #tpu.pipeline_mode<synchronous>, transform_indices = @transform_12, window_bounds = array<i64: 256, 128>}, {pipeline_mode = #tpu.pipeline_mode<synchronous>, transform_indices = @transform_13, window_bounds = array<i64: 1, 128>}, {transform_indices = @transform_14, window_bounds = array<i64: 1, 1, 128>}]} {
    %cst = arith.constant 0.000000e+00 : f32
    %0 = vector.broadcast %cst : f32 to vector<288x64xf32>
    %c0 = arith.constant 0 : index
    %c0_0 = arith.constant 0 : index
    %c0_1 = arith.constant 0 : index
    %1 = vector.load %arg1[%c0, %c0_0, %c0_1] : memref<1x328x8xf32, #tpu.memory_space<vmem>>, vector<1x288x8xf32>
    %2 = vector.shape_cast %1 : vector<1x288x8xf32> to vector<288x8xf32>
    %c0_2 = arith.constant 0 : index
    %c0_3 = arith.constant 0 : index
    %c0_4 = arith.constant 0 : index
    %3 = vector.load %arg2[%c0_2, %c0_3, %c0_4] : memref<9x8x64xf32, #tpu.memory_space<vmem>>, vector<1x8x64xf32>
    %4 = vector.shape_cast %3 : vector<1x8x64xf32> to vector<8x64xf32>
    %cst_5 = arith.constant dense<0.000000e+00> : vector<288x64xf32>
    %5 = tpu.matmul %2, %4, %cst_5 {dimension_numbers = #tpu.dot_dimension_numbers<[1], [0], [0], [1], [0, 0, 1, 1], [], []>} : vector<288x8xf32>, vector<8x64xf32>, vector<288x64xf32> -> vector<288x64xf32>
    %6 = arith.addf %0, %5 : vector<288x64xf32>
    %c0_6 = arith.constant 0 : index
    %c1 = arith.constant 1 : index
    %c0_7 = arith.constant 0 : index
    %7 = vector.load %arg1[%c0_6, %c1, %c0_7] : memref<1x328x8xf32, #tpu.memory_space<vmem>>, vector<1x288x8xf32>
    %8 = vector.shape_cast %7 : vector<1x288x8xf32> to vector<288x8xf32>
    %c1_8 = arith.constant 1 : index
    %c0_9 = arith.constant 0 : index
    %c0_10 = arith.constant 0 : index
    %9 = vector.load %arg2[%c1_8, %c0_9, %c0_10] : memref<9x8x64xf32, #tpu.memory_space<vmem>>, vector<1x8x64xf32>
    %10 = vector.shape_cast %9 : vector<1x8x64xf32> to vector<8x64xf32>
    %cst_11 = arith.constant dense<0.000000e+00> : vector<288x64xf32>
    %11 = tpu.matmul %8, %10, %cst_11 {dimension_numbers = #tpu.dot_dimension_numbers<[1], [0], [0], [1], [0, 0, 1, 1], [], []>} : vector<288x8xf32>, vector<8x64xf32>, vector<288x64xf32> -> vector<288x64xf32>
    %12 = arith.addf %6, %11 : vector<288x64xf32>
    %c0_12 = arith.constant 0 : index
    %c2 = arith.constant 2 : index
    %c0_13 = arith.constant 0 : index
    %13 = vector.load %arg1[%c0_12, %c2, %c0_13] : memref<1x328x8xf32, #tpu.memory_space<vmem>>, vector<1x288x8xf32>
    %14 = vector.shape_cast %13 : vector<1x288x8xf32> to vector<288x8xf32>
    %c2_14 = arith.constant 2 : index
    %c0_15 = arith.constant 0 : index
    %c0_16 = arith.constant 0 : index
    %15 = vector.load %arg2[%c2_14, %c0_15, %c0_16] : memref<9x8x64xf32, #tpu.memory_space<vmem>>, vector<1x8x64xf32>
    %16 = vector.shape_cast %15 : vector<1x8x64xf32> to vector<8x64xf32>
    %cst_17 = arith.constant dense<0.000000e+00> : vector<288x64xf32>
    %17 = tpu.matmul %14, %16, %cst_17 {dimension_numbers = #tpu.dot_dimension_numbers<[1], [0], [0], [1], [0, 0, 1, 1], [], []>} : vector<288x8xf32>, vector<8x64xf32>, vector<288x64xf32> -> vector<288x64xf32>
    %18 = arith.addf %12, %17 : vector<288x64xf32>
    %c0_18 = arith.constant 0 : index
    %c18 = arith.constant 18 : index
    %c0_19 = arith.constant 0 : index
    %19 = vector.load %arg1[%c0_18, %c18, %c0_19] : memref<1x328x8xf32, #tpu.memory_space<vmem>>, vector<1x288x8xf32>
    %20 = vector.shape_cast %19 : vector<1x288x8xf32> to vector<288x8xf32>
    %c3 = arith.constant 3 : index
    %c0_20 = arith.constant 0 : index
    %c0_21 = arith.constant 0 : index
    %21 = vector.load %arg2[%c3, %c0_20, %c0_21] : memref<9x8x64xf32, #tpu.memory_space<vmem>>, vector<1x8x64xf32>
    %22 = vector.shape_cast %21 : vector<1x8x64xf32> to vector<8x64xf32>
    %cst_22 = arith.constant dense<0.000000e+00> : vector<288x64xf32>
    %23 = tpu.matmul %20, %22, %cst_22 {dimension_numbers = #tpu.dot_dimension_numbers<[1], [0], [0], [1], [0, 0, 1, 1], [], []>} : vector<288x8xf32>, vector<8x64xf32>, vector<288x64xf32> -> vector<288x64xf32>
    %24 = arith.addf %18, %23 : vector<288x64xf32>
    %c0_23 = arith.constant 0 : index
    %c19 = arith.constant 19 : index
    %c0_24 = arith.constant 0 : index
    %25 = vector.load %arg1[%c0_23, %c19, %c0_24] : memref<1x328x8xf32, #tpu.memory_space<vmem>>, vector<1x288x8xf32>
    %26 = vector.shape_cast %25 : vector<1x288x8xf32> to vector<288x8xf32>
    %c4 = arith.constant 4 : index
    %c0_25 = arith.constant 0 : index
    %c0_26 = arith.constant 0 : index
    %27 = vector.load %arg2[%c4, %c0_25, %c0_26] : memref<9x8x64xf32, #tpu.memory_space<vmem>>, vector<1x8x64xf32>
    %28 = vector.shape_cast %27 : vector<1x8x64xf32> to vector<8x64xf32>
    %cst_27 = arith.constant dense<0.000000e+00> : vector<288x64xf32>
    %29 = tpu.matmul %26, %28, %cst_27 {dimension_numbers = #tpu.dot_dimension_numbers<[1], [0], [0], [1], [0, 0, 1, 1], [], []>} : vector<288x8xf32>, vector<8x64xf32>, vector<288x64xf32> -> vector<288x64xf32>
    %30 = arith.addf %24, %29 : vector<288x64xf32>
    %c0_28 = arith.constant 0 : index
    %c20 = arith.constant 20 : index
    %c0_29 = arith.constant 0 : index
    %31 = vector.load %arg1[%c0_28, %c20, %c0_29] : memref<1x328x8xf32, #tpu.memory_space<vmem>>, vector<1x288x8xf32>
    %32 = vector.shape_cast %31 : vector<1x288x8xf32> to vector<288x8xf32>
    %c5 = arith.constant 5 : index
    %c0_30 = arith.constant 0 : index
    %c0_31 = arith.constant 0 : index
    %33 = vector.load %arg2[%c5, %c0_30, %c0_31] : memref<9x8x64xf32, #tpu.memory_space<vmem>>, vector<1x8x64xf32>
    %34 = vector.shape_cast %33 : vector<1x8x64xf32> to vector<8x64xf32>
    %cst_32 = arith.constant dense<0.000000e+00> : vector<288x64xf32>
    %35 = tpu.matmul %32, %34, %cst_32 {dimension_numbers = #tpu.dot_dimension_numbers<[1], [0], [0], [1], [0, 0, 1, 1], [], []>} : vector<288x8xf32>, vector<8x64xf32>, vector<288x64xf32> -> vector<288x64xf32>
    %36 = arith.addf %30, %35 : vector<288x64xf32>
    %c0_33 = arith.constant 0 : index
    %c36 = arith.constant 36 : index
    %c0_34 = arith.constant 0 : index
    %37 = vector.load %arg1[%c0_33, %c36, %c0_34] : memref<1x328x8xf32, #tpu.memory_space<vmem>>, vector<1x288x8xf32>
    %38 = vector.shape_cast %37 : vector<1x288x8xf32> to vector<288x8xf32>
    %c6 = arith.constant 6 : index
    %c0_35 = arith.constant 0 : index
    %c0_36 = arith.constant 0 : index
    %39 = vector.load %arg2[%c6, %c0_35, %c0_36] : memref<9x8x64xf32, #tpu.memory_space<vmem>>, vector<1x8x64xf32>
    %40 = vector.shape_cast %39 : vector<1x8x64xf32> to vector<8x64xf32>
    %cst_37 = arith.constant dense<0.000000e+00> : vector<288x64xf32>
    %41 = tpu.matmul %38, %40, %cst_37 {dimension_numbers = #tpu.dot_dimension_numbers<[1], [0], [0], [1], [0, 0, 1, 1], [], []>} : vector<288x8xf32>, vector<8x64xf32>, vector<288x64xf32> -> vector<288x64xf32>
    %42 = arith.addf %36, %41 : vector<288x64xf32>
    %c0_38 = arith.constant 0 : index
    %c37 = arith.constant 37 : index
    %c0_39 = arith.constant 0 : index
    %43 = vector.load %arg1[%c0_38, %c37, %c0_39] : memref<1x328x8xf32, #tpu.memory_space<vmem>>, vector<1x288x8xf32>
    %44 = vector.shape_cast %43 : vector<1x288x8xf32> to vector<288x8xf32>
    %c7 = arith.constant 7 : index
    %c0_40 = arith.constant 0 : index
    %c0_41 = arith.constant 0 : index
    %45 = vector.load %arg2[%c7, %c0_40, %c0_41] : memref<9x8x64xf32, #tpu.memory_space<vmem>>, vector<1x8x64xf32>
    %46 = vector.shape_cast %45 : vector<1x8x64xf32> to vector<8x64xf32>
    %cst_42 = arith.constant dense<0.000000e+00> : vector<288x64xf32>
    %47 = tpu.matmul %44, %46, %cst_42 {dimension_numbers = #tpu.dot_dimension_numbers<[1], [0], [0], [1], [0, 0, 1, 1], [], []>} : vector<288x8xf32>, vector<8x64xf32>, vector<288x64xf32> -> vector<288x64xf32>
    %48 = arith.addf %42, %47 : vector<288x64xf32>
    %c0_43 = arith.constant 0 : index
    %c38 = arith.constant 38 : index
    %c0_44 = arith.constant 0 : index
    %49 = vector.load %arg1[%c0_43, %c38, %c0_44] : memref<1x328x8xf32, #tpu.memory_space<vmem>>, vector<1x288x8xf32>
    %50 = vector.shape_cast %49 : vector<1x288x8xf32> to vector<288x8xf32>
    %c8 = arith.constant 8 : index
    %c0_45 = arith.constant 0 : index
    %c0_46 = arith.constant 0 : index
    %51 = vector.load %arg2[%c8, %c0_45, %c0_46] : memref<9x8x64xf32, #tpu.memory_space<vmem>>, vector<1x8x64xf32>
    %52 = vector.shape_cast %51 : vector<1x8x64xf32> to vector<8x64xf32>
    %cst_47 = arith.constant dense<0.000000e+00> : vector<288x64xf32>
    %53 = tpu.matmul %50, %52, %cst_47 {dimension_numbers = #tpu.dot_dimension_numbers<[1], [0], [0], [1], [0, 0, 1, 1], [], []>} : vector<288x8xf32>, vector<8x64xf32>, vector<288x64xf32> -> vector<288x64xf32>
    %54 = arith.addf %48, %53 : vector<288x64xf32>
    %c0_48 = arith.constant 0 : index
    %c0_49 = arith.constant 0 : index
    %55 = vector.load %arg3[%c0_48, %c0_49] : memref<1x64xf32, #tpu.memory_space<vmem>>, vector<1x64xf32>
    %56 = vector.broadcast %55 : vector<1x64xf32> to vector<288x64xf32>
    %57 = arith.addf %54, %56 : vector<288x64xf32>
    %cst_50 = arith.constant 0.000000e+00 : f32
    %58 = vector.broadcast %cst_50 : f32 to vector<288x64xf32>
    %59 = arith.maximumf %57, %58 : vector<288x64xf32>
    %c0_51 = arith.constant 0 : index
    %c0_52 = arith.constant 0 : index
    %60 = vector.load %arg4[%c0_51, %c0_52] : memref<1x288xf32, #tpu.memory_space<vmem>>, vector<1x288xf32>
    %cst_53 = arith.constant dense<0.000000e+00> : vector<1x64xf32>
    %61 = tpu.matmul %60, %59, %cst_53 {dimension_numbers = #tpu.dot_dimension_numbers<[1], [0], [0], [1], [0, 0, 1, 1], [], []>} : vector<1x288xf32>, vector<288x64xf32>, vector<1x64xf32> -> vector<1x64xf32>
    %c0_54 = arith.constant 0 : index
    %c0_55 = arith.constant 0 : index
    %62 = vector.load %arg5[%c0_54, %c0_55] : memref<64x128xf32, #tpu.memory_space<vmem>>, vector<64x128xf32>
    %cst_56 = arith.constant dense<0.000000e+00> : vector<1x128xf32>
    %63 = tpu.matmul %61, %62, %cst_56 {dimension_numbers = #tpu.dot_dimension_numbers<[1], [0], [0], [1], [0, 0, 1, 1], [], []>} : vector<1x64xf32>, vector<64x128xf32>, vector<1x128xf32> -> vector<1x128xf32>
    %c0_57 = arith.constant 0 : index
    %c0_58 = arith.constant 0 : index
    %64 = vector.load %arg6[%c0_57, %c0_58] : memref<1x128xf32, #tpu.memory_space<vmem>>, vector<1x128xf32>
    %65 = arith.addf %63, %64 : vector<1x128xf32>
    %cst_59 = arith.constant 0.000000e+00 : f32
    %66 = vector.broadcast %cst_59 : f32 to vector<1x128xf32>
    %67 = arith.maximumf %65, %66 : vector<1x128xf32>
    %c0_60 = arith.constant 0 : index
    %c0_61 = arith.constant 0 : index
    %68 = vector.load %arg7[%c0_60, %c0_61] : memref<128x256xf32, #tpu.memory_space<vmem>>, vector<128x256xf32>
    %cst_62 = arith.constant dense<0.000000e+00> : vector<1x256xf32>
    %69 = tpu.matmul %67, %68, %cst_62 {dimension_numbers = #tpu.dot_dimension_numbers<[1], [0], [0], [1], [0, 0, 1, 1], [], []>} : vector<1x128xf32>, vector<128x256xf32>, vector<1x256xf32> -> vector<1x256xf32>
    %c0_63 = arith.constant 0 : index
    %c0_64 = arith.constant 0 : index
    %70 = vector.load %arg8[%c0_63, %c0_64] : memref<1x256xf32, #tpu.memory_space<vmem>>, vector<1x256xf32>
    %71 = arith.addf %69, %70 : vector<1x256xf32>
    %cst_65 = arith.constant 0.000000e+00 : f32
    %72 = vector.broadcast %cst_65 : f32 to vector<1x256xf32>
    %73 = arith.maximumf %71, %72 : vector<1x256xf32>
    %c0_66 = arith.constant 0 : index
    %c0_67 = arith.constant 0 : index
    %74 = vector.load %arg9[%c0_66, %c0_67] : memref<256x512xf32, #tpu.memory_space<vmem>>, vector<256x512xf32>
    %cst_68 = arith.constant dense<0.000000e+00> : vector<1x512xf32>
    %75 = tpu.matmul %73, %74, %cst_68 {dimension_numbers = #tpu.dot_dimension_numbers<[1], [0], [0], [1], [0, 0, 1, 1], [], []>} : vector<1x256xf32>, vector<256x512xf32>, vector<1x512xf32> -> vector<1x512xf32>
    %c0_69 = arith.constant 0 : index
    %c0_70 = arith.constant 0 : index
    %76 = vector.load %arg10[%c0_69, %c0_70] : memref<1x512xf32, #tpu.memory_space<vmem>>, vector<1x512xf32>
    %77 = arith.addf %75, %76 : vector<1x512xf32>
    %cst_71 = arith.constant 0.000000e+00 : f32
    %78 = vector.broadcast %cst_71 : f32 to vector<1x512xf32>
    %79 = arith.maximumf %77, %78 : vector<1x512xf32>
    %c0_72 = arith.constant 0 : index
    %c0_73 = arith.constant 0 : index
    %80 = vector.load %arg11[%c0_72, %c0_73] : memref<512x256xf32, #tpu.memory_space<vmem>>, vector<512x256xf32>
    %cst_74 = arith.constant dense<0.000000e+00> : vector<1x256xf32>
    %81 = tpu.matmul %79, %80, %cst_74 {dimension_numbers = #tpu.dot_dimension_numbers<[1], [0], [0], [1], [0, 0, 1, 1], [], []>} : vector<1x512xf32>, vector<512x256xf32>, vector<1x256xf32> -> vector<1x256xf32>
    %c0_75 = arith.constant 0 : index
    %c0_76 = arith.constant 0 : index
    %82 = vector.load %arg12[%c0_75, %c0_76] : memref<1x256xf32, #tpu.memory_space<vmem>>, vector<1x256xf32>
    %83 = arith.addf %81, %82 : vector<1x256xf32>
    %cst_77 = arith.constant 0.000000e+00 : f32
    %84 = vector.broadcast %cst_77 : f32 to vector<1x256xf32>
    %85 = arith.maximumf %83, %84 : vector<1x256xf32>
    %c0_78 = arith.constant 0 : index
    %c0_79 = arith.constant 0 : index
    %86 = vector.load %arg13[%c0_78, %c0_79] : memref<256x128xf32, #tpu.memory_space<vmem>>, vector<256x128xf32>
    %cst_80 = arith.constant dense<0.000000e+00> : vector<1x128xf32>
    %87 = tpu.matmul %85, %86, %cst_80 {dimension_numbers = #tpu.dot_dimension_numbers<[1], [0], [0], [1], [0, 0, 1, 1], [], []>} : vector<1x256xf32>, vector<256x128xf32>, vector<1x128xf32> -> vector<1x128xf32>
    %c0_81 = arith.constant 0 : index
    %c0_82 = arith.constant 0 : index
    %88 = vector.load %arg14[%c0_81, %c0_82] : memref<1x128xf32, #tpu.memory_space<vmem>>, vector<1x128xf32>
    %89 = arith.addf %87, %88 : vector<1x128xf32>
    %90 = arith.negf %89 : vector<1x128xf32>
    %91 = math.exp %90 : vector<1x128xf32>
    %cst_83 = arith.constant 1.000000e+00 : f32
    %92 = vector.broadcast %cst_83 : f32 to vector<1x128xf32>
    %93 = arith.addf %92, %91 : vector<1x128xf32>
    %94 = arith.divf %92, %93 : vector<1x128xf32>
    %c0_84 = arith.constant 0 : index
    %c0_85 = arith.constant 0 : index
    %c0_86 = arith.constant 0 : index
    %95 = vector.load %arg15[%c0_84, %c0_85, %c0_86] : memref<1x1x128xf32, #tpu.memory_space<vmem>>, vector<1x1x128xf32>
    %96 = vector.shape_cast %95 : vector<1x1x128xf32> to vector<1x128xf32>
    %97 = vector.shape_cast %94 : vector<1x128xf32> to vector<1x1x128xf32>
    tpu.vector_store %arg15[%c0_84, %c0_85, %c0_86], %97 {strides = array<i32>} : memref<1x1x128xf32, #tpu.memory_space<vmem>>, vector<1x1x128xf32>,
    return
  }
  func.func @transform_0(%arg0: i32) -> (i32, i32, i32) {
    %c0_i32 = arith.constant 0 : i32
    %c0_i32_0 = arith.constant 0 : i32
    %c0_i32_1 = arith.constant 0 : i32
    return %arg0, %c0_i32, %c0_i32_0 : i32, i32, i32
  }
  func.func @transform_1(%arg0: i32) -> (i32, i32, i32) {
    %c0_i32 = arith.constant 0 : i32
    %c0_i32_0 = arith.constant 0 : i32
    %c0_i32_1 = arith.constant 0 : i32
    %c0_i32_2 = arith.constant 0 : i32
    return %c0_i32, %c0_i32_0, %c0_i32_1 : i32, i32, i32
  }
  func.func @transform_2(%arg0: i32) -> (i32, i32) {
    %c0_i32 = arith.constant 0 : i32
    %c0_i32_0 = arith.constant 0 : i32
    %c0_i32_1 = arith.constant 0 : i32
    return %c0_i32, %c0_i32_0 : i32, i32
  }
  func.func @transform_3(%arg0: i32) -> (i32, i32) {
    %c0_i32 = arith.constant 0 : i32
    %c0_i32_0 = arith.constant 0 : i32
    %c0_i32_1 = arith.constant 0 : i32
    return %c0_i32, %c0_i32_0 : i32, i32
  }
  func.func @transform_4(%arg0: i32) -> (i32, i32) {
    %c0_i32 = arith.constant 0 : i32
    %c0_i32_0 = arith.constant 0 : i32
    %c0_i32_1 = arith.constant 0 : i32
    return %c0_i32, %c0_i32_0 : i32, i32
  }
  func.func @transform_5(%arg0: i32) -> (i32, i32) {
    %c0_i32 = arith.constant 0 : i32
    %c0_i32_0 = arith.constant 0 : i32
    %c0_i32_1 = arith.constant 0 : i32
    return %c0_i32, %c0_i32_0 : i32, i32
  }
  func.func @transform_6(%arg0: i32) -> (i32, i32) {
    %c0_i32 = arith.constant 0 : i32
    %c0_i32_0 = arith.constant 0 : i32
    %c0_i32_1 = arith.constant 0 : i32
    return %c0_i32, %c0_i32_0 : i32, i32
  }
  func.func @transform_7(%arg0: i32) -> (i32, i32) {
    %c0_i32 = arith.constant 0 : i32
    %c0_i32_0 = arith.constant 0 : i32
    %c0_i32_1 = arith.constant 0 : i32
    return %c0_i32, %c0_i32_0 : i32, i32
  }
  func.func @transform_8(%arg0: i32) -> (i32, i32) {
    %c0_i32 = arith.constant 0 : i32
    %c0_i32_0 = arith.constant 0 : i32
    %c0_i32_1 = arith.constant 0 : i32
    return %c0_i32, %c0_i32_0 : i32, i32
  }
  func.func @transform_9(%arg0: i32) -> (i32, i32) {
    %c0_i32 = arith.constant 0 : i32
    %c0_i32_0 = arith.constant 0 : i32
    %c0_i32_1 = arith.constant 0 : i32
    return %c0_i32, %c0_i32_0 : i32, i32
  }
  func.func @transform_10(%arg0: i32) -> (i32, i32) {
    %c0_i32 = arith.constant 0 : i32
    %c0_i32_0 = arith.constant 0 : i32
    %c0_i32_1 = arith.constant 0 : i32
    return %c0_i32, %c0_i32_0 : i32, i32
  }
  func.func @transform_11(%arg0: i32) -> (i32, i32) {
    %c0_i32 = arith.constant 0 : i32
    %c0_i32_0 = arith.constant 0 : i32
    %c0_i32_1 = arith.constant 0 : i32
    return %c0_i32, %c0_i32_0 : i32, i32
  }
  func.func @transform_12(%arg0: i32) -> (i32, i32) {
    %c0_i32 = arith.constant 0 : i32
    %c0_i32_0 = arith.constant 0 : i32
    %c0_i32_1 = arith.constant 0 : i32
    return %c0_i32, %c0_i32_0 : i32, i32
  }
  func.func @transform_13(%arg0: i32) -> (i32, i32) {
    %c0_i32 = arith.constant 0 : i32
    %c0_i32_0 = arith.constant 0 : i32
    %c0_i32_1 = arith.constant 0 : i32
    return %c0_i32, %c0_i32_0 : i32, i32
  }
  func.func @transform_14(%arg0: i32) -> (i32, i32, i32) {
    %c0_i32 = arith.constant 0 : i32
    %c0_i32_0 = arith.constant 0 : i32
    %c0_i32_1 = arith.constant 0 : i32
    return %arg0, %c0_i32, %c0_i32_0 : i32, i32, i32
  }
}

</mosaic_0001>

<llo_original>
// kernel: net_forward.1
$region0: #{net_forward.1}
  #allocation0 [shape = 'u32[]', space=smem, size = 0x4, offset = 0x4, fixed_abs, tag = 'smem constant byte address 0x4 - core index']
  #allocation1 [shape = 'u32[144,128]{1,0:T(1,128)}', space=vmem, size = 0x12000, scoped, tag = 'internal scratch']
  %s0 = inlined_call_operand.vmem [shape: f32[2,328,8], index: 0, kind: input, shape index: {}]
  %s1 = inlined_call_operand.vmem [shape: f32[9,8,64], index: 1, kind: input, shape index: {}]
  %s2 = inlined_call_operand.vmem [shape: f32[1,64], index: 2, kind: input, shape index: {}]
  %s3 = inlined_call_operand.vmem [shape: f32[1,288], index: 3, kind: input, shape index: {}]
  %s4 = inlined_call_operand.vmem [shape: f32[64,128], index: 4, kind: input, shape index: {}]
  %s5 = inlined_call_operand.vmem [shape: f32[1,128], index: 5, kind: input, shape index: {}]
  %s6 = inlined_call_operand.vmem [shape: f32[128,256], index: 6, kind: input, shape index: {}]
  %s7 = inlined_call_operand.vmem [shape: f32[1,256], index: 7, kind: input, shape index: {}]
  %s8 = inlined_call_operand.vmem [shape: f32[256,512], index: 8, kind: input, shape index: {}]
  %s9 = inlined_call_operand.vmem [shape: f32[1,512], index: 9, kind: input, shape index: {}]
  %s10 = inlined_call_operand.vmem [shape: f32[512,256], index: 10, kind: input, shape index: {}]
  %s11 = inlined_call_operand.vmem [shape: f32[1,256], index: 11, kind: input, shape index: {}]
  %s12 = inlined_call_operand.vmem [shape: f32[256,128], index: 12, kind: input, shape index: {}]
  %s13 = inlined_call_operand.vmem [shape: f32[1,128], index: 13, kind: input, shape index: {}]
  %s14 = inlined_call_operand.vmem [shape: f32[2,1,128], index: 14, kind: output, shape index: {}]
  %s15 = sld [smem:[#allocation0]]
  $region89: #{net_forward.1} parent=0
    _
  %s17 = ssub.s32 1, %s15
  %s18 = scalar_select 0, %s17, %s15
  loop: start=0, step=1, limit=4
  $region2: #{net_forward.1} parent=0 // loop_pre_header
    _
  $region3: #{net_forward.1} parent=0 // loop_header
    %s20 = sphi 0, %s24
    %p21 = scmp.ge.s32.totalorder %s20, 4
    %s30 = sphi 0, %s32
    %s33 = sphi 0, %s30
    %s34 = sphi 0, %s33
    %s50 = sphi 0, %s34
    %s54 = sphi 0, %s54
    %s56 = sphi 0, %s54
    %s57 = sphi 0, %s56
    %s71 = sphi 0, %s57
    %s75 = sphi 0, %s75
    %s77 = sphi 0, %s75
    %s78 = sphi 0, %s77
    %s92 = sphi 0, %s78
    %s96 = sphi 0, %s96
    %s98 = sphi 0, %s96
    %s99 = sphi 0, %s98
    %s113 = sphi 0, %s99
    %s117 = sphi 0, %s117
    %s119 = sphi 0, %s117
    %s120 = sphi 0, %s119
    %s134 = sphi 0, %s120
    %s138 = sphi 0, %s138
    %s140 = sphi 0, %s138
    %s141 = sphi 0, %s140
    %s155 = sphi 0, %s141
    %s159 = sphi 0, %s159
    %s161 = sphi 0, %s159
    %s162 = sphi 0, %s161
    %s176 = sphi 0, %s162
    %s180 = sphi 0, %s180
    %s182 = sphi 0, %s180
    %s183 = sphi 0, %s182
    %s197 = sphi 0, %s183
    %s201 = sphi 0, %s201
    %s203 = sphi 0, %s201
    %s204 = sphi 0, %s203
    %s218 = sphi 0, %s204
    %s222 = sphi 0, %s222
    %s224 = sphi 0, %s222
    %s225 = sphi 0, %s224
    %s239 = sphi 0, %s225
    %s243 = sphi 0, %s243
    %s245 = sphi 0, %s243
    %s246 = sphi 0, %s245
    %s260 = sphi 0, %s246
    %s264 = sphi 0, %s264
    %s266 = sphi 0, %s264
    %s267 = sphi 0, %s266
    %s281 = sphi 0, %s267
    %s285 = sphi 0, %s285
    %s287 = sphi 0, %s285
    %s288 = sphi 0, %s287
    %s302 = sphi 0, %s288
    %s306 = sphi 0, %s306
    %s308 = sphi 0, %s306
    %s309 = sphi 0, %s308
    %s323 = sphi 0, %s309
    %s329 = sphi 0, %s331
    %s332 = sphi 0, %s329
    %s333 = sphi 0, %s332
    %s349 = sphi 0, %s333
  $region4: #{net_forward.1} parent=0 // loop_header_branch
    %23 = sbr.rel (%p21) target = $region8
  $region5: #{net_forward.1} parent=0 // loop_body
    %s25 = ssub.s32 %s20, 1
    %s26 = ssub.s32 %s20, 2
    %s27 = sadd.s32 %s20, 1
    %s28 = ssub.s32 %s20, %s27
    %p29 = scmp.eq.s32.totalorder %s28, 0
    %s31 = sadd.s32 %s30, 1
    %s32 = scalar_select %p29, %s30, %s31
    %p35 = pneg %p29
    %p36 = scmp.eq.s32.totalorder %s20, 1
    %p37 = por %p35, %p36
    %p38 = scmp.ne.s32.totalorder %s30, %s33
    %p39 = scmp.eq.s32.totalorder %s20, 0
    %p40 = por %p38, %p39
    %p41 = scmp.ne.s32.totalorder %s30, %s33
    %p42 = scmp.eq.s32.totalorder %s25, 1
    %p43 = por %p41, %p42
    %p44 = scmp.ne.s32.totalorder %s33, %s34
    %p45 = scmp.eq.s32.totalorder %s25, 0
    %p46 = por %p44, %p45
    %p47 = scmp.ne.s32.totalorder %s33, %s34
    %p48 = scmp.eq.s32.totalorder %s26, 1
    %p49 = por %p47, %p48
    %p51 = scmp.ne.s32.totalorder %s34, %s50
    %p52 = scmp.eq.s32.totalorder %s26, 0
    %p53 = por %p51, %p52
    %s55 = sadd.s32 %s54, 1
    %p58 = scmp.eq.s32.totalorder %s20, 1
    %p59 = scmp.ne.s32.totalorder %s54, %s56
    %p60 = scmp.eq.s32.totalorder %s20, 0
    %p61 = por %p59, %p60
    %p62 = scmp.ne.s32.totalorder %s54, %s56
    %p63 = scmp.eq.s32.totalorder %s25, 1
    %p64 = por %p62, %p63
    %p65 = scmp.ne.s32.totalorder %s56, %s57
    %p66 = scmp.eq.s32.totalorder %s25, 0
    %p67 = por %p65, %p66
    %p68 = scmp.ne.s32.totalorder %s56, %s57
    %p69 = scmp.eq.s32.totalorder %s26, 1
    %p70 = por %p68, %p69
    %p72 = scmp.ne.s32.totalorder %s57, %s71
    %p73 = scmp.eq.s32.totalorder %s26, 0
    %p74 = por %p72, %p73
    %s76 = sadd.s32 %s75, 1
    %p79 = scmp.eq.s32.totalorder %s20, 1
    %p80 = scmp.ne.s32.totalorder %s75, %s77
    %p81 = scmp.eq.s32.totalorder %s20, 0
    %p82 = por %p80, %p81
    %p83 = scmp.ne.s32.totalorder %s75, %s77
    %p84 = scmp.eq.s32.totalorder %s25, 1
    %p85 = por %p83, %p84
    %p86 = scmp.ne.s32.totalorder %s77, %s78
    %p87 = scmp.eq.s32.totalorder %s25, 0
    %p88 = por %p86, %p87
    %p89 = scmp.ne.s32.totalorder %s77, %s78
    %p90 = scmp.eq.s32.totalorder %s26, 1
    %p91 = por %p89, %p90
    %p93 = scmp.ne.s32.totalorder %s78, %s92
    %p94 = scmp.eq.s32.totalorder %s26, 0
    %p95 = por %p93, %p94
    %s97 = sadd.s32 %s96, 1
    %p100 = scmp.eq.s32.totalorder %s20, 1
    %p101 = scmp.ne.s32.totalorder %s96, %s98
    %p102 = scmp.eq.s32.totalorder %s20, 0
    %p103 = por %p101, %p102
    %p104 = scmp.ne.s32.totalorder %s96, %s98
    %p105 = scmp.eq.s32.totalorder %s25, 1
    %p106 = por %p104, %p105
    %p107 = scmp.ne.s32.totalorder %s98, %s99
    %p108 = scmp.eq.s32.totalorder %s25, 0
    %p109 = por %p107, %p108
    %p110 = scmp.ne.s32.totalorder %s98, %s99
    %p111 = scmp.eq.s32.totalorder %s26, 1
    %p112 = por %p110, %p111
    %p114 = scmp.ne.s32.totalorder %s99, %s113
    %p115 = scmp.eq.s32.totalorder %s26, 0
    %p116 = por %p114, %p115
    %s118 = sadd.s32 %s117, 1
    %p121 = scmp.eq.s32.totalorder %s20, 1
    %p122 = scmp.ne.s32.totalorder %s117, %s119
    %p123 = scmp.eq.s32.totalorder %s20, 0
    %p124 = por %p122, %p123
    %p125 = scmp.ne.s32.totalorder %s117, %s119
    %p126 = scmp.eq.s32.totalorder %s25, 1
    %p127 = por %p125, %p126
    %p128 = scmp.ne.s32.totalorder %s119, %s120
    %p129 = scmp.eq.s32.totalorder %s25, 0
    %p130 = por %p128, %p129
    %p131 = scmp.ne.s32.totalorder %s119, %s120
    %p132 = scmp.eq.s32.totalorder %s26, 1
    %p133 = por %p131, %p132
    %p135 = scmp.ne.s32.totalorder %s120, %s134
    %p136 = scmp.eq.s32.totalorder %s26, 0
    %p137 = por %p135, %p136
    %s139 = sadd.s32 %s138, 1
    %p142 = scmp.eq.s32.totalorder %s20, 1
    %p143 = scmp.ne.s32.totalorder %s138, %s140
    %p144 = scmp.eq.s32.totalorder %s20, 0
    %p145 = por %p143, %p144
    %p146 = scmp.ne.s32.totalorder %s138, %s140
    %p147 = scmp.eq.s32.totalorder %s25, 1
    %p148 = por %p146, %p147
    %p149 = scmp.ne.s32.totalorder %s140, %s141
    %p150 = scmp.eq.s32.totalorder %s25, 0
    %p151 = por %p149, %p150
    %p152 = scmp.ne.s32.totalorder %s140, %s141
    %p153 = scmp.eq.s32.totalorder %s26, 1
    %p154 = por %p152, %p153
    %p156 = scmp.ne.s32.totalorder %s141, %s155
    %p157 = scmp.eq.s32.totalorder %s26, 0
    %p158 = por %p156, %p157
    %s160 = sadd.s32 %s159, 1
    %p163 = scmp.eq.s32.totalorder %s20, 1
    %p164 = scmp.ne.s32.totalorder %s159, %s161
    %p165 = scmp.eq.s32.totalorder %s20, 0
    %p166 = por %p164, %p165
    %p167 = scmp.ne.s32.totalorder %s159, %s161
    %p168 = scmp.eq.s32.totalorder %s25, 1
    %p169 = por %p167, %p168
    %p170 = scmp.ne.s32.totalorder %s161, %s162
    %p171 = scmp.eq.s32.totalorder %s25, 0
    %p172 = por %p170, %p171
    %p173 = scmp.ne.s32.totalorder %s161, %s162
    %p174 = scmp.eq.s32.totalorder %s26, 1
    %p175 = por %p173, %p174
    %p177 = scmp.ne.s32.totalorder %s162, %s176
    %p178 = scmp.eq.s32.totalorder %s26, 0
    %p179 = por %p177, %p178
    %s181 = sadd.s32 %s180, 1
    %p184 = scmp.eq.s32.totalorder %s20, 1
    %p185 = scmp.ne.s32.totalorder %s180, %s182
    %p186 = scmp.eq.s32.totalorder %s20, 0
    %p187 = por %p185, %p186
    %p188 = scmp.ne.s32.totalorder %s180, %s182
    %p189 = scmp.eq.s32.totalorder %s25, 1
    %p190 = por %p188, %p189
    %p191 = scmp.ne.s32.totalorder %s182, %s183
    %p192 = scmp.eq.s32.totalorder %s25, 0
    %p193 = por %p191, %p192
    %p194 = scmp.ne.s32.totalorder %s182, %s183
    %p195 = scmp.eq.s32.totalorder %s26, 1
    %p196 = por %p194, %p195
    %p198 = scmp.ne.s32.totalorder %s183, %s197
    %p199 = scmp.eq.s32.totalorder %s26, 0
    %p200 = por %p198, %p199
    %s202 = sadd.s32 %s201, 1
    %p205 = scmp.eq.s32.totalorder %s20, 1
    %p206 = scmp.ne.s32.totalorder %s201, %s203
    %p207 = scmp.eq.s32.totalorder %s20, 0
    %p208 = por %p206, %p207
    %p209 = scmp.ne.s32.totalorder %s201, %s203
    %p210 = scmp.eq.s32.totalorder %s25, 1
    %p211 = por %p209, %p210
    %p212 = scmp.ne.s32.totalorder %s203, %s204
    %p213 = scmp.eq.s32.totalorder %s25, 0
    %p214 = por %p212, %p213
    %p215 = scmp.ne.s32.totalorder %s203, %s204
    %p216 = scmp.eq.s32.totalorder %s26, 1
    %p217 = por %p215, %p216
    %p219 = scmp.ne.s32.totalorder %s204, %s218
    %p220 = scmp.eq.s32.totalorder %s26, 0
    %p221 = por %p219, %p220
    %s223 = sadd.s32 %s222, 1
    %p226 = scmp.eq.s32.totalorder %s20, 1
    %p227 = scmp.ne.s32.totalorder %s222, %s224
    %p228 = scmp.eq.s32.totalorder %s20, 0
    %p229 = por %p227, %p228
    %p230 = scmp.ne.s32.totalorder %s222, %s224
    %p231 = scmp.eq.s32.totalorder %s25, 1
    %p232 = por %p230, %p231
    %p233 = scmp.ne.s32.totalorder %s224, %s225
    %p234 = scmp.eq.s32.totalorder %s25, 0
    %p235 = por %p233, %p234
    %p236 = scmp.ne.s32.totalorder %s224, %s225
    %p237 = scmp.eq.s32.totalorder %s26, 1
    %p238 = por %p236, %p237
    %p240 = scmp.ne.s32.totalorder %s225, %s239
    %p241 = scmp.eq.s32.totalorder %s26, 0
    %p242 = por %p240, %p241
    %s244 = sadd.s32 %s243, 1
    %p247 = scmp.eq.s32.totalorder %s20, 1
    %p248 = scmp.ne.s32.totalorder %s243, %s245
    %p249 = scmp.eq.s32.totalorder %s20, 0
    %p250 = por %p248, %p249
    %p251 = scmp.ne.s32.totalorder %s243, %s245
    %p252 = scmp.eq.s32.totalorder %s25, 1
    %p253 = por %p251, %p252
    %p254 = scmp.ne.s32.totalorder %s245, %s246
    %p255 = scmp.eq.s32.totalorder %s25, 0
    %p256 = por %p254, %p255
    %p257 = scmp.ne.s32.totalorder %s245, %s246
    %p258 = scmp.eq.s32.totalorder %s26, 1
    %p259 = por %p257, %p258
    %p261 = scmp.ne.s32.totalorder %s246, %s260
    %p262 = scmp.eq.s32.totalorder %s26, 0
    %p263 = por %p261, %p262
    %s265 = sadd.s32 %s264, 1
    %p268 = scmp.eq.s32.totalorder %s20, 1
    %p269 = scmp.ne.s32.totalorder %s264, %s266
    %p270 = scmp.eq.s32.totalorder %s20, 0
    %p271 = por %p269, %p270
    %p272 = scmp.ne.s32.totalorder %s264, %s266
    %p273 = scmp.eq.s32.totalorder %s25, 1
    %p274 = por %p272, %p273
    %p275 = scmp.ne.s32.totalorder %s266, %s267
    %p276 = scmp.eq.s32.totalorder %s25, 0
    %p277 = por %p275, %p276
    %p278 = scmp.ne.s32.totalorder %s266, %s267
    %p279 = scmp.eq.s32.totalorder %s26, 1
    %p280 = por %p278, %p279
    %p282 = scmp.ne.s32.totalorder %s267, %s281
    %p283 = scmp.eq.s32.totalorder %s26, 0
    %p284 = por %p282, %p283
    %s286 = sadd.s32 %s285, 1
    %p289 = scmp.eq.s32.totalorder %s20, 1
    %p290 = scmp.ne.s32.totalorder %s285, %s287
    %p291 = scmp.eq.s32.totalorder %s20, 0
    %p292 = por %p290, %p291
    %p293 = scmp.ne.s32.totalorder %s285, %s287
    %p294 = scmp.eq.s32.totalorder %s25, 1
    %p295 = por %p293, %p294
    %p296 = scmp.ne.s32.totalorder %s287, %s288
    %p297 = scmp.eq.s32.totalorder %s25, 0
    %p298 = por %p296, %p297
    %p299 = scmp.ne.s32.totalorder %s287, %s288
    %p300 = scmp.eq.s32.totalorder %s26, 1
    %p301 = por %p299, %p300
    %p303 = scmp.ne.s32.totalorder %s288, %s302
    %p304 = scmp.eq.s32.totalorder %s26, 0
    %p305 = por %p303, %p304
    %s307 = sadd.s32 %s306, 1
    %p310 = scmp.eq.s32.totalorder %s20, 1
    %p311 = scmp.ne.s32.totalorder %s306, %s308
    %p312 = scmp.eq.s32.totalorder %s20, 0
    %p313 = por %p311, %p312
    %p314 = scmp.ne.s32.totalorder %s306, %s308
    %p315 = scmp.eq.s32.totalorder %s25, 1
    %p316 = por %p314, %p315
    %p317 = scmp.ne.s32.totalorder %s308, %s309
    %p318 = scmp.eq.s32.totalorder %s25, 0
    %p319 = por %p317, %p318
    %p320 = scmp.ne.s32.totalorder %s308, %s309
    %p321 = scmp.eq.s32.totalorder %s26, 1
    %p322 = por %p320, %p321
    %p324 = scmp.ne.s32.totalorder %s309, %s323
    %p325 = scmp.eq.s32.totalorder %s26, 0
    %p326 = por %p324, %p325
    %s327 = ssub.s32 %s20, %s27
    %p328 = scmp.eq.s32.totalorder %s327, 0
    %s330 = sadd.s32 %s329, 1
    %s331 = scalar_select %p328, %s329, %s330
    %p334 = pneg %p328
    %p335 = scmp.eq.s32.totalorder %s20, 1
    %p336 = por %p334, %p335
    %p337 = scmp.ne.s32.totalorder %s329, %s332
    %p338 = scmp.eq.s32.totalorder %s20, 0
    %p339 = por %p337, %p338
    %p340 = scmp.ne.s32.totalorder %s329, %s332
    %p341 = scmp.eq.s32.totalorder %s25, 1
    %p342 = por %p340, %p341
    %p343 = scmp.ne.s32.totalorder %s332, %s333
    %p344 = scmp.eq.s32.totalorder %s25, 0
    %p345 = por %p343, %p344
    %p346 = scmp.ne.s32.totalorder %s332, %s333
    %p347 = scmp.eq.s32.totalorder %s26, 1
    %p348 = por %p346, %p347
    %p350 = scmp.ne.s32.totalorder %s333, %s349
    %p351 = scmp.eq.s32.totalorder %s26, 0
    %p352 = por %p350, %p351
    %p353 = scmp.le.s32.totalorder 1, %s20
    %p354 = scmp.lt.s32.totalorder %s20, 3
    %p355 = pnand %p353, %p354
    %p356 = pneg %p355
    // Predicated region
    $region9: #{net_forward.1} parent=5 // pred_check
      _
    $region10: #{net_forward.1} parent=5 // pred_check_branch
      %358 = sbr.rel (%p355) target = $region12
    $region11: #{net_forward.1} parent=5 // pred_region
      %s359 = ssub.s32 %s20, 1
      // Predicated region
      $region13: #{net_forward.1} parent=11 // pred_check
        %p360 = pneg %p67
      $region14: #{net_forward.1} parent=11 // pred_check_branch
        %362 = sbr.rel (%p360) target = $region16
      $region15: #{net_forward.1} parent=11 // pred_region
        _
      $region16: #{net_forward.1} parent=11 // pred_fallthru
        _
      // Predicated region
      $region17: #{net_forward.1} parent=11 // pred_check
        %p363 = pneg %p88
      $region18: #{net_forward.1} parent=11 // pred_check_branch
        %365 = sbr.rel (%p363) target = $region20
      $region19: #{net_forward.1} parent=11 // pred_region
        _
      $region20: #{net_forward.1} parent=11 // pred_fallthru
        _
      // Predicated region
      $region21: #{net_forward.1} parent=11 // pred_check
        %p366 = pneg %p109
      $region22: #{net_forward.1} parent=11 // pred_check_branch
        %368 = sbr.rel (%p366) target = $region24
      $region23: #{net_forward.1} parent=11 // pred_region
        _
      $region24: #{net_forward.1} parent=11 // pred_fallthru
        _
      // Predicated region
      $region25: #{net_forward.1} parent=11 // pred_check
        %p369 = pneg %p130
      $region26: #{net_forward.1} parent=11 // pred_check_branch
        %371 = sbr.rel (%p369) target = $region28
      $region27: #{net_forward.1} parent=11 // pred_region
        _
      $region28: #{net_forward.1} parent=11 // pred_fallthru
        _
      // Predicated region
      $region29: #{net_forward.1} parent=11 // pred_check
        %p372 = pneg %p151
      $region30: #{net_forward.1} parent=11 // pred_check_branch
        %374 = sbr.rel (%p372) target = $region32
      $region31: #{net_forward.1} parent=11 // pred_region
        _
      $region32: #{net_forward.1} parent=11 // pred_fallthru
        _
      // Predicated region
      $region33: #{net_forward.1} parent=11 // pred_check
        %p375 = pneg %p172
      $region34: #{net_forward.1} parent=11 // pred_check_branch
        %377 = sbr.rel (%p375) target = $region36
      $region35: #{net_forward.1} parent=11 // pred_region
        _
      $region36: #{net_forward.1} parent=11 // pred_fallthru
        _
      // Predicated region
      $region37: #{net_forward.1} parent=11 // pred_check
        %p378 = pneg %p193
      $region38: #{net_forward.1} parent=11 // pred_check_branch
        %380 = sbr.rel (%p378) target = $region40
      $region39: #{net_forward.1} parent=11 // pred_region
        _
      $region40: #{net_forward.1} parent=11 // pred_fallthru
        _
      // Predicated region
      $region41: #{net_forward.1} parent=11 // pred_check
        %p381 = pneg %p214
      $region42: #{net_forward.1} parent=11 // pred_check_branch
        %383 = sbr.rel (%p381) target = $region44
      $region43: #{net_forward.1} parent=11 // pred_region
        _
      $region44: #{net_forward.1} parent=11 // pred_fallthru
        _
      // Predicated region
      $region45: #{net_forward.1} parent=11 // pred_check
        %p384 = pneg %p235
      $region46: #{net_forward.1} parent=11 // pred_check_branch
        %386 = sbr.rel (%p384) target = $region48
      $region47: #{net_forward.1} parent=11 // pred_region
        _
      $region48: #{net_forward.1} parent=11 // pred_fallthru
        _
      // Predicated region
      $region49: #{net_forward.1} parent=11 // pred_check
        %p387 = pneg %p256
      $region50: #{net_forward.1} parent=11 // pred_check_branch
        %389 = sbr.rel (%p387) target = $region52
      $region51: #{net_forward.1} parent=11 // pred_region
        _
      $region52: #{net_forward.1} parent=11 // pred_fallthru
        _
      // Predicated region
      $region53: #{net_forward.1} parent=11 // pred_check
        %p390 = pneg %p277
      $region54: #{net_forward.1} parent=11 // pred_check_branch
        %392 = sbr.rel (%p390) target = $region56
      $region55: #{net_forward.1} parent=11 // pred_region
        _
      $region56: #{net_forward.1} parent=11 // pred_fallthru
        _
      // Predicated region
      $region57: #{net_forward.1} parent=11 // pred_check
        %p393 = pneg %p298
      $region58: #{net_forward.1} parent=11 // pred_check_branch
        %395 = sbr.rel (%p393) target = $region60
      $region59: #{net_forward.1} parent=11 // pred_region
        _
      $region60: #{net_forward.1} parent=11 // pred_fallthru
        _
      // Predicated region
      $region61: #{net_forward.1} parent=11 // pred_check
        %p396 = pneg %p319
      $region62: #{net_forward.1} parent=11 // pred_check_branch
        %398 = sbr.rel (%p396) target = $region64
      $region63: #{net_forward.1} parent=11 // pred_region
        _
      $region64: #{net_forward.1} parent=11 // pred_fallthru
        _
    $region12: #{net_forward.1} parent=5 // pred_fallthru
      _
    %p399 = scmp.lt.s32.totalorder %s20, 2
    // Predicated region
    $region65: #{net_forward.1} parent=5 // pred_check
      %p400 = pneg %p399
    $region66: #{net_forward.1} parent=5 // pred_check_branch
      %402 = sbr.rel (%p400) target = $region68
    $region67: #{net_forward.1} parent=5 // pred_region
      // Predicated region
      $region69: #{net_forward.1} parent=67 // pred_check
        %p403 = pneg %p40
      $region70: #{net_forward.1} parent=67 // pred_check_branch
        %405 = sbr.rel (%p403) target = $region72
      $region71: #{net_forward.1} parent=67 // pred_region
        %p406 = scmp.lt.s32.totalorder %s20, 1
        %s407 = scalar_select %p406, %s20, 1
        %s408 = smul.addr %s407, 41
        %s409 = smul.addr %s408, 8
        %s410 = scalar_lea.vmem %s0, %s409
      $region72: #{net_forward.1} parent=67 // pred_fallthru
        _
    $region68: #{net_forward.1} parent=5 // pred_fallthru
      _
    %p411 = scmp.le.s32.totalorder 1, %s20
    %p412 = scmp.lt.s32.totalorder %s20, 3
    %p413 = pnand %p411, %p412
    %p414 = pneg %p413
    // Predicated region
    $region73: #{net_forward.1} parent=5 // pred_check
      _
    $region74: #{net_forward.1} parent=5 // pred_check_branch
      %416 = sbr.rel (%p413) target = $region76
    $region75: #{net_forward.1} parent=5 // pred_region
      %s417 = ssub.s32 %s20, 1
      %p418 = scmp.lt.s32.totalorder %s25, 1
      %s419 = scalar_select %p418, %s25, 1
      %s420 = smul.addr %s419, 41
      %s421 = smul.addr %s420, 8
      %s422 = scalar_lea.vmem %s0, %s421
      %p423 = pneg %p46
      %p424 = pneg %p43
      %p425 = pneg %p67
      %p426 = pneg %p64
      %p427 = pneg %p88
      %p428 = pneg %p85
      %p429 = pneg %p109
      %p430 = pneg %p106
      %p431 = pneg %p130
      %p432 = pneg %p127
      %p433 = pneg %p151
      %p434 = pneg %p148
      %p435 = pneg %p172
      %p436 = pneg %p169
      %p437 = pneg %p193
      %p438 = pneg %p190
      %p439 = pneg %p214
      %p440 = pneg %p211
      %p441 = pneg %p235
      %p442 = pneg %p232
      %p443 = pneg %p256
      %p444 = pneg %p253
      %p445 = pneg %p277
      %p446 = pneg %p274
      %p447 = pneg %p298
      %p448 = pneg %p295
      %p449 = pneg %p319
      %p450 = pneg %p316
      %p451 = pneg %p345
      %p452 = pneg %p342
      %p453 = scmp.lt.s32.totalorder %s25, 1
      %s454 = scalar_select %p453, %s25, 1
      %s455 = scalar_lea.vmem %s14, %s454
      %p456 = scmp.lt.s32.totalorder %s25, 1
      %s457 = scalar_select %p456, %s25, 1
      %s458 = smul.addr %s457, 41
      %s459 = smul.addr %s458, 8
      %s460 = scalar_lea.vmem %s0, %s459
      %p461 = scmp.lt.s32.totalorder %s25, 1
      %s462 = scalar_select %p461, %s25, 1
      %s463 = scalar_lea.vmem %s14, %s462
      %v464 = vld [vmem:[%s460] sm:$0xff]
      %v465 = vld [vmem:[%s460 + $0x8] sm:$0xff]
      %v466 = vld [vmem:[%s460 + $0x10] sm:$0xff]
      %v467 = vld [vmem:[%s460 + $0x18] sm:$0xff]
      %v468 = vld [vmem:[%s460 + $0x20] sm:$0xff]
      %v469 = vld [vmem:[%s460 + $0x28] sm:$0xff]
      %v470 = vld [vmem:[%s460 + $0x30] sm:$0xff]
      %v471 = vld [vmem:[%s460 + $0x38] sm:$0xff]
      %v472 = vld [vmem:[%s460 + $0x40] sm:$0xff]
      %v473 = vld [vmem:[%s460 + $0x48] sm:$0xff]
      %v474 = vld [vmem:[%s460 + $0x50] sm:$0xff]
      %v475 = vld [vmem:[%s460 + $0x58] sm:$0xff]
      %v476 = vld [vmem:[%s460 + $0x60] sm:$0xff]
      %v477 = vld [vmem:[%s460 + $0x68] sm:$0xff]
      %v478 = vld [vmem:[%s460 + $0x70] sm:$0xff]
      %v479 = vld [vmem:[%s460 + $0x78] sm:$0xff]
      %v480 = vld [vmem:[%s460 + $0x80] sm:$0xff]
      %v481 = vld [vmem:[%s460 + $0x88] sm:$0xff]
      %v482 = vld [vmem:[%s460 + $0x90] sm:$0xff]
      %v483 = vld [vmem:[%s460 + $0x98] sm:$0xff]
      %v484 = vld [vmem:[%s460 + $0xa0] sm:$0xff]
      %v485 = vld [vmem:[%s460 + $0xa8] sm:$0xff]
      %v486 = vld [vmem:[%s460 + $0xb0] sm:$0xff]
      %v487 = vld [vmem:[%s460 + $0xb8] sm:$0xff]
      %v488 = vld [vmem:[%s460 + $0xc0] sm:$0xff]
      %v489 = vld [vmem:[%s460 + $0xc8] sm:$0xff]
      %v490 = vld [vmem:[%s460 + $0xd0] sm:$0xff]
      %v491 = vld [vmem:[%s460 + $0xd8] sm:$0xff]
      %v492 = vld [vmem:[%s460 + $0xe0] sm:$0xff]
      %v493 = vld [vmem:[%s460 + $0xe8] sm:$0xff]
      %v494 = vld [vmem:[%s460 + $0xf0] sm:$0xff]
      %v495 = vld [vmem:[%s460 + $0xf8] sm:$0xff]
      %v496 = vld [vmem:[%s460 + $0x100] sm:$0xff]
      %v497 = vld [vmem:[%s460 + $0x108] sm:$0xff]
      %v498 = vld [vmem:[%s460 + $0x110] sm:$0xff]
      %v499 = vld [vmem:[%s460 + $0x118] sm:$0xff]
      %v500 = vld [vmem:[%s1] sm:$0xff]
      %v501 = vld [vmem:[%s460 + $0x1] sm:$0xff]
      %v502 = vld [vmem:[%s460 + $0x9] sm:$0xff]
      %v503 = vld [vmem:[%s460 + $0x11] sm:$0xff]
      %v504 = vld [vmem:[%s460 + $0x19] sm:$0xff]
      %v505 = vld [vmem:[%s460 + $0x21] sm:$0xff]
      %v506 = vld [vmem:[%s460 + $0x29] sm:$0xff]
      %v507 = vld [vmem:[%s460 + $0x31] sm:$0xff]
      %v508 = vld [vmem:[%s460 + $0x39] sm:$0xff]
      %v509 = vld [vmem:[%s460 + $0x41] sm:$0xff]
      %v510 = vld [vmem:[%s460 + $0x49] sm:$0xff]
      %v511 = vld [vmem:[%s460 + $0x51] sm:$0xff]
      %v512 = vld [vmem:[%s460 + $0x59] sm:$0xff]
      %v513 = vld [vmem:[%s460 + $0x61] sm:$0xff]
      %v514 = vld [vmem:[%s460 + $0x69] sm:$0xff]
      %v515 = vld [vmem:[%s460 + $0x71] sm:$0xff]
      %v516 = vld [vmem:[%s460 + $0x79] sm:$0xff]
      %v517 = vld [vmem:[%s460 + $0x81] sm:$0xff]
      %v518 = vld [vmem:[%s460 + $0x89] sm:$0xff]
      %v519 = vld [vmem:[%s460 + $0x91] sm:$0xff]
      %v520 = vld [vmem:[%s460 + $0x99] sm:$0xff]
      %v521 = vld [vmem:[%s460 + $0xa1] sm:$0xff]
      %v522 = vld [vmem:[%s460 + $0xa9] sm:$0xff]
      %v523 = vld [vmem:[%s460 + $0xb1] sm:$0xff]
      %v524 = vld [vmem:[%s460 + $0xb9] sm:$0xff]
      %v525 = vld [vmem:[%s460 + $0xc1] sm:$0xff]
      %v526 = vld [vmem:[%s460 + $0xc9] sm:$0xff]
      %v527 = vld [vmem:[%s460 + $0xd1] sm:$0xff]
      %v528 = vld [vmem:[%s460 + $0xd9] sm:$0xff]
      %v529 = vld [vmem:[%s460 + $0xe1] sm:$0xff]
      %v530 = vld [vmem:[%s460 + $0xe9] sm:$0xff]
      %v531 = vld [vmem:[%s460 + $0xf1] sm:$0xff]
      %v532 = vld [vmem:[%s460 + $0xf9] sm:$0xff]
      %v533 = vld [vmem:[%s460 + $0x101] sm:$0xff]
      %v534 = vld [vmem:[%s460 + $0x109] sm:$0xff]
      %v535 = vld [vmem:[%s460 + $0x111] sm:$0xff]
      %v536 = vld [vmem:[%s460 + $0x119] sm:$0xff]
      %s537 = scalar_lea.vmem %s1, 8
      %v538 = vld [vmem:[%s537] sm:$0xff]
      %vm539 = vcmask 64512
      %v541 = vsel %vm539, %v501, 0
      %v544 = vsel %vm539, %v502, 0
      %v547 = vsel %vm539, %v503, 0
      %v550 = vsel %vm539, %v504, 0
      %v553 = vsel %vm539, %v505, 0
      %v556 = vsel %vm539, %v506, 0
      %v559 = vsel %vm539, %v507, 0
      %v562 = vsel %vm539, %v508, 0
      %v565 = vsel %vm539, %v509, 0
      %v568 = vsel %vm539, %v510, 0
      %v571 = vsel %vm539, %v511, 0
      %v574 = vsel %vm539, %v512, 0
      %v577 = vsel %vm539, %v513, 0
      %v580 = vsel %vm539, %v514, 0
      %v583 = vsel %vm539, %v515, 0
      %v586 = vsel %vm539, %v516, 0
      %v589 = vsel %vm539, %v517, 0
      %v592 = vsel %vm539, %v518, 0
      %v595 = vsel %vm539, %v519, 0
      %v598 = vsel %vm539, %v520, 0
      %v601 = vsel %vm539, %v521, 0
      %v604 = vsel %vm539, %v522, 0
      %v607 = vsel %vm539, %v523, 0
      %v610 = vsel %vm539, %v524, 0
      %v613 = vsel %vm539, %v525, 0
      %v616 = vsel %vm539, %v526, 0
      %v619 = vsel %vm539, %v527, 0
      %v622 = vsel %vm539, %v528, 0
      %v625 = vsel %vm539, %v529, 0
      %v628 = vsel %vm539, %v530, 0
      %v631 = vsel %vm539, %v531, 0
      %v634 = vsel %vm539, %v532, 0
      %v637 = vsel %vm539, %v533, 0
      %v640 = vsel %vm539, %v534, 0
      %v643 = vsel %vm539, %v535, 0
      %v646 = vsel %vm539, %v536, 0
      %648 = vmatprep.subr.mxu0 0.0
      %649 = vmatpush1.msra.mxu0 %v538
      %650 = vmatprep.subr.mxu0 0.0
      %651 = vmatpush1.msra.mxu0 0.0
      %652 = vmatprep.subr.mxu0 0.0
      %653 = vmatpush1.msra.mxu0 0.0
      %654 = vmatprep.subr.mxu0 0.0
      %655 = vmatpush1.msra.mxu0 0.0
      %656 = vmatprep.subr.mxu0 0.0
      %657 = vmatpush1.msra.mxu0 0.0
      %658 = vmatprep.subr.mxu0 0.0
      %659 = vmatpush1.msra.mxu0 0.0
      %660 = vmatprep.subr.mxu0 0.0
      %661 = vmatpush1.msra.mxu0 0.0
      %662 = vmatprep.subr.mxu0 0.0
      %663 = vmatpush1.msra.mxu0 0.0
      %664 = vmatprep.subr.mxu0 0.0
      %665 = vmatpush1.msra.mxu0 0.0
      %666 = vmatprep.subr.mxu0 0.0
      %667 = vmatpush1.msra.mxu0 0.0
      %668 = vmatprep.subr.mxu0 0.0
      %669 = vmatpush1.msra.mxu0 0.0
      %670 = vmatprep.subr.mxu0 0.0
      %671 = vmatpush1.msra.mxu0 0.0
      %672 = vmatprep.subr.mxu0 0.0
      %673 = vmatpush1.msra.mxu0 0.0
      %674 = vmatprep.subr.mxu0 0.0
      %675 = vmatpush1.msra.mxu0 0.0
      %676 = vmatprep.subr.mxu0 0.0
      %677 = vmatpush1.msra.mxu0 0.0
      %678 = vmatprep.subr.mxu0 0.0
      %679 = vmatpush1.msra.mxu0 0.0
      %680 = vmatprep.subr.mxu0 0.0
      %681 = vmatpush1.msra.mxu0 0.0
      %682 = vmatprep.subr.mxu0 0.0
      %683 = vmatpush1.msra.mxu0 0.0
      %684 = vmatprep.subr.mxu0 0.0
      %685 = vmatpush1.msra.mxu0 0.0
      %686 = vmatprep.subr.mxu0 0.0
      %687 = vmatpush1.msra.mxu0 0.0
      %688 = vmatprep.subr.mxu0 0.0
      %689 = vmatpush1.msra.mxu0 0.0
      %690 = vmatprep.subr.mxu0 0.0
      %691 = vmatpush1.msra.mxu0 0.0
      %692 = vmatprep.subr.mxu0 0.0
      %693 = vmatpush1.msra.mxu0 0.0
      %694 = vmatprep.subr.mxu0 0.0
      %695 = vmatpush1.msra.mxu0 0.0
      %696 = vmatprep.subr.mxu0 0.0
      %697 = vmatpush1.msra.mxu0 0.0
      %698 = vmatprep.subr.mxu0 0.0
      %699 = vmatpush1.msra.mxu0 0.0
      %700 = vmatprep.subr.mxu0 0.0
      %701 = vmatpush1.msra.mxu0 0.0
      %702 = vmatprep.subr.mxu0 0.0
      %703 = vmatpush1.msra.mxu0 0.0
      %704 = vmatprep.subr.mxu0 0.0
      %705 = vmatpush1.msra.mxu0 0.0
      %706 = vmatprep.subr.mxu0 0.0
      %707 = vmatpush1.msra.mxu0 0.0
      %708 = vmatprep.subr.mxu0 0.0
      %709 = vmatpush1.msra.mxu0 0.0
      %710 = vmatprep.subr.mxu0 0.0
      %711 = vmatpush1.msra.mxu0 0.0
      %712 = vmatprep.mubr.f32.mxu0 0.0
      %713 = vmatmul.mubr.f32.gmra.mrb[0].mxu0 %v541
      %v714 = vpop.f32.mrb[0].mxu0
      %v715 = vadd.f32 0.0, %v714
      %v716 = vpop.f32.mrb[0].mxu0
      %717 = vmatprep.mubr.f32.mxu0 0.0
      %718 = vmatmul.mubr.f32.gmra.mrb[0].mxu0 %v544
      %v719 = vpop.f32.mrb[0].mxu0
      %v720 = vadd.f32 0.0, %v719
      %v721 = vpop.f32.mrb[0].mxu0
      %722 = vmatprep.mubr.f32.mxu0 0.0
      %723 = vmatmul.mubr.f32.gmra.mrb[0].mxu0 %v547
      %v724 = vpop.f32.mrb[0].mxu0
      %v725 = vadd.f32 0.0, %v724
      %v726 = vpop.f32.mrb[0].mxu0
      %727 = vmatprep.mubr.f32.mxu0 0.0
      %728 = vmatmul.mubr.f32.gmra.mrb[0].mxu0 %v550
      %v729 = vpop.f32.mrb[0].mxu0
      %v730 = vadd.f32 0.0, %v729
      %v731 = vpop.f32.mrb[0].mxu0
      %732 = vmatprep.mubr.f32.mxu0 0.0
      %733 = vmatmul.mubr.f32.gmra.mrb[0].mxu0 %v553
      %v734 = vpop.f32.mrb[0].mxu0
      %v735 = vadd.f32 0.0, %v734
      %v736 = vpop.f32.mrb[0].mxu0
      %737 = vmatprep.mubr.f32.mxu0 0.0
      %738 = vmatmul.mubr.f32.gmra.mrb[0].mxu0 %v556
      %v739 = vpop.f32.mrb[0].mxu0
      %v740 = vadd.f32 0.0, %v739
      %v741 = vpop.f32.mrb[0].mxu0
      %742 = vmatprep.mubr.f32.mxu0 0.0
      %743 = vmatmul.mubr.f32.gmra.mrb[0].mxu0 %v559
      %v744 = vpop.f32.mrb[0].mxu0
      %v745 = vadd.f32 0.0, %v744
      %v746 = vpop.f32.mrb[0].mxu0
      %747 = vmatprep.mubr.f32.mxu0 0.0
      %748 = vmatmul.mubr.f32.gmra.mrb[0].mxu0 %v562
      %v749 = vpop.f32.mrb[0].mxu0
      %v750 = vadd.f32 0.0, %v749
      %v751 = vpop.f32.mrb[0].mxu0
      %752 = vmatprep.mubr.f32.mxu0 0.0
      %753 = vmatmul.mubr.f32.gmra.mrb[0].mxu0 %v565
      %v754 = vpop.f32.mrb[0].mxu0
      %v755 = vadd.f32 0.0, %v754
      %v756 = vpop.f32.mrb[0].mxu0
      %757 = vmatprep.mubr.f32.mxu0 0.0
      %758 = vmatmul.mubr.f32.gmra.mrb[0].mxu0 %v568
      %v759 = vpop.f32.mrb[0].mxu0
      %v760 = vadd.f32 0.0, %v759
      %v761 = vpop.f32.mrb[0].mxu0
      %762 = vmatprep.mubr.f32.mxu0 0.0
      %763 = vmatmul.mubr.f32.gmra.mrb[0].mxu0 %v571
      %v764 = vpop.f32.mrb[0].mxu0
      %v765 = vadd.f32 0.0, %v764
      %v766 = vpop.f32.mrb[0].mxu0
      %767 = vmatprep.mubr.f32.mxu0 0.0
      %768 = vmatmul.mubr.f32.gmra.mrb[0].mxu0 %v574
      %v769 = vpop.f32.mrb[0].mxu0
      %v770 = vadd.f32 0.0, %v769
      %v771 = vpop.f32.mrb[0].mxu0
      %772 = vmatprep.mubr.f32.mxu0 0.0
      %773 = vmatmul.mubr.f32.gmra.mrb[0].mxu0 %v577
      %v774 = vpop.f32.mrb[0].mxu0
      %v775 = vadd.f32 0.0, %v774
      %v776 = vpop.f32.mrb[0].mxu0
      %777 = vmatprep.mubr.f32.mxu0 0.0
      %778 = vmatmul.mubr.f32.gmra.mrb[0].mxu0 %v580
      %v779 = vpop.f32.mrb[0].mxu0
      %v780 = vadd.f32 0.0, %v779
      %v781 = vpop.f32.mrb[0].mxu0
      %782 = vmatprep.mubr.f32.mxu0 0.0
      %783 = vmatmul.mubr.f32.gmra.mrb[0].mxu0 %v583
      %v784 = vpop.f32.mrb[0].mxu0
      %v785 = vadd.f32 0.0, %v784
      %v786 = vpop.f32.mrb[0].mxu0
      %787 = vmatprep.mubr.f32.mxu0 0.0
      %788 = vmatmul.mubr.f32.gmra.mrb[0].mxu0 %v586
      %v789 = vpop.f32.mrb[0].mxu0
      %v790 = vadd.f32 0.0, %v789
      %v791 = vpop.f32.mrb[0].mxu0
      %792 = vmatprep.mubr.f32.mxu0 0.0
      %793 = vmatmul.mubr.f32.gmra.mrb[0].mxu0 %v589
      %v794 = vpop.f32.mrb[0].mxu0
      %v795 = vadd.f32 0.0, %v794
      %v796 = vpop.f32.mrb[0].mxu0
      %797 = vmatprep.mubr.f32.mxu0 0.0
      %798 = vmatmul.mubr.f32.gmra.mrb[0].mxu0 %v592
      %v799 = vpop.f32.mrb[0].mxu0
      %v800 = vadd.f32 0.0, %v799
      %v801 = vpop.f32.mrb[0].mxu0
      %802 = vmatprep.mubr.f32.mxu0 0.0
      %803 = vmatmul.mubr.f32.gmra.mrb[0].mxu0 %v595
      %v804 = vpop.f32.mrb[0].mxu0
      %v805 = vadd.f32 0.0, %v804
      %v806 = vpop.f32.mrb[0].mxu0
      %807 = vmatprep.mubr.f32.mxu0 0.0
      %808 = vmatmul.mubr.f32.gmra.mrb[0].mxu0 %v598
      %v809 = vpop.f32.mrb[0].mxu0
      %v810 = vadd.f32 0.0, %v809
      %v811 = vpop.f32.mrb[0].mxu0
      %812 = vmatprep.mubr.f32.mxu0 0.0
      %813 = vmatmul.mubr.f32.gmra.mrb[0].mxu0 %v601
      %v814 = vpop.f32.mrb[0].mxu0
      %v815 = vadd.f32 0.0, %v814
      %v816 = vpop.f32.mrb[0].mxu0
      %817 = vmatprep.mubr.f32.mxu0 0.0
      %818 = vmatmul.mubr.f32.gmra.mrb[0].mxu0 %v604
      %v819 = vpop.f32.mrb[0].mxu0
      %v820 = vadd.f32 0.0, %v819
      %v821 = vpop.f32.mrb[0].mxu0
      %822 = vmatprep.mubr.f32.mxu0 0.0
      %823 = vmatmul.mubr.f32.gmra.mrb[0].mxu0 %v607
      %v824 = vpop.f32.mrb[0].mxu0
      %v825 = vadd.f32 0.0, %v824
      %v826 = vpop.f32.mrb[0].mxu0
      %827 = vmatprep.mubr.f32.mxu0 0.0
      %828 = vmatmul.mubr.f32.gmra.mrb[0].mxu0 %v610
      %v829 = vpop.f32.mrb[0].mxu0
      %v830 = vadd.f32 0.0, %v829
      %v831 = vpop.f32.mrb[0].mxu0
      %832 = vmatprep.mubr.f32.mxu0 0.0
      %833 = vmatmul.mubr.f32.gmra.mrb[0].mxu0 %v613
      %v834 = vpop.f32.mrb[0].mxu0
      %v835 = vadd.f32 0.0, %v834
      %v836 = vpop.f32.mrb[0].mxu0
      %837 = vmatprep.mubr.f32.mxu0 0.0
      %838 = vmatmul.mubr.f32.gmra.mrb[0].mxu0 %v616
      %v839 = vpop.f32.mrb[0].mxu0
      %v840 = vadd.f32 0.0, %v839
      %v841 = vpop.f32.mrb[0].mxu0
      %842 = vmatprep.mubr.f32.mxu0 0.0
      %843 = vmatmul.mubr.f32.gmra.mrb[0].mxu0 %v619
      %v844 = vpop.f32.mrb[0].mxu0
      %v845 = vadd.f32 0.0, %v844
      %v846 = vpop.f32.mrb[0].mxu0
      %847 = vmatprep.mubr.f32.mxu0 0.0
      %848 = vmatmul.mubr.f32.gmra.mrb[0].mxu0 %v622
      %v849 = vpop.f32.mrb[0].mxu0
      %v850 = vadd.f32 0.0, %v849
      %v851 = vpop.f32.mrb[0].mxu0
      %852 = vmatprep.mubr.f32.mxu0 0.0
      %853 = vmatmul.mubr.f32.gmra.mrb[0].mxu0 %v625
      %v854 = vpop.f32.mrb[0].mxu0
      %v855 = vadd.f32 0.0, %v854
      %v856 = vpop.f32.mrb[0].mxu0
      %857 = vmatprep.mubr.f32.mxu0 0.0
      %858 = vmatmul.mubr.f32.gmra.mrb[0].mxu0 %v628
      %v859 = vpop.f32.mrb[0].mxu0
      %v860 = vadd.f32 0.0, %v859
      %v861 = vpop.f32.mrb[0].mxu0
      %862 = vmatprep.mubr.f32.mxu0 0.0
      %863 = vmatmul.mubr.f32.gmra.mrb[0].mxu0 %v631
      %v864 = vpop.f32.mrb[0].mxu0
      %v865 = vadd.f32 0.0, %v864
      %v866 = vpop.f32.mrb[0].mxu0
      %867 = vmatprep.mubr.f32.mxu0 0.0
      %868 = vmatmul.mubr.f32.gmra.mrb[0].mxu0 %v634
      %v869 = vpop.f32.mrb[0].mxu0
      %v870 = vadd.f32 0.0, %v869
      %v871 = vpop.f32.mrb[0].mxu0
      %872 = vmatprep.mubr.f32.mxu0 0.0
      %873 = vmatmul.mubr.f32.gmra.mrb[0].mxu0 %v637
      %v874 = vpop.f32.mrb[0].mxu0
      %v875 = vadd.f32 0.0, %v874
      %v876 = vpop.f32.mrb[0].mxu0
      %877 = vmatprep.mubr.f32.mxu0 0.0
      %878 = vmatmul.mubr.f32.gmra.mrb[0].mxu0 %v640
      %v879 = vpop.f32.mrb[0].mxu0
      %v880 = vadd.f32 0.0, %v879
      %v881 = vpop.f32.mrb[0].mxu0
      %882 = vmatprep.mubr.f32.mxu0 0.0
      %883 = vmatmul.mubr.f32.gmra.mrb[0].mxu0 %v643
      %v884 = vpop.f32.mrb[0].mxu0
      %v885 = vadd.f32 0.0, %v884
      %v886 = vpop.f32.mrb[0].mxu0
      %887 = vmatprep.mubr.f32.mxu0 0.0
      %888 = vmatmul.mubr.f32.gmra.mrb[0].mxu0 %v646
      %v889 = vpop.f32.mrb[0].mxu0
      %v890 = vadd.f32 0.0, %v889
      %v891 = vpop.f32.mrb[0].mxu0
      %892 = vdwg.mxu0
      %v894 = vsel %vm539, %v464, 0
      %v897 = vsel %vm539, %v465, 0
      %v900 = vsel %vm539, %v466, 0
      %v903 = vsel %vm539, %v467, 0
      %v906 = vsel %vm539, %v468, 0
      %v909 = vsel %vm539, %v469, 0
      %v912 = vsel %vm539, %v470, 0
      %v915 = vsel %vm539, %v471, 0
      %v918 = vsel %vm539, %v472, 0
      %v921 = vsel %vm539, %v473, 0
      %v924 = vsel %vm539, %v474, 0
      %v927 = vsel %vm539, %v475, 0
      %v930 = vsel %vm539, %v476, 0
      %v933 = vsel %vm539, %v477, 0
      %v936 = vsel %vm539, %v478, 0
      %v939 = vsel %vm539, %v479, 0
      %v942 = vsel %vm539, %v480, 0
      %v945 = vsel %vm539, %v481, 0
      %v948 = vsel %vm539, %v482, 0
      %v951 = vsel %vm539, %v483, 0
      %v954 = vsel %vm539, %v484, 0
      %v957 = vsel %vm539, %v485, 0
      %v960 = vsel %vm539, %v486, 0
      %v963 = vsel %vm539, %v487, 0
      %v966 = vsel %vm539, %v488, 0
      %v969 = vsel %vm539, %v489, 0
      %v972 = vsel %vm539, %v490, 0
      %v975 = vsel %vm539, %v491, 0
      %v978 = vsel %vm539, %v492, 0
      %v981 = vsel %vm539, %v493, 0
      %v984 = vsel %vm539, %v494, 0
      %v987 = vsel %vm539, %v495, 0
      %v990 = vsel %vm539, %v496, 0
      %v993 = vsel %vm539, %v497, 0
      %v996 = vsel %vm539, %v498, 0
      %v999 = vsel %vm539, %v499, 0
      %1001 = vmatprep.subr.mxu0 0.0
      %1002 = vmatpush1.msra.mxu0 %v500
      %1003 = vmatprep.subr.mxu0 0.0
      %1004 = vmatpush1.msra.mxu0 0.0
      %1005 = vmatprep.subr.mxu0 0.0
      %1006 = vmatpush1.msra.mxu0 0.0
      %1007 = vmatprep.subr.mxu0 0.0
      %1008 = vmatpush1.msra.mxu0 0.0
      %1009 = vmatprep.subr.mxu0 0.0
      %1010 = vmatpush1.msra.mxu0 0.0
      %1011 = vmatprep.subr.mxu0 0.0
      %1012 = vmatpush1.msra.mxu0 0.0
      %1013 = vmatprep.subr.mxu0 0.0
      %1014 = vmatpush1.msra.mxu0 0.0
      %1015 = vmatprep.subr.mxu0 0.0
      %1016 = vmatpush1.msra.mxu0 0.0
      %1017 = vmatprep.subr.mxu0 0.0
      %1018 = vmatpush1.msra.mxu0 0.0
      %1019 = vmatprep.subr.mxu0 0.0
      %1020 = vmatpush1.msra.mxu0 0.0
      %1021 = vmatprep.subr.mxu0 0.0
      %1022 = vmatpush1.msra.mxu0 0.0
      %1023 = vmatprep.subr.mxu0 0.0
      %1024 = vmatpush1.msra.mxu0 0.0
      %1025 = vmatprep.subr.mxu0 0.0
      %1026 = vmatpush1.msra.mxu0 0.0
      %1027 = vmatprep.subr.mxu0 0.0
      %1028 = vmatpush1.msra.mxu0 0.0
      %1029 = vmatprep.subr.mxu0 0.0
      %1030 = vmatpush1.msra.mxu0 0.0
      %1031 = vmatprep.subr.mxu0 0.0
      %1032 = vmatpush1.msra.mxu0 0.0
      %1033 = vmatprep.subr.mxu0 0.0
      %1034 = vmatpush1.msra.mxu0 0.0
      %1035 = vmatprep.subr.mxu0 0.0
      %1036 = vmatpush1.msra.mxu0 0.0
      %1037 = vmatprep.subr.mxu0 0.0
      %1038 = vmatpush1.msra.mxu0 0.0
      %1039 = vmatprep.subr.mxu0 0.0
      %1040 = vmatpush1.msra.mxu0 0.0
      %1041 = vmatprep.subr.mxu0 0.0
      %1042 = vmatpush1.msra.mxu0 0.0
      %1043 = vmatprep.subr.mxu0 0.0
      %1044 = vmatpush1.msra.mxu0 0.0
      %1045 = vmatprep.subr.mxu0 0.0
      %1046 = vmatpush1.msra.mxu0 0.0
      %1047 = vmatprep.subr.mxu0 0.0
      %1048 = vmatpush1.msra.mxu0 0.0
      %1049 = vmatprep.subr.mxu0 0.0
      %1050 = vmatpush1.msra.mxu0 0.0
      %1051 = vmatprep.subr.mxu0 0.0
      %1052 = vmatpush1.msra.mxu0 0.0
      %1053 = vmatprep.subr.mxu0 0.0
      %1054 = vmatpush1.msra.mxu0 0.0
      %1055 = vmatprep.subr.mxu0 0.0
      %1056 = vmatpush1.msra.mxu0 0.0
      %1057 = vmatprep.subr.mxu0 0.0
      %1058 = vmatpush1.msra.mxu0 0.0
      %1059 = vmatprep.subr.mxu0 0.0
      %1060 = vmatpush1.msra.mxu0 0.0
      %1061 = vmatprep.subr.mxu0 0.0
      %1062 = vmatpush1.msra.mxu0 0.0
      %1063 = vmatprep.subr.mxu0 0.0
      %1064 = vmatpush1.msra.mxu0 0.0
      %1065 = vmatprep.mubr.f32.mxu0 0.0
      %1066 = vmatmul.mubr.f32.gmra.mrb[0].mxu0 %v894
      %v1067 = vpop.f32.mrb[0].mxu0
      %v1068 = vadd.f32 %v715, %v1067
      %v1069 = vpop.f32.mrb[0].mxu0
      %1070 = vmatprep.mubr.f32.mxu0 0.0
      %1071 = vmatmul.mubr.f32.gmra.mrb[0].mxu0 %v897
      %v1072 = vpop.f32.mrb[0].mxu0
      %v1073 = vadd.f32 %v720, %v1072
      %v1074 = vpop.f32.mrb[0].mxu0
      %1075 = vmatprep.mubr.f32.mxu0 0.0
      %1076 = vmatmul.mubr.f32.gmra.mrb[0].mxu0 %v900
      %v1077 = vpop.f32.mrb[0].mxu0
      %v1078 = vadd.f32 %v725, %v1077
      %v1079 = vpop.f32.mrb[0].mxu0
      %1080 = vmatprep.mubr.f32.mxu0 0.0
      %1081 = vmatmul.mubr.f32.gmra.mrb[0].mxu0 %v903
      %v1082 = vpop.f32.mrb[0].mxu0
      %v1083 = vadd.f32 %v730, %v1082
      %v1084 = vpop.f32.mrb[0].mxu0
      %1085 = vmatprep.mubr.f32.mxu0 0.0
      %1086 = vmatmul.mubr.f32.gmra.mrb[0].mxu0 %v906
      %v1087 = vpop.f32.mrb[0].mxu0
      %v1088 = vadd.f32 %v735, %v1087
      %v1089 = vpop.f32.mrb[0].mxu0
      %1090 = vmatprep.mubr.f32.mxu0 0.0
      %1091 = vmatmul.mubr.f32.gmra.mrb[0].mxu0 %v909
      %v1092 = vpop.f32.mrb[0].mxu0
      %v1093 = vadd.f32 %v740, %v1092
      %v1094 = vpop.f32.mrb[0].mxu0
      %1095 = vmatprep.mubr.f32.mxu0 0.0
      %1096 = vmatmul.mubr.f32.gmra.mrb[0].mxu0 %v912
      %v1097 = vpop.f32.mrb[0].mxu0
      %v1098 = vadd.f32 %v745, %v1097
      %v1099 = vpop.f32.mrb[0].mxu0
      %1100 = vmatprep.mubr.f32.mxu0 0.0
      %1101 = vmatmul.mubr.f32.gmra.mrb[0].mxu0 %v915
      %v1102 = vpop.f32.mrb[0].mxu0
      %v1103 = vadd.f32 %v750, %v1102
      %v1104 = vpop.f32.mrb[0].mxu0
      %1105 = vmatprep.mubr.f32.mxu0 0.0
      %1106 = vmatmul.mubr.f32.gmra.mrb[0].mxu0 %v918
      %v1107 = vpop.f32.mrb[0].mxu0
      %v1108 = vadd.f32 %v755, %v1107
      %v1109 = vpop.f32.mrb[0].mxu0
      %1110 = vmatprep.mubr.f32.mxu0 0.0
      %1111 = vmatmul.mubr.f32.gmra.mrb[0].mxu0 %v921
      %v1112 = vpop.f32.mrb[0].mxu0
      %v1113 = vadd.f32 %v760, %v1112
      %v1114 = vpop.f32.mrb[0].mxu0
      %1115 = vmatprep.mubr.f32.mxu0 0.0
      %1116 = vmatmul.mubr.f32.gmra.mrb[0].mxu0 %v924
      %v1117 = vpop.f32.mrb[0].mxu0
      %v1118 = vadd.f32 %v765, %v1117
      %v1119 = vpop.f32.mrb[0].mxu0
      %1120 = vmatprep.mubr.f32.mxu0 0.0
      %1121 = vmatmul.mubr.f32.gmra.mrb[0].mxu0 %v927
      %v1122 = vpop.f32.mrb[0].mxu0
      %v1123 = vadd.f32 %v770, %v1122
      %v1124 = vpop.f32.mrb[0].mxu0
      %1125 = vmatprep.mubr.f32.mxu0 0.0
      %1126 = vmatmul.mubr.f32.gmra.mrb[0].mxu0 %v930
      %v1127 = vpop.f32.mrb[0].mxu0
      %v1128 = vadd.f32 %v775, %v1127
      %v1129 = vpop.f32.mrb[0].mxu0
      %1130 = vmatprep.mubr.f32.mxu0 0.0
      %1131 = vmatmul.mubr.f32.gmra.mrb[0].mxu0 %v933
      %v1132 = vpop.f32.mrb[0].mxu0
      %v1133 = vadd.f32 %v780, %v1132
      %v1134 = vpop.f32.mrb[0].mxu0
      %1135 = vmatprep.mubr.f32.mxu0 0.0
      %1136 = vmatmul.mubr.f32.gmra.mrb[0].mxu0 %v936
      %v1137 = vpop.f32.mrb[0].mxu0
      %v1138 = vadd.f32 %v785, %v1137
      %v1139 = vpop.f32.mrb[0].mxu0
      %1140 = vmatprep.mubr.f32.mxu0 0.0
      %1141 = vmatmul.mubr.f32.gmra.mrb[0].mxu0 %v939
      %v1142 = vpop.f32.mrb[0].mxu0
      %v1143 = vadd.f32 %v790, %v1142
      %v1144 = vpop.f32.mrb[0].mxu0
      %1145 = vmatprep.mubr.f32.mxu0 0.0
      %1146 = vmatmul.mubr.f32.gmra.mrb[0].mxu0 %v942
      %v1147 = vpop.f32.mrb[0].mxu0
      %v1148 = vadd.f32 %v795, %v1147
      %v1149 = vpop.f32.mrb[0].mxu0
      %1150 = vmatprep.mubr.f32.mxu0 0.0
      %1151 = vmatmul.mubr.f32.gmra.mrb[0].mxu0 %v945
      %v1152 = vpop.f32.mrb[0].mxu0
      %v1153 = vadd.f32 %v800, %v1152
      %v1154 = vpop.f32.mrb[0].mxu0
      %1155 = vmatprep.mubr.f32.mxu0 0.0
      %1156 = vmatmul.mubr.f32.gmra.mrb[0].mxu0 %v948
      %v1157 = vpop.f32.mrb[0].mxu0
      %v1158 = vadd.f32 %v805, %v1157
      %v1159 = vpop.f32.mrb[0].mxu0
      %1160 = vmatprep.mubr.f32.mxu0 0.0
      %1161 = vmatmul.mubr.f32.gmra.mrb[0].mxu0 %v951
      %v1162 = vpop.f32.mrb[0].mxu0
      %v1163 = vadd.f32 %v810, %v1162
      %v1164 = vpop.f32.mrb[0].mxu0
      %1165 = vmatprep.mubr.f32.mxu0 0.0
      %1166 = vmatmul.mubr.f32.gmra.mrb[0].mxu0 %v954
      %v1167 = vpop.f32.mrb[0].mxu0
      %v1168 = vadd.f32 %v815, %v1167
      %v1169 = vpop.f32.mrb[0].mxu0
      %1170 = vmatprep.mubr.f32.mxu0 0.0
      %1171 = vmatmul.mubr.f32.gmra.mrb[0].mxu0 %v957
      %v1172 = vpop.f32.mrb[0].mxu0
      %v1173 = vadd.f32 %v820, %v1172
      %v1174 = vpop.f32.mrb[0].mxu0
      %1175 = vmatprep.mubr.f32.mxu0 0.0
      %1176 = vmatmul.mubr.f32.gmra.mrb[0].mxu0 %v960
      %v1177 = vpop.f32.mrb[0].mxu0
      %v1178 = vadd.f32 %v825, %v1177
      %v1179 = vpop.f32.mrb[0].mxu0
      %1180 = vmatprep.mubr.f32.mxu0 0.0
      %1181 = vmatmul.mubr.f32.gmra.mrb[0].mxu0 %v963
      %v1182 = vpop.f32.mrb[0].mxu0
      %v1183 = vadd.f32 %v830, %v1182
      %v1184 = vpop.f32.mrb[0].mxu0
      %1185 = vmatprep.mubr.f32.mxu0 0.0
      %1186 = vmatmul.mubr.f32.gmra.mrb[0].mxu0 %v966
      %v1187 = vpop.f32.mrb[0].mxu0
      %v1188 = vadd.f32 %v835, %v1187
      %v1189 = vpop.f32.mrb[0].mxu0
      %1190 = vmatprep.mubr.f32.mxu0 0.0
      %1191 = vmatmul.mubr.f32.gmra.mrb[0].mxu0 %v969
      %v1192 = vpop.f32.mrb[0].mxu0
      %v1193 = vadd.f32 %v840, %v1192
      %v1194 = vpop.f32.mrb[0].mxu0
      %1195 = vmatprep.mubr.f32.mxu0 0.0
      %1196 = vmatmul.mubr.f32.gmra.mrb[0].mxu0 %v972
      %v1197 = vpop.f32.mrb[0].mxu0
      %v1198 = vadd.f32 %v845, %v1197
      %v1199 = vpop.f32.mrb[0].mxu0
      %1200 = vmatprep.mubr.f32.mxu0 0.0
      %1201 = vmatmul.mubr.f32.gmra.mrb[0].mxu0 %v975
      %v1202 = vpop.f32.mrb[0].mxu0
      %v1203 = vadd.f32 %v850, %v1202
      %v1204 = vpop.f32.mrb[0].mxu0
      %1205 = vmatprep.mubr.f32.mxu0 0.0
      %1206 = vmatmul.mubr.f32.gmra.mrb[0].mxu0 %v978
      %v1207 = vpop.f32.mrb[0].mxu0
      %v1208 = vadd.f32 %v855, %v1207
      %v1209 = vpop.f32.mrb[0].mxu0
      %1210 = vmatprep.mubr.f32.mxu0 0.0
      %1211 = vmatmul.mubr.f32.gmra.mrb[0].mxu0 %v981
      %v1212 = vpop.f32.mrb[0].mxu0
      %v1213 = vadd.f32 %v860, %v1212
      %v1214 = vpop.f32.mrb[0].mxu0
      %1215 = vmatprep.mubr.f32.mxu0 0.0
      %1216 = vmatmul.mubr.f32.gmra.mrb[0].mxu0 %v984
      %v1217 = vpop.f32.mrb[0].mxu0
      %v1218 = vadd.f32 %v865, %v1217
      %v1219 = vpop.f32.mrb[0].mxu0
      %1220 = vmatprep.mubr.f32.mxu0 0.0
      %1221 = vmatmul.mubr.f32.gmra.mrb[0].mxu0 %v987
      %v1222 = vpop.f32.mrb[0].mxu0
      %v1223 = vadd.f32 %v870, %v1222
      %v1224 = vpop.f32.mrb[0].mxu0
      %1225 = vmatprep.mubr.f32.mxu0 0.0
      %1226 = vmatmul.mubr.f32.gmra.mrb[0].mxu0 %v990
      %v1227 = vpop.f32.mrb[0].mxu0
      %v1228 = vadd.f32 %v875, %v1227
      %v1229 = vpop.f32.mrb[0].mxu0
      %1230 = vmatprep.mubr.f32.mxu0 0.0
      %1231 = vmatmul.mubr.f32.gmra.mrb[0].mxu0 %v993
      %v1232 = vpop.f32.mrb[0].mxu0
      %v1233 = vadd.f32 %v880, %v1232
      %v1234 = vpop.f32.mrb[0].mxu0
      %1235 = vmatprep.mubr.f32.mxu0 0.0
      %1236 = vmatmul.mubr.f32.gmra.mrb[0].mxu0 %v996
      %v1237 = vpop.f32.mrb[0].mxu0
      %v1238 = vadd.f32 %v885, %v1237
      %v1239 = vpop.f32.mrb[0].mxu0
      %1240 = vmatprep.mubr.f32.mxu0 0.0
      %1241 = vmatmul.mubr.f32.gmra.mrb[0].mxu0 %v999
      %v1242 = vpop.f32.mrb[0].mxu0
      %v1243 = vadd.f32 %v890, %v1242
      %v1244 = vpop.f32.mrb[0].mxu0
      %1245 = vdwg.mxu0
      %v1246 = vld [vmem:[%s460 + $0x2] sm:$0xff]
      %v1247 = vld [vmem:[%s460 + $0xa] sm:$0xff]
      %v1248 = vld [vmem:[%s460 + $0x12] sm:$0xff]
      %v1249 = vld [vmem:[%s460 + $0x1a] sm:$0xff]
      %v1250 = vld [vmem:[%s460 + $0x22] sm:$0xff]
      %v1251 = vld [vmem:[%s460 + $0x2a] sm:$0xff]
      %v1252 = vld [vmem:[%s460 + $0x32] sm:$0xff]
      %v1253 = vld [vmem:[%s460 + $0x3a] sm:$0xff]
      %v1254 = vld [vmem:[%s460 + $0x42] sm:$0xff]
      %v1255 = vld [vmem:[%s460 + $0x4a] sm:$0xff]
      %v1256 = vld [vmem:[%s460 + $0x52] sm:$0xff]
      %v1257 = vld [vmem:[%s460 + $0x5a] sm:$0xff]
      %v1258 = vld [vmem:[%s460 + $0x62] sm:$0xff]
      %v1259 = vld [vmem:[%s460 + $0x6a] sm:$0xff]
      %v1260 = vld [vmem:[%s460 + $0x72] sm:$0xff]
      %v1261 = vld [vmem:[%s460 + $0x7a] sm:$0xff]
      %v1262 = vld [vmem:[%s460 + $0x82] sm:$0xff]
      %v1263 = vld [vmem:[%s460 + $0x8a] sm:$0xff]
      %v1264 = vld [vmem:[%s460 + $0x92] sm:$0xff]
      %v1265 = vld [vmem:[%s460 + $0x9a] sm:$0xff]
      %v1266 = vld [vmem:[%s460 + $0xa2] sm:$0xff]
      %v1267 = vld [vmem:[%s460 + $0xaa] sm:$0xff]
      %v1268 = vld [vmem:[%s460 + $0xb2] sm:$0xff]
      %v1269 = vld [vmem:[%s460 + $0xba] sm:$0xff]
      %v1270 = vld [vmem:[%s460 + $0xc2] sm:$0xff]
      %v1271 = vld [vmem:[%s460 + $0xca] sm:$0xff]
      %v1272 = vld [vmem:[%s460 + $0xd2] sm:$0xff]
      %v1273 = vld [vmem:[%s460 + $0xda] sm:$0xff]
      %v1274 = vld [vmem:[%s460 + $0xe2] sm:$0xff]
      %v1275 = vld [vmem:[%s460 + $0xea] sm:$0xff]
      %v1276 = vld [vmem:[%s460 + $0xf2] sm:$0xff]
      %v1277 = vld [vmem:[%s460 + $0xfa] sm:$0xff]
      %v1278 = vld [vmem:[%s460 + $0x102] sm:$0xff]
      %v1279 = vld [vmem:[%s460 + $0x10a] sm:$0xff]
      %v1280 = vld [vmem:[%s460 + $0x112] sm:$0xff]
      %v1281 = vld [vmem:[%s460 + $0x11a] sm:$0xff]
      %s1282 = scalar_lea.vmem %s1, 16
      %v1283 = vld [vmem:[%s1282] sm:$0xff]
      %v1285 = vsel %vm539, %v1246, 0
      %v1288 = vsel %vm539, %v1247, 0
      %v1291 = vsel %vm539, %v1248, 0
      %v1294 = vsel %vm539, %v1249, 0
      %v1297 = vsel %vm539, %v1250, 0
      %v1300 = vsel %vm539, %v1251, 0
      %v1303 = vsel %vm539, %v1252, 0
      %v1306 = vsel %vm539, %v1253, 0
      %v1309 = vsel %vm539, %v1254, 0
      %v1312 = vsel %vm539, %v1255, 0
      %v1315 = vsel %vm539, %v1256, 0
      %v1318 = vsel %vm539, %v1257, 0
      %v1321 = vsel %vm539, %v1258, 0
      %v1324 = vsel %vm539, %v1259, 0
      %v1327 = vsel %vm539, %v1260, 0
      %v1330 = vsel %vm539, %v1261, 0
      %v1333 = vsel %vm539, %v1262, 0
      %v1336 = vsel %vm539, %v1263, 0
      %v1339 = vsel %vm539, %v1264, 0
      %v1342 = vsel %vm539, %v1265, 0
      %v1345 = vsel %vm539, %v1266, 0
      %v1348 = vsel %vm539, %v1267, 0
      %v1351 = vsel %vm539, %v1268, 0
      %v1354 = vsel %vm539, %v1269, 0
      %v1357 = vsel %vm539, %v1270, 0
      %v1360 = vsel %vm539, %v1271, 0
      %v1363 = vsel %vm539, %v1272, 0
      %v1366 = vsel %vm539, %v1273, 0
      %v1369 = vsel %vm539, %v1274, 0
      %v1372 = vsel %vm539, %v1275, 0
      %v1375 = vsel %vm539, %v1276, 0
      %v1378 = vsel %vm539, %v1277, 0
      %v1381 = vsel %vm539, %v1278, 0
      %v1384 = vsel %vm539, %v1279, 0
      %v1387 = vsel %vm539, %v1280, 0
      %v1390 = vsel %vm539, %v1281, 0
      %1392 = vmatprep.subr.mxu0 0.0
      %1393 = vmatpush1.msra.mxu0 %v1283
      %1394 = vmatprep.subr.mxu0 0.0
      %1395 = vmatpush1.msra.mxu0 0.0
      %1396 = vmatprep.subr.mxu0 0.0
      %1397 = vmatpush1.msra.mxu0 0.0
      %1398 = vmatprep.subr.mxu0 0.0
      %1399 = vmatpush1.msra.mxu0 0.0
      %1400 = vmatprep.subr.mxu0 0.0
      %1401 = vmatpush1.msra.mxu0 0.0
      %1402 = vmatprep.subr.mxu0 0.0
      %1403 = vmatpush1.msra.mxu0 0.0
      %1404 = vmatprep.subr.mxu0 0.0
      %1405 = vmatpush1.msra.mxu0 0.0
      %1406 = vmatprep.subr.mxu0 0.0
      %1407 = vmatpush1.msra.mxu0 0.0
      %1408 = vmatprep.subr.mxu0 0.0
      %1409 = vmatpush1.msra.mxu0 0.0
      %1410 = vmatprep.subr.mxu0 0.0
      %1411 = vmatpush1.msra.mxu0 0.0
      %1412 = vmatprep.subr.mxu0 0.0
      %1413 = vmatpush1.msra.mxu0 0.0
      %1414 = vmatprep.subr.mxu0 0.0
      %1415 = vmatpush1.msra.mxu0 0.0
      %1416 = vmatprep.subr.mxu0 0.0
      %1417 = vmatpush1.msra.mxu0 0.0
      %1418 = vmatprep.subr.mxu0 0.0
      %1419 = vmatpush1.msra.mxu0 0.0
      %1420 = vmatprep.subr.mxu0 0.0
      %1421 = vmatpush1.msra.mxu0 0.0
      %1422 = vmatprep.subr.mxu0 0.0
      %1423 = vmatpush1.msra.mxu0 0.0
      %1424 = vmatprep.subr.mxu0 0.0
      %1425 = vmatpush1.msra.mxu0 0.0
      %1426 = vmatprep.subr.mxu0 0.0
      %1427 = vmatpush1.msra.mxu0 0.0
      %1428 = vmatprep.subr.mxu0 0.0
      %1429 = vmatpush1.msra.mxu0 0.0
      %1430 = vmatprep.subr.mxu0 0.0
      %1431 = vmatpush1.msra.mxu0 0.0
      %1432 = vmatprep.subr.mxu0 0.0
      %1433 = vmatpush1.msra.mxu0 0.0
      %1434 = vmatprep.subr.mxu0 0.0
      %1435 = vmatpush1.msra.mxu0 0.0
      %1436 = vmatprep.subr.mxu0 0.0
      %1437 = vmatpush1.msra.mxu0 0.0
      %1438 = vmatprep.subr.mxu0 0.0
      %1439 = vmatpush1.msra.mxu0 0.0
      %1440 = vmatprep.subr.mxu0 0.0
      %1441 = vmatpush1.msra.mxu0 0.0
      %1442 = vmatprep.subr.mxu0 0.0
      %1443 = vmatpush1.msra.mxu0 0.0
      %1444 = vmatprep.subr.mxu0 0.0
      %1445 = vmatpush1.msra.mxu0 0.0
      %1446 = vmatprep.subr.mxu0 0.0
      %1447 = vmatpush1.msra.mxu0 0.0
      %1448 = vmatprep.subr.mxu0 0.0
      %1449 = vmatpush1.msra.mxu0 0.0
      %1450 = vmatprep.subr.mxu0 0.0
      %1451 = vmatpush1.msra.mxu0 0.0
      %1452 = vmatprep.subr.mxu0 0.0
      %1453 = vmatpush1.msra.mxu0 0.0
      %1454 = vmatprep.subr.mxu0 0.0
      %1455 = vmatpush1.msra.mxu0 0.0
      %1456 = vmatprep.mubr.f32.mxu0 0.0
      %1457 = vmatmul.mubr.f32.gmra.mrb[0].mxu0 %v1285
      %v1458 = vpop.f32.mrb[0].mxu0
      %v1459 = vadd.f32 0.0, %v1458
      %v1460 = vpop.f32.mrb[0].mxu0
      %1461 = vmatprep.mubr.f32.mxu0 0.0
      %1462 = vmatmul.mubr.f32.gmra.mrb[0].mxu0 %v1288
      %v1463 = vpop.f32.mrb[0].mxu0
      %v1464 = vadd.f32 0.0, %v1463
      %v1465 = vpop.f32.mrb[0].mxu0
      %1466 = vmatprep.mubr.f32.mxu0 0.0
      %1467 = vmatmul.mubr.f32.gmra.mrb[0].mxu0 %v1291
      %v1468 = vpop.f32.mrb[0].mxu0
      %v1469 = vadd.f32 0.0, %v1468
      %v1470 = vpop.f32.mrb[0].mxu0
      %1471 = vmatprep.mubr.f32.mxu0 0.0
      %1472 = vmatmul.mubr.f32.gmra.mrb[0].mxu0 %v1294
      %v1473 = vpop.f32.mrb[0].mxu0
      %v1474 = vadd.f32 0.0, %v1473
      %v1475 = vpop.f32.mrb[0].mxu0
      %1476 = vmatprep.mubr.f32.mxu0 0.0
      %1477 = vmatmul.mubr.f32.gmra.mrb[0].mxu0 %v1297
      %v1478 = vpop.f32.mrb[0].mxu0
      %v1479 = vadd.f32 0.0, %v1478
      %v1480 = vpop.f32.mrb[0].mxu0
      %1481 = vmatprep.mubr.f32.mxu0 0.0
      %1482 = vmatmul.mubr.f32.gmra.mrb[0].mxu0 %v1300
      %v1483 = vpop.f32.mrb[0].mxu0
      %v1484 = vadd.f32 0.0, %v1483
      %v1485 = vpop.f32.mrb[0].mxu0
      %1486 = vmatprep.mubr.f32.mxu0 0.0
      %1487 = vmatmul.mubr.f32.gmra.mrb[0].mxu0 %v1303
      %v1488 = vpop.f32.mrb[0].mxu0
      %v1489 = vadd.f32 0.0, %v1488
      %v1490 = vpop.f32.mrb[0].mxu0
      %1491 = vmatprep.mubr.f32.mxu0 0.0
      %1492 = vmatmul.mubr.f32.gmra.mrb[0].mxu0 %v1306
      %v1493 = vpop.f32.mrb[0].mxu0
      %v1494 = vadd.f32 0.0, %v1493
      %v1495 = vpop.f32.mrb[0].mxu0
      %1496 = vmatprep.mubr.f32.mxu0 0.0
      %1497 = vmatmul.mubr.f32.gmra.mrb[0].mxu0 %v1309
      %v1498 = vpop.f32.mrb[0].mxu0
      %v1499 = vadd.f32 0.0, %v1498
      %v1500 = vpop.f32.mrb[0].mxu0
      %1501 = vmatprep.mubr.f32.mxu0 0.0
      %1502 = vmatmul.mubr.f32.gmra.mrb[0].mxu0 %v1312
      %v1503 = vpop.f32.mrb[0].mxu0
      %v1504 = vadd.f32 0.0, %v1503
      %v1505 = vpop.f32.mrb[0].mxu0
      %1506 = vmatprep.mubr.f32.mxu0 0.0
      %1507 = vmatmul.mubr.f32.gmra.mrb[0].mxu0 %v1315
      %v1508 = vpop.f32.mrb[0].mxu0
      %v1509 = vadd.f32 0.0, %v1508
      %v1510 = vpop.f32.mrb[0].mxu0
      %1511 = vmatprep.mubr.f32.mxu0 0.0
      %1512 = vmatmul.mubr.f32.gmra.mrb[0].mxu0 %v1318
      %v1513 = vpop.f32.mrb[0].mxu0
      %v1514 = vadd.f32 0.0, %v1513
      %v1515 = vpop.f32.mrb[0].mxu0
      %1516 = vmatprep.mubr.f32.mxu0 0.0
      %1517 = vmatmul.mubr.f32.gmra.mrb[0].mxu0 %v1321
      %v1518 = vpop.f32.mrb[0].mxu0
      %v1519 = vadd.f32 0.0, %v1518
      %v1520 = vpop.f32.mrb[0].mxu0
      %1521 = vmatprep.mubr.f32.mxu0 0.0
      %1522 = vmatmul.mubr.f32.gmra.mrb[0].mxu0 %v1324
      %v1523 = vpop.f32.mrb[0].mxu0
      %v1524 = vadd.f32 0.0, %v1523
      %v1525 = vpop.f32.mrb[0].mxu0
      %1526 = vmatprep.mubr.f32.mxu0 0.0
      %1527 = vmatmul.mubr.f32.gmra.mrb[0].mxu0 %v1327
      %v1528 = vpop.f32.mrb[0].mxu0
      %v1529 = vadd.f32 0.0, %v1528
      %v1530 = vpop.f32.mrb[0].mxu0
      %1531 = vmatprep.mubr.f32.mxu0 0.0
      %1532 = vmatmul.mubr.f32.gmra.mrb[0].mxu0 %v1330
      %v1533 = vpop.f32.mrb[0].mxu0
      %v1534 = vadd.f32 0.0, %v1533
      %v1535 = vpop.f32.mrb[0].mxu0
      %1536 = vmatprep.mubr.f32.mxu0 0.0
      %1537 = vmatmul.mubr.f32.gmra.mrb[0].mxu0 %v1333
      %v1538 = vpop.f32.mrb[0].mxu0
      %v1539 = vadd.f32 0.0, %v1538
      %v1540 = vpop.f32.mrb[0].mxu0
      %1541 = vmatprep.mubr.f32.mxu0 0.0
      %1542 = vmatmul.mubr.f32.gmra.mrb[0].mxu0 %v1336
      %v1543 = vpop.f32.mrb[0].mxu0
      %v1544 = vadd.f32 0.0, %v1543
      %v1545 = vpop.f32.mrb[0].mxu0
      %1546 = vmatprep.mubr.f32.mxu0 0.0
      %1547 = vmatmul.mubr.f32.gmra.mrb[0].mxu0 %v1339
      %v1548 = vpop.f32.mrb[0].mxu0
      %v1549 = vadd.f32 0.0, %v1548
      %v1550 = vpop.f32.mrb[0].mxu0
      %1551 = vmatprep.mubr.f32.mxu0 0.0
      %1552 = vmatmul.mubr.f32.gmra.mrb[0].mxu0 %v1342
      %v1553 = vpop.f32.mrb[0].mxu0
      %v1554 = vadd.f32 0.0, %v1553
      %v1555 = vpop.f32.mrb[0].mxu0
      %1556 = vmatprep.mubr.f32.mxu0 0.0
      %1557 = vmatmul.mubr.f32.gmra.mrb[0].mxu0 %v1345
      %v1558 = vpop.f32.mrb[0].mxu0
      %v1559 = vadd.f32 0.0, %v1558
      %v1560 = vpop.f32.mrb[0].mxu0
      %1561 = vmatprep.mubr.f32.mxu0 0.0
      %1562 = vmatmul.mubr.f32.gmra.mrb[0].mxu0 %v1348
      %v1563 = vpop.f32.mrb[0].mxu0
      %v1564 = vadd.f32 0.0, %v1563
      %v1565 = vpop.f32.mrb[0].mxu0
      %1566 = vmatprep.mubr.f32.mxu0 0.0
      %1567 = vmatmul.mubr.f32.gmra.mrb[0].mxu0 %v1351
      %v1568 = vpop.f32.mrb[0].mxu0
      %v1569 = vadd.f32 0.0, %v1568
      %v1570 = vpop.f32.mrb[0].mxu0
      %1571 = vmatprep.mubr.f32.mxu0 0.0
      %1572 = vmatmul.mubr.f32.gmra.mrb[0].mxu0 %v1354
      %v1573 = vpop.f32.mrb[0].mxu0
      %v1574 = vadd.f32 0.0, %v1573
      %v1575 = vpop.f32.mrb[0].mxu0
      %1576 = vmatprep.mubr.f32.mxu0 0.0
      %1577 = vmatmul.mubr.f32.gmra.mrb[0].mxu0 %v1357
      %v1578 = vpop.f32.mrb[0].mxu0
      %v1579 = vadd.f32 0.0, %v1578
      %v1580 = vpop.f32.mrb[0].mxu0
      %1581 = vmatprep.mubr.f32.mxu0 0.0
      %1582 = vmatmul.mubr.f32.gmra.mrb[0].mxu0 %v1360
      %v1583 = vpop.f32.mrb[0].mxu0
      %v1584 = vadd.f32 0.0, %v1583
      %v1585 = vpop.f32.mrb[0].mxu0
      %1586 = vmatprep.mubr.f32.mxu0 0.0
      %1587 = vmatmul.mubr.f32.gmra.mrb[0].mxu0 %v1363
      %v1588 = vpop.f32.mrb[0].mxu0
      %v1589 = vadd.f32 0.0, %v1588
      %v1590 = vpop.f32.mrb[0].mxu0
      %1591 = vmatprep.mubr.f32.mxu0 0.0
      %1592 = vmatmul.mubr.f32.gmra.mrb[0].mxu0 %v1366
      %v1593 = vpop.f32.mrb[0].mxu0
      %v1594 = vadd.f32 0.0, %v1593
      %v1595 = vpop.f32.mrb[0].mxu0
      %1596 = vmatprep.mubr.f32.mxu0 0.0
      %1597 = vmatmul.mubr.f32.gmra.mrb[0].mxu0 %v1369
      %v1598 = vpop.f32.mrb[0].mxu0
      %v1599 = vadd.f32 0.0, %v1598
      %v1600 = vpop.f32.mrb[0].mxu0
      %1601 = vmatprep.mubr.f32.mxu0 0.0
      %1602 = vmatmul.mubr.f32.gmra.mrb[0].mxu0 %v1372
      %v1603 = vpop.f32.mrb[0].mxu0
      %v1604 = vadd.f32 0.0, %v1603
      %v1605 = vpop.f32.mrb[0].mxu0
      %1606 = vmatprep.mubr.f32.mxu0 0.0
      %1607 = vmatmul.mubr.f32.gmra.mrb[0].mxu0 %v1375
      %v1608 = vpop.f32.mrb[0].mxu0
      %v1609 = vadd.f32 0.0, %v1608
      %v1610 = vpop.f32.mrb[0].mxu0
      %1611 = vmatprep.mubr.f32.mxu0 0.0
      %1612 = vmatmul.mubr.f32.gmra.mrb[0].mxu0 %v1378
      %v1613 = vpop.f32.mrb[0].mxu0
      %v1614 = vadd.f32 0.0, %v1613
      %v1615 = vpop.f32.mrb[0].mxu0
      %1616 = vmatprep.mubr.f32.mxu0 0.0
      %1617 = vmatmul.mubr.f32.gmra.mrb[0].mxu0 %v1381
      %v1618 = vpop.f32.mrb[0].mxu0
      %v1619 = vadd.f32 0.0, %v1618
      %v1620 = vpop.f32.mrb[0].mxu0
      %1621 = vmatprep.mubr.f32.mxu0 0.0
      %1622 = vmatmul.mubr.f32.gmra.mrb[0].mxu0 %v1384
      %v1623 = vpop.f32.mrb[0].mxu0
      %v1624 = vadd.f32 0.0, %v1623
      %v1625 = vpop.f32.mrb[0].mxu0
      %1626 = vmatprep.mubr.f32.mxu0 0.0
      %1627 = vmatmul.mubr.f32.gmra.mrb[0].mxu0 %v1387
      %v1628 = vpop.f32.mrb[0].mxu0
      %v1629 = vadd.f32 0.0, %v1628
      %v1630 = vpop.f32.mrb[0].mxu0
      %1631 = vmatprep.mubr.f32.mxu0 0.0
      %1632 = vmatmul.mubr.f32.gmra.mrb[0].mxu0 %v1390
      %v1633 = vpop.f32.mrb[0].mxu0
      %v1634 = vadd.f32 0.0, %v1633
      %v1635 = vpop.f32.mrb[0].mxu0
      %1636 = vdwg.mxu0
      %v1637 = vadd.f32 %v1068, %v1459
      %v1638 = vadd.f32 %v1073, %v1464
      %v1639 = vadd.f32 %v1078, %v1469
      %v1640 = vadd.f32 %v1083, %v1474
      %v1641 = vadd.f32 %v1088, %v1479
      %v1642 = vadd.f32 %v1093, %v1484
      %v1643 = vadd.f32 %v1098, %v1489
      %v1644 = vadd.f32 %v1103, %v1494
      %v1645 = vadd.f32 %v1108, %v1499
      %v1646 = vadd.f32 %v1113, %v1504
      %v1647 = vadd.f32 %v1118, %v1509
      %v1648 = vadd.f32 %v1123, %v1514
      %v1649 = vadd.f32 %v1128, %v1519
      %v1650 = vadd.f32 %v1133, %v1524
      %v1651 = vadd.f32 %v1138, %v1529
      %v1652 = vadd.f32 %v1143, %v1534
      %v1653 = vadd.f32 %v1148, %v1539
      %v1654 = vadd.f32 %v1153, %v1544
      %v1655 = vadd.f32 %v1158, %v1549
      %v1656 = vadd.f32 %v1163, %v1554
      %v1657 = vadd.f32 %v1168, %v1559
      %v1658 = vadd.f32 %v1173, %v1564
      %v1659 = vadd.f32 %v1178, %v1569
      %v1660 = vadd.f32 %v1183, %v1574
      %v1661 = vadd.f32 %v1188, %v1579
      %v1662 = vadd.f32 %v1193, %v1584
      %v1663 = vadd.f32 %v1198, %v1589
      %v1664 = vadd.f32 %v1203, %v1594
      %v1665 = vadd.f32 %v1208, %v1599
      %v1666 = vadd.f32 %v1213, %v1604
      %v1667 = vadd.f32 %v1218, %v1609
      %v1668 = vadd.f32 %v1223, %v1614
      %v1669 = vadd.f32 %v1228, %v1619
      %v1670 = vadd.f32 %v1233, %v1624
      %v1671 = vadd.f32 %v1238, %v1629
      %v1672 = vadd.f32 %v1243, %v1634
      %v1673 = vld [vmem:[%s460 + $0x12] sm:$0xff]
      %v1674 = vld [vmem:[%s460 + $0x1a] sm:$0xff]
      %v1675 = vld [vmem:[%s460 + $0x22] sm:$0xff]
      %v1676 = vld [vmem:[%s460 + $0x2a] sm:$0xff]
      %v1677 = vld [vmem:[%s460 + $0x32] sm:$0xff]
      %v1678 = vld [vmem:[%s460 + $0x3a] sm:$0xff]
      %v1679 = vld [vmem:[%s460 + $0x42] sm:$0xff]
      %v1680 = vld [vmem:[%s460 + $0x4a] sm:$0xff]
      %v1681 = vld [vmem:[%s460 + $0x52] sm:$0xff]
      %v1682 = vld [vmem:[%s460 + $0x5a] sm:$0xff]
      %v1683 = vld [vmem:[%s460 + $0x62] sm:$0xff]
      %v1684 = vld [vmem:[%s460 + $0x6a] sm:$0xff]
      %v1685 = vld [vmem:[%s460 + $0x72] sm:$0xff]
      %v1686 = vld [vmem:[%s460 + $0x7a] sm:$0xff]
      %v1687 = vld [vmem:[%s460 + $0x82] sm:$0xff]
      %v1688 = vld [vmem:[%s460 + $0x8a] sm:$0xff]
      %v1689 = vld [vmem:[%s460 + $0x92] sm:$0xff]
      %v1690 = vld [vmem:[%s460 + $0x9a] sm:$0xff]
      %v1691 = vld [vmem:[%s460 + $0xa2] sm:$0xff]
      %v1692 = vld [vmem:[%s460 + $0xaa] sm:$0xff]
      %v1693 = vld [vmem:[%s460 + $0xb2] sm:$0xff]
      %v1694 = vld [vmem:[%s460 + $0xba] sm:$0xff]
      %v1695 = vld [vmem:[%s460 + $0xc2] sm:$0xff]
      %v1696 = vld [vmem:[%s460 + $0xca] sm:$0xff]
      %v1697 = vld [vmem:[%s460 + $0xd2] sm:$0xff]
      %v1698 = vld [vmem:[%s460 + $0xda] sm:$0xff]
      %v1699 = vld [vmem:[%s460 + $0xe2] sm:$0xff]
      %v1700 = vld [vmem:[%s460 + $0xea] sm:$0xff]
      %v1701 = vld [vmem:[%s460 + $0xf2] sm:$0xff]
      %v1702 = vld [vmem:[%s460 + $0xfa] sm:$0xff]
      %v1703 = vld [vmem:[%s460 + $0x102] sm:$0xff]
      %v1704 = vld [vmem:[%s460 + $0x10a] sm:$0xff]
      %v1705 = vld [vmem:[%s460 + $0x112] sm:$0xff]
      %v1706 = vld [vmem:[%s460 + $0x11a] sm:$0xff]
      %v1707 = vld [vmem:[%s460 + $0x122] sm:$0xff]
      %v1708 = vld [vmem:[%s460 + $0x12a] sm:$0xff]
      %s1709 = scalar_lea.vmem %s1, 24
      %v1710 = vld [vmem:[%s1709] sm:$0xff]
      %v1712 = vsel %vm539, %v1673, 0
      %v1715 = vsel %vm539, %v1674, 0
      %v1718 = vsel %vm539, %v1675, 0
      %v1721 = vsel %vm539, %v1676, 0
      %v1724 = vsel %vm539, %v1677, 0
      %v1727 = vsel %vm539, %v1678, 0
      %v1730 = vsel %vm539, %v1679, 0
      %v1733 = vsel %vm539, %v1680, 0
      %v1736 = vsel %vm539, %v1681, 0
      %v1739 = vsel %vm539, %v1682, 0
      %v1742 = vsel %vm539, %v1683, 0
      %v1745 = vsel %vm539, %v1684, 0
      %v1748 = vsel %vm539, %v1685, 0
      %v1751 = vsel %vm539, %v1686, 0
      %v1754 = vsel %vm539, %v1687, 0
      %v1757 = vsel %vm539, %v1688, 0
      %v1760 = vsel %vm539, %v1689, 0
      %v1763 = vsel %vm539, %v1690, 0
      %v1766 = vsel %vm539, %v1691, 0
      %v1769 = vsel %vm539, %v1692, 0
      %v1772 = vsel %vm539, %v1693, 0
      %v1775 = vsel %vm539, %v1694, 0
      %v1778 = vsel %vm539, %v1695, 0
      %v1781 = vsel %vm539, %v1696, 0
      %v1784 = vsel %vm539, %v1697, 0
      %v1787 = vsel %vm539, %v1698, 0
      %v1790 = vsel %vm539, %v1699, 0
      %v1793 = vsel %vm539, %v1700, 0
      %v1796 = vsel %vm539, %v1701, 0
      %v1799 = vsel %vm539, %v1702, 0
      %v1802 = vsel %vm539, %v1703, 0
      %v1805 = vsel %vm539, %v1704, 0
      %v1808 = vsel %vm539, %v1705, 0
      %v1811 = vsel %vm539, %v1706, 0
      %v1814 = vsel %vm539, %v1707, 0
      %v1817 = vsel %vm539, %v1708, 0
      %1819 = vmatprep.subr.mxu0 0.0
      %1820 = vmatpush1.msra.mxu0 %v1710
      %1821 = vmatprep.subr.mxu0 0.0
      %1822 = vmatpush1.msra.mxu0 0.0
      %1823 = vmatprep.subr.mxu0 0.0
      %1824 = vmatpush1.msra.mxu0 0.0
      %1825 = vmatprep.subr.mxu0 0.0
      %1826 = vmatpush1.msra.mxu0 0.0
      %1827 = vmatprep.subr.mxu0 0.0
      %1828 = vmatpush1.msra.mxu0 0.0
      %1829 = vmatprep.subr.mxu0 0.0
      %1830 = vmatpush1.msra.mxu0 0.0
      %1831 = vmatprep.subr.mxu0 0.0
      %1832 = vmatpush1.msra.mxu0 0.0
      %1833 = vmatprep.subr.mxu0 0.0
      %1834 = vmatpush1.msra.mxu0 0.0
      %1835 = vmatprep.subr.mxu0 0.0
      %1836 = vmatpush1.msra.mxu0 0.0
      %1837 = vmatprep.subr.mxu0 0.0
      %1838 = vmatpush1.msra.mxu0 0.0
      %1839 = vmatprep.subr.mxu0 0.0
      %1840 = vmatpush1.msra.mxu0 0.0
      %1841 = vmatprep.subr.mxu0 0.0
      %1842 = vmatpush1.msra.mxu0 0.0
      %1843 = vmatprep.subr.mxu0 0.0
      %1844 = vmatpush1.msra.mxu0 0.0
      %1845 = vmatprep.subr.mxu0 0.0
      %1846 = vmatpush1.msra.mxu0 0.0
      %1847 = vmatprep.subr.mxu0 0.0
      %1848 = vmatpush1.msra.mxu0 0.0
      %1849 = vmatprep.subr.mxu0 0.0
      %1850 = vmatpush1.msra.mxu0 0.0
      %1851 = vmatprep.subr.mxu0 0.0
      %1852 = vmatpush1.msra.mxu0 0.0
      %1853 = vmatprep.subr.mxu0 0.0
      %1854 = vmatpush1.msra.mxu0 0.0
      %1855 = vmatprep.subr.mxu0 0.0
      %1856 = vmatpush1.msra.mxu0 0.0
      %1857 = vmatprep.subr.mxu0 0.0
      %1858 = vmatpush1.msra.mxu0 0.0
      %1859 = vmatprep.subr.mxu0 0.0
      %1860 = vmatpush1.msra.mxu0 0.0
      %1861 = vmatprep.subr.mxu0 0.0
      %1862 = vmatpush1.msra.mxu0 0.0
      %1863 = vmatprep.subr.mxu0 0.0
      %1864 = vmatpush1.msra.mxu0 0.0
      %1865 = vmatprep.subr.mxu0 0.0
      %1866 = vmatpush1.msra.mxu0 0.0
      %1867 = vmatprep.subr.mxu0 0.0
      %1868 = vmatpush1.msra.mxu0 0.0
      %1869 = vmatprep.subr.mxu0 0.0
      %1870 = vmatpush1.msra.mxu0 0.0
      %1871 = vmatprep.subr.mxu0 0.0
      %1872 = vmatpush1.msra.mxu0 0.0
      %1873 = vmatprep.subr.mxu0 0.0
      %1874 = vmatpush1.msra.mxu0 0.0
      %1875 = vmatprep.subr.mxu0 0.0
      %1876 = vmatpush1.msra.mxu0 0.0
      %1877 = vmatprep.subr.mxu0 0.0
      %1878 = vmatpush1.msra.mxu0 0.0
      %1879 = vmatprep.subr.mxu0 0.0
      %1880 = vmatpush1.msra.mxu0 0.0
      %1881 = vmatprep.subr.mxu0 0.0
      %1882 = vmatpush1.msra.mxu0 0.0
      %1883 = vmatprep.mubr.f32.mxu0 0.0
      %1884 = vmatmul.mubr.f32.gmra.mrb[0].mxu0 %v1712
      %v1885 = vpop.f32.mrb[0].mxu0
      %v1886 = vadd.f32 0.0, %v1885
      %v1887 = vpop.f32.mrb[0].mxu0
      %1888 = vmatprep.mubr.f32.mxu0 0.0
      %1889 = vmatmul.mubr.f32.gmra.mrb[0].mxu0 %v1715
      %v1890 = vpop.f32.mrb[0].mxu0
      %v1891 = vadd.f32 0.0, %v1890
      %v1892 = vpop.f32.mrb[0].mxu0
      %1893 = vmatprep.mubr.f32.mxu0 0.0
      %1894 = vmatmul.mubr.f32.gmra.mrb[0].mxu0 %v1718
      %v1895 = vpop.f32.mrb[0].mxu0
      %v1896 = vadd.f32 0.0, %v1895
      %v1897 = vpop.f32.mrb[0].mxu0
      %1898 = vmatprep.mubr.f32.mxu0 0.0
      %1899 = vmatmul.mubr.f32.gmra.mrb[0].mxu0 %v1721
      %v1900 = vpop.f32.mrb[0].mxu0
      %v1901 = vadd.f32 0.0, %v1900
      %v1902 = vpop.f32.mrb[0].mxu0
      %1903 = vmatprep.mubr.f32.mxu0 0.0
      %1904 = vmatmul.mubr.f32.gmra.mrb[0].mxu0 %v1724
      %v1905 = vpop.f32.mrb[0].mxu0
      %v1906 = vadd.f32 0.0, %v1905
      %v1907 = vpop.f32.mrb[0].mxu0
      %1908 = vmatprep.mubr.f32.mxu0 0.0
      %1909 = vmatmul.mubr.f32.gmra.mrb[0].mxu0 %v1727
      %v1910 = vpop.f32.mrb[0].mxu0
      %v1911 = vadd.f32 0.0, %v1910
      %v1912 = vpop.f32.mrb[0].mxu0
      %1913 = vmatprep.mubr.f32.mxu0 0.0
      %1914 = vmatmul.mubr.f32.gmra.mrb[0].mxu0 %v1730
      %v1915 = vpop.f32.mrb[0].mxu0
      %v1916 = vadd.f32 0.0, %v1915
      %v1917 = vpop.f32.mrb[0].mxu0
      %1918 = vmatprep.mubr.f32.mxu0 0.0
      %1919 = vmatmul.mubr.f32.gmra.mrb[0].mxu0 %v1733
      %v1920 = vpop.f32.mrb[0].mxu0
      %v1921 = vadd.f32 0.0, %v1920
      %v1922 = vpop.f32.mrb[0].mxu0
      %1923 = vmatprep.mubr.f32.mxu0 0.0
      %1924 = vmatmul.mubr.f32.gmra.mrb[0].mxu0 %v1736
      %v1925 = vpop.f32.mrb[0].mxu0
      %v1926 = vadd.f32 0.0, %v1925
      %v1927 = vpop.f32.mrb[0].mxu0
      %1928 = vmatprep.mubr.f32.mxu0 0.0
      %1929 = vmatmul.mubr.f32.gmra.mrb[0].mxu0 %v1739
      %v1930 = vpop.f32.mrb[0].mxu0
      %v1931 = vadd.f32 0.0, %v1930
      %v1932 = vpop.f32.mrb[0].mxu0
      %1933 = vmatprep.mubr.f32.mxu0 0.0
      %1934 = vmatmul.mubr.f32.gmra.mrb[0].mxu0 %v1742
      %v1935 = vpop.f32.mrb[0].mxu0
      %v1936 = vadd.f32 0.0, %v1935
      %v1937 = vpop.f32.mrb[0].mxu0
      %1938 = vmatprep.mubr.f32.mxu0 0.0
      %1939 = vmatmul.mubr.f32.gmra.mrb[0].mxu0 %v1745
      %v1940 = vpop.f32.mrb[0].mxu0
      %v1941 = vadd.f32 0.0, %v1940
      %v1942 = vpop.f32.mrb[0].mxu0
      %1943 = vmatprep.mubr.f32.mxu0 0.0
      %1944 = vmatmul.mubr.f32.gmra.mrb[0].mxu0 %v1748
      %v1945 = vpop.f32.mrb[0].mxu0
      %v1946 = vadd.f32 0.0, %v1945
      %v1947 = vpop.f32.mrb[0].mxu0
      %1948 = vmatprep.mubr.f32.mxu0 0.0
      %1949 = vmatmul.mubr.f32.gmra.mrb[0].mxu0 %v1751
      %v1950 = vpop.f32.mrb[0].mxu0
      %v1951 = vadd.f32 0.0, %v1950
      %v1952 = vpop.f32.mrb[0].mxu0
      %1953 = vmatprep.mubr.f32.mxu0 0.0
      %1954 = vmatmul.mubr.f32.gmra.mrb[0].mxu0 %v1754
      %v1955 = vpop.f32.mrb[0].mxu0
      %v1956 = vadd.f32 0.0, %v1955
      %v1957 = vpop.f32.mrb[0].mxu0
      %1958 = vmatprep.mubr.f32.mxu0 0.0
      %1959 = vmatmul.mubr.f32.gmra.mrb[0].mxu0 %v1757
      %v1960 = vpop.f32.mrb[0].mxu0
      %v1961 = vadd.f32 0.0, %v1960
      %v1962 = vpop.f32.mrb[0].mxu0
      %1963 = vmatprep.mubr.f32.mxu0 0.0
      %1964 = vmatmul.mubr.f32.gmra.mrb[0].mxu0 %v1760
      %v1965 = vpop.f32.mrb[0].mxu0
      %v1966 = vadd.f32 0.0, %v1965
      %v1967 = vpop.f32.mrb[0].mxu0
      %1968 = vmatprep.mubr.f32.mxu0 0.0
      %1969 = vmatmul.mubr.f32.gmra.mrb[0].mxu0 %v1763
      %v1970 = vpop.f32.mrb[0].mxu0
      %v1971 = vadd.f32 0.0, %v1970
      %v1972 = vpop.f32.mrb[0].mxu0
      %1973 = vmatprep.mubr.f32.mxu0 0.0
      %1974 = vmatmul.mubr.f32.gmra.mrb[0].mxu0 %v1766
      %v1975 = vpop.f32.mrb[0].mxu0
      %v1976 = vadd.f32 0.0, %v1975
      %v1977 = vpop.f32.mrb[0].mxu0
      %1978 = vmatprep.mubr.f32.mxu0 0.0
      %1979 = vmatmul.mubr.f32.gmra.mrb[0].mxu0 %v1769
      %v1980 = vpop.f32.mrb[0].mxu0
      %v1981 = vadd.f32 0.0, %v1980
      %v1982 = vpop.f32.mrb[0].mxu0
      %1983 = vmatprep.mubr.f32.mxu0 0.0
      %1984 = vmatmul.mubr.f32.gmra.mrb[0].mxu0 %v1772
      %v1985 = vpop.f32.mrb[0].mxu0
      %v1986 = vadd.f32 0.0, %v1985
      %v1987 = vpop.f32.mrb[0].mxu0
      %1988 = vmatprep.mubr.f32.mxu0 0.0
      %1989 = vmatmul.mubr.f32.gmra.mrb[0].mxu0 %v1775
      %v1990 = vpop.f32.mrb[0].mxu0
      %v1991 = vadd.f32 0.0, %v1990
      %v1992 = vpop.f32.mrb[0].mxu0
      %1993 = vmatprep.mubr.f32.mxu0 0.0
      %1994 = vmatmul.mubr.f32.gmra.mrb[0].mxu0 %v1778
      %v1995 = vpop.f32.mrb[0].mxu0
      %v1996 = vadd.f32 0.0, %v1995
      %v1997 = vpop.f32.mrb[0].mxu0
      %1998 = vmatprep.mubr.f32.mxu0 0.0
      %1999 = vmatmul.mubr.f32.gmra.mrb[0].mxu0 %v1781
      %v2000 = vpop.f32.mrb[0].mxu0
      %v2001 = vadd.f32 0.0, %v2000
      %v2002 = vpop.f32.mrb[0].mxu0
      %2003 = vmatprep.mubr.f32.mxu0 0.0
      %2004 = vmatmul.mubr.f32.gmra.mrb[0].mxu0 %v1784
      %v2005 = vpop.f32.mrb[0].mxu0
      %v2006 = vadd.f32 0.0, %v2005
      %v2007 = vpop.f32.mrb[0].mxu0
      %2008 = vmatprep.mubr.f32.mxu0 0.0
      %2009 = vmatmul.mubr.f32.gmra.mrb[0].mxu0 %v1787
      %v2010 = vpop.f32.mrb[0].mxu0
      %v2011 = vadd.f32 0.0, %v2010
      %v2012 = vpop.f32.mrb[0].mxu0
      %2013 = vmatprep.mubr.f32.mxu0 0.0
      %2014 = vmatmul.mubr.f32.gmra.mrb[0].mxu0 %v1790
      %v2015 = vpop.f32.mrb[0].mxu0
      %v2016 = vadd.f32 0.0, %v2015
      %v2017 = vpop.f32.mrb[0].mxu0
      %2018 = vmatprep.mubr.f32.mxu0 0.0
      %2019 = vmatmul.mubr.f32.gmra.mrb[0].mxu0 %v1793
      %v2020 = vpop.f32.mrb[0].mxu0
      %v2021 = vadd.f32 0.0, %v2020
      %v2022 = vpop.f32.mrb[0].mxu0
      %2023 = vmatprep.mubr.f32.mxu0 0.0
      %2024 = vmatmul.mubr.f32.gmra.mrb[0].mxu0 %v1796
      %v2025 = vpop.f32.mrb[0].mxu0
      %v2026 = vadd.f32 0.0, %v2025
      %v2027 = vpop.f32.mrb[0].mxu0
      %2028 = vmatprep.mubr.f32.mxu0 0.0
      %2029 = vmatmul.mubr.f32.gmra.mrb[0].mxu0 %v1799
      %v2030 = vpop.f32.mrb[0].mxu0
      %v2031 = vadd.f32 0.0, %v2030
      %v2032 = vpop.f32.mrb[0].mxu0
      %2033 = vmatprep.mubr.f32.mxu0 0.0
      %2034 = vmatmul.mubr.f32.gmra.mrb[0].mxu0 %v1802
      %v2035 = vpop.f32.mrb[0].mxu0
      %v2036 = vadd.f32 0.0, %v2035
      %v2037 = vpop.f32.mrb[0].mxu0
      %2038 = vmatprep.mubr.f32.mxu0 0.0
      %2039 = vmatmul.mubr.f32.gmra.mrb[0].mxu0 %v1805
      %v2040 = vpop.f32.mrb[0].mxu0
      %v2041 = vadd.f32 0.0, %v2040
      %v2042 = vpop.f32.mrb[0].mxu0
      %2043 = vmatprep.mubr.f32.mxu0 0.0
      %2044 = vmatmul.mubr.f32.gmra.mrb[0].mxu0 %v1808
      %v2045 = vpop.f32.mrb[0].mxu0
      %v2046 = vadd.f32 0.0, %v2045
      %v2047 = vpop.f32.mrb[0].mxu0
      %2048 = vmatprep.mubr.f32.mxu0 0.0
      %2049 = vmatmul.mubr.f32.gmra.mrb[0].mxu0 %v1811
      %v2050 = vpop.f32.mrb[0].mxu0
      %v2051 = vadd.f32 0.0, %v2050
      %v2052 = vpop.f32.mrb[0].mxu0
      %2053 = vmatprep.mubr.f32.mxu0 0.0
      %2054 = vmatmul.mubr.f32.gmra.mrb[0].mxu0 %v1814
      %v2055 = vpop.f32.mrb[0].mxu0
      %v2056 = vadd.f32 0.0, %v2055
      %v2057 = vpop.f32.mrb[0].mxu0
      %2058 = vmatprep.mubr.f32.mxu0 0.0
      %2059 = vmatmul.mubr.f32.gmra.mrb[0].mxu0 %v1817
      %v2060 = vpop.f32.mrb[0].mxu0
      %v2061 = vadd.f32 0.0, %v2060
      %v2062 = vpop.f32.mrb[0].mxu0
      %2063 = vdwg.mxu0
      %v2064 = vadd.f32 %v1637, %v1886
      %v2065 = vadd.f32 %v1638, %v1891
      %v2066 = vadd.f32 %v1639, %v1896
      %v2067 = vadd.f32 %v1640, %v1901
      %v2068 = vadd.f32 %v1641, %v1906
      %v2069 = vadd.f32 %v1642, %v1911
      %v2070 = vadd.f32 %v1643, %v1916
      %v2071 = vadd.f32 %v1644, %v1921
      %v2072 = vadd.f32 %v1645, %v1926
      %v2073 = vadd.f32 %v1646, %v1931
      %v2074 = vadd.f32 %v1647, %v1936
      %v2075 = vadd.f32 %v1648, %v1941
      %v2076 = vadd.f32 %v1649, %v1946
      %v2077 = vadd.f32 %v1650, %v1951
      %v2078 = vadd.f32 %v1651, %v1956
      %v2079 = vadd.f32 %v1652, %v1961
      %v2080 = vadd.f32 %v1653, %v1966
      %v2081 = vadd.f32 %v1654, %v1971
      %v2082 = vadd.f32 %v1655, %v1976
      %v2083 = vadd.f32 %v1656, %v1981
      %v2084 = vadd.f32 %v1657, %v1986
      %v2085 = vadd.f32 %v1658, %v1991
      %v2086 = vadd.f32 %v1659, %v1996
      %v2087 = vadd.f32 %v1660, %v2001
      %v2088 = vadd.f32 %v1661, %v2006
      %v2089 = vadd.f32 %v1662, %v2011
      %v2090 = vadd.f32 %v1663, %v2016
      %v2091 = vadd.f32 %v1664, %v2021
      %v2092 = vadd.f32 %v1665, %v2026
      %v2093 = vadd.f32 %v1666, %v2031
      %v2094 = vadd.f32 %v1667, %v2036
      %v2095 = vadd.f32 %v1668, %v2041
      %v2096 = vadd.f32 %v1669, %v2046
      %v2097 = vadd.f32 %v1670, %v2051
      %v2098 = vadd.f32 %v1671, %v2056
      %v2099 = vadd.f32 %v1672, %v2061
      %v2100 = vld [vmem:[%s460 + $0x13] sm:$0xff]
      %v2101 = vld [vmem:[%s460 + $0x1b] sm:$0xff]
      %v2102 = vld [vmem:[%s460 + $0x23] sm:$0xff]
      %v2103 = vld [vmem:[%s460 + $0x2b] sm:$0xff]
      %v2104 = vld [vmem:[%s460 + $0x33] sm:$0xff]
      %v2105 = vld [vmem:[%s460 + $0x3b] sm:$0xff]
      %v2106 = vld [vmem:[%s460 + $0x43] sm:$0xff]
      %v2107 = vld [vmem:[%s460 + $0x4b] sm:$0xff]
      %v2108 = vld [vmem:[%s460 + $0x53] sm:$0xff]
      %v2109 = vld [vmem:[%s460 + $0x5b] sm:$0xff]
      %v2110 = vld [vmem:[%s460 + $0x63] sm:$0xff]
      %v2111 = vld [vmem:[%s460 + $0x6b] sm:$0xff]
      %v2112 = vld [vmem:[%s460 + $0x73] sm:$0xff]
      %v2113 = vld [vmem:[%s460 + $0x7b] sm:$0xff]
      %v2114 = vld [vmem:[%s460 + $0x83] sm:$0xff]
      %v2115 = vld [vmem:[%s460 + $0x8b] sm:$0xff]
      %v2116 = vld [vmem:[%s460 + $0x93] sm:$0xff]
      %v2117 = vld [vmem:[%s460 + $0x9b] sm:$0xff]
      %v2118 = vld [vmem:[%s460 + $0xa3] sm:$0xff]
      %v2119 = vld [vmem:[%s460 + $0xab] sm:$0xff]
      %v2120 = vld [vmem:[%s460 + $0xb3] sm:$0xff]
      %v2121 = vld [vmem:[%s460 + $0xbb] sm:$0xff]
      %v2122 = vld [vmem:[%s460 + $0xc3] sm:$0xff]
      %v2123 = vld [vmem:[%s460 + $0xcb] sm:$0xff]
      %v2124 = vld [vmem:[%s460 + $0xd3] sm:$0xff]
      %v2125 = vld [vmem:[%s460 + $0xdb] sm:$0xff]
      %v2126 = vld [vmem:[%s460 + $0xe3] sm:$0xff]
      %v2127 = vld [vmem:[%s460 + $0xeb] sm:$0xff]
      %v2128 = vld [vmem:[%s460 + $0xf3] sm:$0xff]
      %v2129 = vld [vmem:[%s460 + $0xfb] sm:$0xff]
      %v2130 = vld [vmem:[%s460 + $0x103] sm:$0xff]
      %v2131 = vld [vmem:[%s460 + $0x10b] sm:$0xff]
      %v2132 = vld [vmem:[%s460 + $0x113] sm:$0xff]
      %v2133 = vld [vmem:[%s460 + $0x11b] sm:$0xff]
      %v2134 = vld [vmem:[%s460 + $0x123] sm:$0xff]
      %v2135 = vld [vmem:[%s460 + $0x12b] sm:$0xff]
      %s2136 = scalar_lea.vmem %s1, 32
      %v2137 = vld [vmem:[%s2136] sm:$0xff]
      %v2139 = vsel %vm539, %v2100, 0
      %v2142 = vsel %vm539, %v2101, 0
      %v2145 = vsel %vm539, %v2102, 0
      %v2148 = vsel %vm539, %v2103, 0
      %v2151 = vsel %vm539, %v2104, 0
      %v2154 = vsel %vm539, %v2105, 0
      %v2157 = vsel %vm539, %v2106, 0
      %v2160 = vsel %vm539, %v2107, 0
      %v2163 = vsel %vm539, %v2108, 0
      %v2166 = vsel %vm539, %v2109, 0
      %v2169 = vsel %vm539, %v2110, 0
      %v2172 = vsel %vm539, %v2111, 0
      %v2175 = vsel %vm539, %v2112, 0
      %v2178 = vsel %vm539, %v2113, 0
      %v2181 = vsel %vm539, %v2114, 0
      %v2184 = vsel %vm539, %v2115, 0
      %v2187 = vsel %vm539, %v2116, 0
      %v2190 = vsel %vm539, %v2117, 0
      %v2193 = vsel %vm539, %v2118, 0
      %v2196 = vsel %vm539, %v2119, 0
      %v2199 = vsel %vm539, %v2120, 0
      %v2202 = vsel %vm539, %v2121, 0
      %v2205 = vsel %vm539, %v2122, 0
      %v2208 = vsel %vm539, %v2123, 0
      %v2211 = vsel %vm539, %v2124, 0
      %v2214 = vsel %vm539, %v2125, 0
      %v2217 = vsel %vm539, %v2126, 0
      %v2220 = vsel %vm539, %v2127, 0
      %v2223 = vsel %vm539, %v2128, 0
      %v2226 = vsel %vm539, %v2129, 0
      %v2229 = vsel %vm539, %v2130, 0
      %v2232 = vsel %vm539, %v2131, 0
      %v2235 = vsel %vm539, %v2132, 0
      %v2238 = vsel %vm539, %v2133, 0
      %v2241 = vsel %vm539, %v2134, 0
      %v2244 = vsel %vm539, %v2135, 0
      %2246 = vmatprep.subr.mxu0 0.0
      %2247 = vmatpush1.msra.mxu0 %v2137
      %2248 = vmatprep.subr.mxu0 0.0
      %2249 = vmatpush1.msra.mxu0 0.0
      %2250 = vmatprep.subr.mxu0 0.0
      %2251 = vmatpush1.msra.mxu0 0.0
      %2252 = vmatprep.subr.mxu0 0.0
      %2253 = vmatpush1.msra.mxu0 0.0
      %2254 = vmatprep.subr.mxu0 0.0
      %2255 = vmatpush1.msra.mxu0 0.0
      %2256 = vmatprep.subr.mxu0 0.0
      %2257 = vmatpush1.msra.mxu0 0.0
      %2258 = vmatprep.subr.mxu0 0.0
      %2259 = vmatpush1.msra.mxu0 0.0
      %2260 = vmatprep.subr.mxu0 0.0
      %2261 = vmatpush1.msra.mxu0 0.0
      %2262 = vmatprep.subr.mxu0 0.0
      %2263 = vmatpush1.msra.mxu0 0.0
      %2264 = vmatprep.subr.mxu0 0.0
      %2265 = vmatpush1.msra.mxu0 0.0
      %2266 = vmatprep.subr.mxu0 0.0
      %2267 = vmatpush1.msra.mxu0 0.0
      %2268 = vmatprep.subr.mxu0 0.0
      %2269 = vmatpush1.msra.mxu0 0.0
      %2270 = vmatprep.subr.mxu0 0.0
      %2271 = vmatpush1.msra.mxu0 0.0
      %2272 = vmatprep.subr.mxu0 0.0
      %2273 = vmatpush1.msra.mxu0 0.0
      %2274 = vmatprep.subr.mxu0 0.0
      %2275 = vmatpush1.msra.mxu0 0.0
      %2276 = vmatprep.subr.mxu0 0.0
      %2277 = vmatpush1.msra.mxu0 0.0
      %2278 = vmatprep.subr.mxu0 0.0
      %2279 = vmatpush1.msra.mxu0 0.0
      %2280 = vmatprep.subr.mxu0 0.0
      %2281 = vmatpush1.msra.mxu0 0.0
      %2282 = vmatprep.subr.mxu0 0.0
      %2283 = vmatpush1.msra.mxu0 0.0
      %2284 = vmatprep.subr.mxu0 0.0
      %2285 = vmatpush1.msra.mxu0 0.0
      %2286 = vmatprep.subr.mxu0 0.0
      %2287 = vmatpush1.msra.mxu0 0.0
      %2288 = vmatprep.subr.mxu0 0.0
      %2289 = vmatpush1.msra.mxu0 0.0
      %2290 = vmatprep.subr.mxu0 0.0
      %2291 = vmatpush1.msra.mxu0 0.0
      %2292 = vmatprep.subr.mxu0 0.0
      %2293 = vmatpush1.msra.mxu0 0.0
      %2294 = vmatprep.subr.mxu0 0.0
      %2295 = vmatpush1.msra.mxu0 0.0
      %2296 = vmatprep.subr.mxu0 0.0
      %2297 = vmatpush1.msra.mxu0 0.0
      %2298 = vmatprep.subr.mxu0 0.0
      %2299 = vmatpush1.msra.mxu0 0.0
      %2300 = vmatprep.subr.mxu0 0.0
      %2301 = vmatpush1.msra.mxu0 0.0
      %2302 = vmatprep.subr.mxu0 0.0
      %2303 = vmatpush1.msra.mxu0 0.0
      %2304 = vmatprep.subr.mxu0 0.0
      %2305 = vmatpush1.msra.mxu0 0.0
      %2306 = vmatprep.subr.mxu0 0.0
      %2307 = vmatpush1.msra.mxu0 0.0
      %2308 = vmatprep.subr.mxu0 0.0
      %2309 = vmatpush1.msra.mxu0 0.0
      %2310 = vmatprep.mubr.f32.mxu0 0.0
      %2311 = vmatmul.mubr.f32.gmra.mrb[0].mxu0 %v2139
      %v2312 = vpop.f32.mrb[0].mxu0
      %v2313 = vadd.f32 0.0, %v2312
      %v2314 = vpop.f32.mrb[0].mxu0
      %2315 = vmatprep.mubr.f32.mxu0 0.0
      %2316 = vmatmul.mubr.f32.gmra.mrb[0].mxu0 %v2142
      %v2317 = vpop.f32.mrb[0].mxu0
      %v2318 = vadd.f32 0.0, %v2317
      %v2319 = vpop.f32.mrb[0].mxu0
      %2320 = vmatprep.mubr.f32.mxu0 0.0
      %2321 = vmatmul.mubr.f32.gmra.mrb[0].mxu0 %v2145
      %v2322 = vpop.f32.mrb[0].mxu0
      %v2323 = vadd.f32 0.0, %v2322
      %v2324 = vpop.f32.mrb[0].mxu0
      %2325 = vmatprep.mubr.f32.mxu0 0.0
      %2326 = vmatmul.mubr.f32.gmra.mrb[0].mxu0 %v2148
      %v2327 = vpop.f32.mrb[0].mxu0
      %v2328 = vadd.f32 0.0, %v2327
      %v2329 = vpop.f32.mrb[0].mxu0
      %2330 = vmatprep.mubr.f32.mxu0 0.0
      %2331 = vmatmul.mubr.f32.gmra.mrb[0].mxu0 %v2151
      %v2332 = vpop.f32.mrb[0].mxu0
      %v2333 = vadd.f32 0.0, %v2332
      %v2334 = vpop.f32.mrb[0].mxu0
      %2335 = vmatprep.mubr.f32.mxu0 0.0
      %2336 = vmatmul.mubr.f32.gmra.mrb[0].mxu0 %v2154
      %v2337 = vpop.f32.mrb[0].mxu0
      %v2338 = vadd.f32 0.0, %v2337
      %v2339 = vpop.f32.mrb[0].mxu0
      %2340 = vmatprep.mubr.f32.mxu0 0.0
      %2341 = vmatmul.mubr.f32.gmra.mrb[0].mxu0 %v2157
      %v2342 = vpop.f32.mrb[0].mxu0
      %v2343 = vadd.f32 0.0, %v2342
      %v2344 = vpop.f32.mrb[0].mxu0
      %2345 = vmatprep.mubr.f32.mxu0 0.0
      %2346 = vmatmul.mubr.f32.gmra.mrb[0].mxu0 %v2160
      %v2347 = vpop.f32.mrb[0].mxu0
      %v2348 = vadd.f32 0.0, %v2347
      %v2349 = vpop.f32.mrb[0].mxu0
      %2350 = vmatprep.mubr.f32.mxu0 0.0
      %2351 = vmatmul.mubr.f32.gmra.mrb[0].mxu0 %v2163
      %v2352 = vpop.f32.mrb[0].mxu0
      %v2353 = vadd.f32 0.0, %v2352
      %v2354 = vpop.f32.mrb[0].mxu0
      %2355 = vmatprep.mubr.f32.mxu0 0.0
      %2356 = vmatmul.mubr.f32.gmra.mrb[0].mxu0 %v2166
      %v2357 = vpop.f32.mrb[0].mxu0
      %v2358 = vadd.f32 0.0, %v2357
      %v2359 = vpop.f32.mrb[0].mxu0
      %2360 = vmatprep.mubr.f32.mxu0 0.0
      %2361 = vmatmul.mubr.f32.gmra.mrb[0].mxu0 %v2169
      %v2362 = vpop.f32.mrb[0].mxu0
      %v2363 = vadd.f32 0.0, %v2362
      %v2364 = vpop.f32.mrb[0].mxu0
      %2365 = vmatprep.mubr.f32.mxu0 0.0
      %2366 = vmatmul.mubr.f32.gmra.mrb[0].mxu0 %v2172
      %v2367 = vpop.f32.mrb[0].mxu0
      %v2368 = vadd.f32 0.0, %v2367
      %v2369 = vpop.f32.mrb[0].mxu0
      %2370 = vmatprep.mubr.f32.mxu0 0.0
      %2371 = vmatmul.mubr.f32.gmra.mrb[0].mxu0 %v2175
      %v2372 = vpop.f32.mrb[0].mxu0
      %v2373 = vadd.f32 0.0, %v2372
      %v2374 = vpop.f32.mrb[0].mxu0
      %2375 = vmatprep.mubr.f32.mxu0 0.0
      %2376 = vmatmul.mubr.f32.gmra.mrb[0].mxu0 %v2178
      %v2377 = vpop.f32.mrb[0].mxu0
      %v2378 = vadd.f32 0.0, %v2377
      %v2379 = vpop.f32.mrb[0].mxu0
      %2380 = vmatprep.mubr.f32.mxu0 0.0
      %2381 = vmatmul.mubr.f32.gmra.mrb[0].mxu0 %v2181
      %v2382 = vpop.f32.mrb[0].mxu0
      %v2383 = vadd.f32 0.0, %v2382
      %v2384 = vpop.f32.mrb[0].mxu0
      %2385 = vmatprep.mubr.f32.mxu0 0.0
      %2386 = vmatmul.mubr.f32.gmra.mrb[0].mxu0 %v2184
      %v2387 = vpop.f32.mrb[0].mxu0
      %v2388 = vadd.f32 0.0, %v2387
      %v2389 = vpop.f32.mrb[0].mxu0
      %2390 = vmatprep.mubr.f32.mxu0 0.0
      %2391 = vmatmul.mubr.f32.gmra.mrb[0].mxu0 %v2187
      %v2392 = vpop.f32.mrb[0].mxu0
      %v2393 = vadd.f32 0.0, %v2392
      %v2394 = vpop.f32.mrb[0].mxu0
      %2395 = vmatprep.mubr.f32.mxu0 0.0
      %2396 = vmatmul.mubr.f32.gmra.mrb[0].mxu0 %v2190
      %v2397 = vpop.f32.mrb[0].mxu0
      %v2398 = vadd.f32 0.0, %v2397
      %v2399 = vpop.f32.mrb[0].mxu0
      %2400 = vmatprep.mubr.f32.mxu0 0.0
      %2401 = vmatmul.mubr.f32.gmra.mrb[0].mxu0 %v2193
      %v2402 = vpop.f32.mrb[0].mxu0
      %v2403 = vadd.f32 0.0, %v2402
      %v2404 = vpop.f32.mrb[0].mxu0
      %2405 = vmatprep.mubr.f32.mxu0 0.0
      %2406 = vmatmul.mubr.f32.gmra.mrb[0].mxu0 %v2196
      %v2407 = vpop.f32.mrb[0].mxu0
      %v2408 = vadd.f32 0.0, %v2407
      %v2409 = vpop.f32.mrb[0].mxu0
      %2410 = vmatprep.mubr.f32.mxu0 0.0
      %2411 = vmatmul.mubr.f32.gmra.mrb[0].mxu0 %v2199
      %v2412 = vpop.f32.mrb[0].mxu0
      %v2413 = vadd.f32 0.0, %v2412
      %v2414 = vpop.f32.mrb[0].mxu0
      %2415 = vmatprep.mubr.f32.mxu0 0.0
      %2416 = vmatmul.mubr.f32.gmra.mrb[0].mxu0 %v2202
      %v2417 = vpop.f32.mrb[0].mxu0
      %v2418 = vadd.f32 0.0, %v2417
      %v2419 = vpop.f32.mrb[0].mxu0
      %2420 = vmatprep.mubr.f32.mxu0 0.0
      %2421 = vmatmul.mubr.f32.gmra.mrb[0].mxu0 %v2205
      %v2422 = vpop.f32.mrb[0].mxu0
      %v2423 = vadd.f32 0.0, %v2422
      %v2424 = vpop.f32.mrb[0].mxu0
      %2425 = vmatprep.mubr.f32.mxu0 0.0
      %2426 = vmatmul.mubr.f32.gmra.mrb[0].mxu0 %v2208
      %v2427 = vpop.f32.mrb[0].mxu0
      %v2428 = vadd.f32 0.0, %v2427
      %v2429 = vpop.f32.mrb[0].mxu0
      %2430 = vmatprep.mubr.f32.mxu0 0.0
      %2431 = vmatmul.mubr.f32.gmra.mrb[0].mxu0 %v2211
      %v2432 = vpop.f32.mrb[0].mxu0
      %v2433 = vadd.f32 0.0, %v2432
      %v2434 = vpop.f32.mrb[0].mxu0
      %2435 = vmatprep.mubr.f32.mxu0 0.0
      %2436 = vmatmul.mubr.f32.gmra.mrb[0].mxu0 %v2214
      %v2437 = vpop.f32.mrb[0].mxu0
      %v2438 = vadd.f32 0.0, %v2437
      %v2439 = vpop.f32.mrb[0].mxu0
      %2440 = vmatprep.mubr.f32.mxu0 0.0
      %2441 = vmatmul.mubr.f32.gmra.mrb[0].mxu0 %v2217
      %v2442 = vpop.f32.mrb[0].mxu0
      %v2443 = vadd.f32 0.0, %v2442
      %v2444 = vpop.f32.mrb[0].mxu0
      %2445 = vmatprep.mubr.f32.mxu0 0.0
      %2446 = vmatmul.mubr.f32.gmra.mrb[0].mxu0 %v2220
      %v2447 = vpop.f32.mrb[0].mxu0
      %v2448 = vadd.f32 0.0, %v2447
      %v2449 = vpop.f32.mrb[0].mxu0
      %2450 = vmatprep.mubr.f32.mxu0 0.0
      %2451 = vmatmul.mubr.f32.gmra.mrb[0].mxu0 %v2223
      %v2452 = vpop.f32.mrb[0].mxu0
      %v2453 = vadd.f32 0.0, %v2452
      %v2454 = vpop.f32.mrb[0].mxu0
      %2455 = vmatprep.mubr.f32.mxu0 0.0
      %2456 = vmatmul.mubr.f32.gmra.mrb[0].mxu0 %v2226
      %v2457 = vpop.f32.mrb[0].mxu0
      %v2458 = vadd.f32 0.0, %v2457
      %v2459 = vpop.f32.mrb[0].mxu0
      %2460 = vmatprep.mubr.f32.mxu0 0.0
      %2461 = vmatmul.mubr.f32.gmra.mrb[0].mxu0 %v2229
      %v2462 = vpop.f32.mrb[0].mxu0
      %v2463 = vadd.f32 0.0, %v2462
      %v2464 = vpop.f32.mrb[0].mxu0
      %2465 = vmatprep.mubr.f32.mxu0 0.0
      %2466 = vmatmul.mubr.f32.gmra.mrb[0].mxu0 %v2232
      %v2467 = vpop.f32.mrb[0].mxu0
      %v2468 = vadd.f32 0.0, %v2467
      %v2469 = vpop.f32.mrb[0].mxu0
      %2470 = vmatprep.mubr.f32.mxu0 0.0
      %2471 = vmatmul.mubr.f32.gmra.mrb[0].mxu0 %v2235
      %v2472 = vpop.f32.mrb[0].mxu0
      %v2473 = vadd.f32 0.0, %v2472
      %v2474 = vpop.f32.mrb[0].mxu0
      %2475 = vmatprep.mubr.f32.mxu0 0.0
      %2476 = vmatmul.mubr.f32.gmra.mrb[0].mxu0 %v2238
      %v2477 = vpop.f32.mrb[0].mxu0
      %v2478 = vadd.f32 0.0, %v2477
      %v2479 = vpop.f32.mrb[0].mxu0
      %2480 = vmatprep.mubr.f32.mxu0 0.0
      %2481 = vmatmul.mubr.f32.gmra.mrb[0].mxu0 %v2241
      %v2482 = vpop.f32.mrb[0].mxu0
      %v2483 = vadd.f32 0.0, %v2482
      %v2484 = vpop.f32.mrb[0].mxu0
      %2485 = vmatprep.mubr.f32.mxu0 0.0
      %2486 = vmatmul.mubr.f32.gmra.mrb[0].mxu0 %v2244
      %v2487 = vpop.f32.mrb[0].mxu0
      %v2488 = vadd.f32 0.0, %v2487
      %v2489 = vpop.f32.mrb[0].mxu0
      %2490 = vdwg.mxu0
      %v2491 = vadd.f32 %v2064, %v2313
      %v2492 = vadd.f32 %v2065, %v2318
      %v2493 = vadd.f32 %v2066, %v2323
      %v2494 = vadd.f32 %v2067, %v2328
      %v2495 = vadd.f32 %v2068, %v2333
      %v2496 = vadd.f32 %v2069, %v2338
      %v2497 = vadd.f32 %v2070, %v2343
      %v2498 = vadd.f32 %v2071, %v2348
      %v2499 = vadd.f32 %v2072, %v2353
      %v2500 = vadd.f32 %v2073, %v2358
      %v2501 = vadd.f32 %v2074, %v2363
      %v2502 = vadd.f32 %v2075, %v2368
      %v2503 = vadd.f32 %v2076, %v2373
      %v2504 = vadd.f32 %v2077, %v2378
      %v2505 = vadd.f32 %v2078, %v2383
      %v2506 = vadd.f32 %v2079, %v2388
      %v2507 = vadd.f32 %v2080, %v2393
      %v2508 = vadd.f32 %v2081, %v2398
      %v2509 = vadd.f32 %v2082, %v2403
      %v2510 = vadd.f32 %v2083, %v2408
      %v2511 = vadd.f32 %v2084, %v2413
      %v2512 = vadd.f32 %v2085, %v2418
      %v2513 = vadd.f32 %v2086, %v2423
      %v2514 = vadd.f32 %v2087, %v2428
      %v2515 = vadd.f32 %v2088, %v2433
      %v2516 = vadd.f32 %v2089, %v2438
      %v2517 = vadd.f32 %v2090, %v2443
      %v2518 = vadd.f32 %v2091, %v2448
      %v2519 = vadd.f32 %v2092, %v2453
      %v2520 = vadd.f32 %v2093, %v2458
      %v2521 = vadd.f32 %v2094, %v2463
      %v2522 = vadd.f32 %v2095, %v2468
      %v2523 = vadd.f32 %v2096, %v2473
      %v2524 = vadd.f32 %v2097, %v2478
      %v2525 = vadd.f32 %v2098, %v2483
      %v2526 = vadd.f32 %v2099, %v2488
      %v2527 = vld [vmem:[%s460 + $0x14] sm:$0xff]
      %v2528 = vld [vmem:[%s460 + $0x1c] sm:$0xff]
      %v2529 = vld [vmem:[%s460 + $0x24] sm:$0xff]
      %v2530 = vld [vmem:[%s460 + $0x2c] sm:$0xff]
      %v2531 = vld [vmem:[%s460 + $0x34] sm:$0xff]
      %v2532 = vld [vmem:[%s460 + $0x3c] sm:$0xff]
      %v2533 = vld [vmem:[%s460 + $0x44] sm:$0xff]
      %v2534 = vld [vmem:[%s460 + $0x4c] sm:$0xff]
      %v2535 = vld [vmem:[%s460 + $0x54] sm:$0xff]
      %v2536 = vld [vmem:[%s460 + $0x5c] sm:$0xff]
      %v2537 = vld [vmem:[%s460 + $0x64] sm:$0xff]
      %v2538 = vld [vmem:[%s460 + $0x6c] sm:$0xff]
      %v2539 = vld [vmem:[%s460 + $0x74] sm:$0xff]
      %v2540 = vld [vmem:[%s460 + $0x7c] sm:$0xff]
      %v2541 = vld [vmem:[%s460 + $0x84] sm:$0xff]
      %v2542 = vld [vmem:[%s460 + $0x8c] sm:$0xff]
      %v2543 = vld [vmem:[%s460 + $0x94] sm:$0xff]
      %v2544 = vld [vmem:[%s460 + $0x9c] sm:$0xff]
      %v2545 = vld [vmem:[%s460 + $0xa4] sm:$0xff]
      %v2546 = vld [vmem:[%s460 + $0xac] sm:$0xff]
      %v2547 = vld [vmem:[%s460 + $0xb4] sm:$0xff]
      %v2548 = vld [vmem:[%s460 + $0xbc] sm:$0xff]
      %v2549 = vld [vmem:[%s460 + $0xc4] sm:$0xff]
      %v2550 = vld [vmem:[%s460 + $0xcc] sm:$0xff]
      %v2551 = vld [vmem:[%s460 + $0xd4] sm:$0xff]
      %v2552 = vld [vmem:[%s460 + $0xdc] sm:$0xff]
      %v2553 = vld [vmem:[%s460 + $0xe4] sm:$0xff]
      %v2554 = vld [vmem:[%s460 + $0xec] sm:$0xff]
      %v2555 = vld [vmem:[%s460 + $0xf4] sm:$0xff]
      %v2556 = vld [vmem:[%s460 + $0xfc] sm:$0xff]
      %v2557 = vld [vmem:[%s460 + $0x104] sm:$0xff]
      %v2558 = vld [vmem:[%s460 + $0x10c] sm:$0xff]
      %v2559 = vld [vmem:[%s460 + $0x114] sm:$0xff]
      %v2560 = vld [vmem:[%s460 + $0x11c] sm:$0xff]
      %v2561 = vld [vmem:[%s460 + $0x124] sm:$0xff]
      %v2562 = vld [vmem:[%s460 + $0x12c] sm:$0xff]
      %s2563 = scalar_lea.vmem %s1, 40
      %v2564 = vld [vmem:[%s2563] sm:$0xff]
      %v2566 = vsel %vm539, %v2527, 0
      %v2569 = vsel %vm539, %v2528, 0
      %v2572 = vsel %vm539, %v2529, 0
      %v2575 = vsel %vm539, %v2530, 0
      %v2578 = vsel %vm539, %v2531, 0
      %v2581 = vsel %vm539, %v2532, 0
      %v2584 = vsel %vm539, %v2533, 0
      %v2587 = vsel %vm539, %v2534, 0
      %v2590 = vsel %vm539, %v2535, 0
      %v2593 = vsel %vm539, %v2536, 0
      %v2596 = vsel %vm539, %v2537, 0
      %v2599 = vsel %vm539, %v2538, 0
      %v2602 = vsel %vm539, %v2539, 0
      %v2605 = vsel %vm539, %v2540, 0
      %v2608 = vsel %vm539, %v2541, 0
      %v2611 = vsel %vm539, %v2542, 0
      %v2614 = vsel %vm539, %v2543, 0
      %v2617 = vsel %vm539, %v2544, 0
      %v2620 = vsel %vm539, %v2545, 0
      %v2623 = vsel %vm539, %v2546, 0
      %v2626 = vsel %vm539, %v2547, 0
      %v2629 = vsel %vm539, %v2548, 0
      %v2632 = vsel %vm539, %v2549, 0
      %v2635 = vsel %vm539, %v2550, 0
      %v2638 = vsel %vm539, %v2551, 0
      %v2641 = vsel %vm539, %v2552, 0
      %v2644 = vsel %vm539, %v2553, 0
      %v2647 = vsel %vm539, %v2554, 0
      %v2650 = vsel %vm539, %v2555, 0
      %v2653 = vsel %vm539, %v2556, 0
      %v2656 = vsel %vm539, %v2557, 0
      %v2659 = vsel %vm539, %v2558, 0
      %v2662 = vsel %vm539, %v2559, 0
      %v2665 = vsel %vm539, %v2560, 0
      %v2668 = vsel %vm539, %v2561, 0
      %v2671 = vsel %vm539, %v2562, 0
      %2673 = vmatprep.subr.mxu0 0.0
      %2674 = vmatpush1.msra.mxu0 %v2564
      %2675 = vmatprep.subr.mxu0 0.0
      %2676 = vmatpush1.msra.mxu0 0.0
      %2677 = vmatprep.subr.mxu0 0.0
      %2678 = vmatpush1.msra.mxu0 0.0
      %2679 = vmatprep.subr.mxu0 0.0
      %2680 = vmatpush1.msra.mxu0 0.0
      %2681 = vmatprep.subr.mxu0 0.0
      %2682 = vmatpush1.msra.mxu0 0.0
      %2683 = vmatprep.subr.mxu0 0.0
      %2684 = vmatpush1.msra.mxu0 0.0
      %2685 = vmatprep.subr.mxu0 0.0
      %2686 = vmatpush1.msra.mxu0 0.0
      %2687 = vmatprep.subr.mxu0 0.0
      %2688 = vmatpush1.msra.mxu0 0.0
      %2689 = vmatprep.subr.mxu0 0.0
      %2690 = vmatpush1.msra.mxu0 0.0
      %2691 = vmatprep.subr.mxu0 0.0
      %2692 = vmatpush1.msra.mxu0 0.0
      %2693 = vmatprep.subr.mxu0 0.0
      %2694 = vmatpush1.msra.mxu0 0.0
      %2695 = vmatprep.subr.mxu0 0.0
      %2696 = vmatpush1.msra.mxu0 0.0
      %2697 = vmatprep.subr.mxu0 0.0
      %2698 = vmatpush1.msra.mxu0 0.0
      %2699 = vmatprep.subr.mxu0 0.0
      %2700 = vmatpush1.msra.mxu0 0.0
      %2701 = vmatprep.subr.mxu0 0.0
      %2702 = vmatpush1.msra.mxu0 0.0
      %2703 = vmatprep.subr.mxu0 0.0
      %2704 = vmatpush1.msra.mxu0 0.0
      %2705 = vmatprep.subr.mxu0 0.0
      %2706 = vmatpush1.msra.mxu0 0.0
      %2707 = vmatprep.subr.mxu0 0.0
      %2708 = vmatpush1.msra.mxu0 0.0
      %2709 = vmatprep.subr.mxu0 0.0
      %2710 = vmatpush1.msra.mxu0 0.0
      %2711 = vmatprep.subr.mxu0 0.0
      %2712 = vmatpush1.msra.mxu0 0.0
      %2713 = vmatprep.subr.mxu0 0.0
      %2714 = vmatpush1.msra.mxu0 0.0
      %2715 = vmatprep.subr.mxu0 0.0
      %2716 = vmatpush1.msra.mxu0 0.0
      %2717 = vmatprep.subr.mxu0 0.0
      %2718 = vmatpush1.msra.mxu0 0.0
      %2719 = vmatprep.subr.mxu0 0.0
      %2720 = vmatpush1.msra.mxu0 0.0
      %2721 = vmatprep.subr.mxu0 0.0
      %2722 = vmatpush1.msra.mxu0 0.0
      %2723 = vmatprep.subr.mxu0 0.0
      %2724 = vmatpush1.msra.mxu0 0.0
      %2725 = vmatprep.subr.mxu0 0.0
      %2726 = vmatpush1.msra.mxu0 0.0
      %2727 = vmatprep.subr.mxu0 0.0
      %2728 = vmatpush1.msra.mxu0 0.0
      %2729 = vmatprep.subr.mxu0 0.0
      %2730 = vmatpush1.msra.mxu0 0.0
      %2731 = vmatprep.subr.mxu0 0.0
      %2732 = vmatpush1.msra.mxu0 0.0
      %2733 = vmatprep.subr.mxu0 0.0
      %2734 = vmatpush1.msra.mxu0 0.0
      %2735 = vmatprep.subr.mxu0 0.0
      %2736 = vmatpush1.msra.mxu0 0.0
      %2737 = vmatprep.mubr.f32.mxu0 0.0
      %2738 = vmatmul.mubr.f32.gmra.mrb[0].mxu0 %v2566
      %v2739 = vpop.f32.mrb[0].mxu0
      %v2740 = vadd.f32 0.0, %v2739
      %v2741 = vpop.f32.mrb[0].mxu0
      %2742 = vmatprep.mubr.f32.mxu0 0.0
      %2743 = vmatmul.mubr.f32.gmra.mrb[0].mxu0 %v2569
      %v2744 = vpop.f32.mrb[0].mxu0
      %v2745 = vadd.f32 0.0, %v2744
      %v2746 = vpop.f32.mrb[0].mxu0
      %2747 = vmatprep.mubr.f32.mxu0 0.0
      %2748 = vmatmul.mubr.f32.gmra.mrb[0].mxu0 %v2572
      %v2749 = vpop.f32.mrb[0].mxu0
      %v2750 = vadd.f32 0.0, %v2749
      %v2751 = vpop.f32.mrb[0].mxu0
      %2752 = vmatprep.mubr.f32.mxu0 0.0
      %2753 = vmatmul.mubr.f32.gmra.mrb[0].mxu0 %v2575
      %v2754 = vpop.f32.mrb[0].mxu0
      %v2755 = vadd.f32 0.0, %v2754
      %v2756 = vpop.f32.mrb[0].mxu0
      %2757 = vmatprep.mubr.f32.mxu0 0.0
      %2758 = vmatmul.mubr.f32.gmra.mrb[0].mxu0 %v2578
      %v2759 = vpop.f32.mrb[0].mxu0
      %v2760 = vadd.f32 0.0, %v2759
      %v2761 = vpop.f32.mrb[0].mxu0
      %2762 = vmatprep.mubr.f32.mxu0 0.0
      %2763 = vmatmul.mubr.f32.gmra.mrb[0].mxu0 %v2581
      %v2764 = vpop.f32.mrb[0].mxu0
      %v2765 = vadd.f32 0.0, %v2764
      %v2766 = vpop.f32.mrb[0].mxu0
      %2767 = vmatprep.mubr.f32.mxu0 0.0
      %2768 = vmatmul.mubr.f32.gmra.mrb[0].mxu0 %v2584
      %v2769 = vpop.f32.mrb[0].mxu0
      %v2770 = vadd.f32 0.0, %v2769
      %v2771 = vpop.f32.mrb[0].mxu0
      %2772 = vmatprep.mubr.f32.mxu0 0.0
      %2773 = vmatmul.mubr.f32.gmra.mrb[0].mxu0 %v2587
      %v2774 = vpop.f32.mrb[0].mxu0
      %v2775 = vadd.f32 0.0, %v2774
      %v2776 = vpop.f32.mrb[0].mxu0
      %2777 = vmatprep.mubr.f32.mxu0 0.0
      %2778 = vmatmul.mubr.f32.gmra.mrb[0].mxu0 %v2590
      %v2779 = vpop.f32.mrb[0].mxu0
      %v2780 = vadd.f32 0.0, %v2779
      %v2781 = vpop.f32.mrb[0].mxu0
      %2782 = vmatprep.mubr.f32.mxu0 0.0
      %2783 = vmatmul.mubr.f32.gmra.mrb[0].mxu0 %v2593
      %v2784 = vpop.f32.mrb[0].mxu0
      %v2785 = vadd.f32 0.0, %v2784
      %v2786 = vpop.f32.mrb[0].mxu0
      %2787 = vmatprep.mubr.f32.mxu0 0.0
      %2788 = vmatmul.mubr.f32.gmra.mrb[0].mxu0 %v2596
      %v2789 = vpop.f32.mrb[0].mxu0
      %v2790 = vadd.f32 0.0, %v2789
      %v2791 = vpop.f32.mrb[0].mxu0
      %2792 = vmatprep.mubr.f32.mxu0 0.0
      %2793 = vmatmul.mubr.f32.gmra.mrb[0].mxu0 %v2599
      %v2794 = vpop.f32.mrb[0].mxu0
      %v2795 = vadd.f32 0.0, %v2794
      %v2796 = vpop.f32.mrb[0].mxu0
      %2797 = vmatprep.mubr.f32.mxu0 0.0
      %2798 = vmatmul.mubr.f32.gmra.mrb[0].mxu0 %v2602
      %v2799 = vpop.f32.mrb[0].mxu0
      %v2800 = vadd.f32 0.0, %v2799
      %v2801 = vpop.f32.mrb[0].mxu0
      %2802 = vmatprep.mubr.f32.mxu0 0.0
      %2803 = vmatmul.mubr.f32.gmra.mrb[0].mxu0 %v2605
      %v2804 = vpop.f32.mrb[0].mxu0
      %v2805 = vadd.f32 0.0, %v2804
      %v2806 = vpop.f32.mrb[0].mxu0
      %2807 = vmatprep.mubr.f32.mxu0 0.0
      %2808 = vmatmul.mubr.f32.gmra.mrb[0].mxu0 %v2608
      %v2809 = vpop.f32.mrb[0].mxu0
      %v2810 = vadd.f32 0.0, %v2809
      %v2811 = vpop.f32.mrb[0].mxu0
      %2812 = vmatprep.mubr.f32.mxu0 0.0
      %2813 = vmatmul.mubr.f32.gmra.mrb[0].mxu0 %v2611
      %v2814 = vpop.f32.mrb[0].mxu0
      %v2815 = vadd.f32 0.0, %v2814
      %v2816 = vpop.f32.mrb[0].mxu0
      %2817 = vmatprep.mubr.f32.mxu0 0.0
      %2818 = vmatmul.mubr.f32.gmra.mrb[0].mxu0 %v2614
      %v2819 = vpop.f32.mrb[0].mxu0
      %v2820 = vadd.f32 0.0, %v2819
      %v2821 = vpop.f32.mrb[0].mxu0
      %2822 = vmatprep.mubr.f32.mxu0 0.0
      %2823 = vmatmul.mubr.f32.gmra.mrb[0].mxu0 %v2617
      %v2824 = vpop.f32.mrb[0].mxu0
      %v2825 = vadd.f32 0.0, %v2824
      %v2826 = vpop.f32.mrb[0].mxu0
      %2827 = vmatprep.mubr.f32.mxu0 0.0
      %2828 = vmatmul.mubr.f32.gmra.mrb[0].mxu0 %v2620
      %v2829 = vpop.f32.mrb[0].mxu0
      %v2830 = vadd.f32 0.0, %v2829
      %v2831 = vpop.f32.mrb[0].mxu0
      %2832 = vmatprep.mubr.f32.mxu0 0.0
      %2833 = vmatmul.mubr.f32.gmra.mrb[0].mxu0 %v2623
      %v2834 = vpop.f32.mrb[0].mxu0
      %v2835 = vadd.f32 0.0, %v2834
      %v2836 = vpop.f32.mrb[0].mxu0
      %2837 = vmatprep.mubr.f32.mxu0 0.0
      %2838 = vmatmul.mubr.f32.gmra.mrb[0].mxu0 %v2626
      %v2839 = vpop.f32.mrb[0].mxu0
      %v2840 = vadd.f32 0.0, %v2839
      %v2841 = vpop.f32.mrb[0].mxu0
      %2842 = vmatprep.mubr.f32.mxu0 0.0
      %2843 = vmatmul.mubr.f32.gmra.mrb[0].mxu0 %v2629
      %v2844 = vpop.f32.mrb[0].mxu0
      %v2845 = vadd.f32 0.0, %v2844
      %v2846 = vpop.f32.mrb[0].mxu0
      %2847 = vmatprep.mubr.f32.mxu0 0.0
      %2848 = vmatmul.mubr.f32.gmra.mrb[0].mxu0 %v2632
      %v2849 = vpop.f32.mrb[0].mxu0
      %v2850 = vadd.f32 0.0, %v2849
      %v2851 = vpop.f32.mrb[0].mxu0
      %2852 = vmatprep.mubr.f32.mxu0 0.0
      %2853 = vmatmul.mubr.f32.gmra.mrb[0].mxu0 %v2635
      %v2854 = vpop.f32.mrb[0].mxu0
      %v2855 = vadd.f32 0.0, %v2854
      %v2856 = vpop.f32.mrb[0].mxu0
      %2857 = vmatprep.mubr.f32.mxu0 0.0
      %2858 = vmatmul.mubr.f32.gmra.mrb[0].mxu0 %v2638
      %v2859 = vpop.f32.mrb[0].mxu0
      %v2860 = vadd.f32 0.0, %v2859
      %v2861 = vpop.f32.mrb[0].mxu0
      %2862 = vmatprep.mubr.f32.mxu0 0.0
      %2863 = vmatmul.mubr.f32.gmra.mrb[0].mxu0 %v2641
      %v2864 = vpop.f32.mrb[0].mxu0
      %v2865 = vadd.f32 0.0, %v2864
      %v2866 = vpop.f32.mrb[0].mxu0
      %2867 = vmatprep.mubr.f32.mxu0 0.0
      %2868 = vmatmul.mubr.f32.gmra.mrb[0].mxu0 %v2644
      %v2869 = vpop.f32.mrb[0].mxu0
      %v2870 = vadd.f32 0.0, %v2869
      %v2871 = vpop.f32.mrb[0].mxu0
      %2872 = vmatprep.mubr.f32.mxu0 0.0
      %2873 = vmatmul.mubr.f32.gmra.mrb[0].mxu0 %v2647
      %v2874 = vpop.f32.mrb[0].mxu0
      %v2875 = vadd.f32 0.0, %v2874
      %v2876 = vpop.f32.mrb[0].mxu0
      %2877 = vmatprep.mubr.f32.mxu0 0.0
      %2878 = vmatmul.mubr.f32.gmra.mrb[0].mxu0 %v2650
      %v2879 = vpop.f32.mrb[0].mxu0
      %v2880 = vadd.f32 0.0, %v2879
      %v2881 = vpop.f32.mrb[0].mxu0
      %2882 = vmatprep.mubr.f32.mxu0 0.0
      %2883 = vmatmul.mubr.f32.gmra.mrb[0].mxu0 %v2653
      %v2884 = vpop.f32.mrb[0].mxu0
      %v2885 = vadd.f32 0.0, %v2884
      %v2886 = vpop.f32.mrb[0].mxu0
      %2887 = vmatprep.mubr.f32.mxu0 0.0
      %2888 = vmatmul.mubr.f32.gmra.mrb[0].mxu0 %v2656
      %v2889 = vpop.f32.mrb[0].mxu0
      %v2890 = vadd.f32 0.0, %v2889
      %v2891 = vpop.f32.mrb[0].mxu0
      %2892 = vmatprep.mubr.f32.mxu0 0.0
      %2893 = vmatmul.mubr.f32.gmra.mrb[0].mxu0 %v2659
      %v2894 = vpop.f32.mrb[0].mxu0
      %v2895 = vadd.f32 0.0, %v2894
      %v2896 = vpop.f32.mrb[0].mxu0
      %2897 = vmatprep.mubr.f32.mxu0 0.0
      %2898 = vmatmul.mubr.f32.gmra.mrb[0].mxu0 %v2662
      %v2899 = vpop.f32.mrb[0].mxu0
      %v2900 = vadd.f32 0.0, %v2899
      %v2901 = vpop.f32.mrb[0].mxu0
      %2902 = vmatprep.mubr.f32.mxu0 0.0
      %2903 = vmatmul.mubr.f32.gmra.mrb[0].mxu0 %v2665
      %v2904 = vpop.f32.mrb[0].mxu0
      %v2905 = vadd.f32 0.0, %v2904
      %v2906 = vpop.f32.mrb[0].mxu0
      %2907 = vmatprep.mubr.f32.mxu0 0.0
      %2908 = vmatmul.mubr.f32.gmra.mrb[0].mxu0 %v2668
      %v2909 = vpop.f32.mrb[0].mxu0
      %v2910 = vadd.f32 0.0, %v2909
      %v2911 = vpop.f32.mrb[0].mxu0
      %2912 = vmatprep.mubr.f32.mxu0 0.0
      %2913 = vmatmul.mubr.f32.gmra.mrb[0].mxu0 %v2671
      %v2914 = vpop.f32.mrb[0].mxu0
      %v2915 = vadd.f32 0.0, %v2914
      %v2916 = vpop.f32.mrb[0].mxu0
      %2917 = vdwg.mxu0
      %v2918 = vadd.f32 %v2491, %v2740
      %v2919 = vadd.f32 %v2492, %v2745
      %v2920 = vadd.f32 %v2493, %v2750
      %v2921 = vadd.f32 %v2494, %v2755
      %v2922 = vadd.f32 %v2495, %v2760
      %v2923 = vadd.f32 %v2496, %v2765
      %v2924 = vadd.f32 %v2497, %v2770
      %v2925 = vadd.f32 %v2498, %v2775
      %v2926 = vadd.f32 %v2499, %v2780
      %v2927 = vadd.f32 %v2500, %v2785
      %v2928 = vadd.f32 %v2501, %v2790
      %v2929 = vadd.f32 %v2502, %v2795
      %v2930 = vadd.f32 %v2503, %v2800
      %v2931 = vadd.f32 %v2504, %v2805
      %v2932 = vadd.f32 %v2505, %v2810
      %v2933 = vadd.f32 %v2506, %v2815
      %v2934 = vadd.f32 %v2507, %v2820
      %v2935 = vadd.f32 %v2508, %v2825
      %v2936 = vadd.f32 %v2509, %v2830
      %v2937 = vadd.f32 %v2510, %v2835
      %v2938 = vadd.f32 %v2511, %v2840
      %v2939 = vadd.f32 %v2512, %v2845
      %v2940 = vadd.f32 %v2513, %v2850
      %v2941 = vadd.f32 %v2514, %v2855
      %v2942 = vadd.f32 %v2515, %v2860
      %v2943 = vadd.f32 %v2516, %v2865
      %v2944 = vadd.f32 %v2517, %v2870
      %v2945 = vadd.f32 %v2518, %v2875
      %v2946 = vadd.f32 %v2519, %v2880
      %v2947 = vadd.f32 %v2520, %v2885
      %v2948 = vadd.f32 %v2521, %v2890
      %v2949 = vadd.f32 %v2522, %v2895
      %v2950 = vadd.f32 %v2523, %v2900
      %v2951 = vadd.f32 %v2524, %v2905
      %v2952 = vadd.f32 %v2525, %v2910
      %v2953 = vadd.f32 %v2526, %v2915
      %v2954 = vld [vmem:[%s460 + $0x24] sm:$0xff]
      %v2955 = vld [vmem:[%s460 + $0x2c] sm:$0xff]
      %v2956 = vld [vmem:[%s460 + $0x34] sm:$0xff]
      %v2957 = vld [vmem:[%s460 + $0x3c] sm:$0xff]
      %v2958 = vld [vmem:[%s460 + $0x44] sm:$0xff]
      %v2959 = vld [vmem:[%s460 + $0x4c] sm:$0xff]
      %v2960 = vld [vmem:[%s460 + $0x54] sm:$0xff]
      %v2961 = vld [vmem:[%s460 + $0x5c] sm:$0xff]
      %v2962 = vld [vmem:[%s460 + $0x64] sm:$0xff]
      %v2963 = vld [vmem:[%s460 + $0x6c] sm:$0xff]
      %v2964 = vld [vmem:[%s460 + $0x74] sm:$0xff]
      %v2965 = vld [vmem:[%s460 + $0x7c] sm:$0xff]
      %v2966 = vld [vmem:[%s460 + $0x84] sm:$0xff]
      %v2967 = vld [vmem:[%s460 + $0x8c] sm:$0xff]
      %v2968 = vld [vmem:[%s460 + $0x94] sm:$0xff]
      %v2969 = vld [vmem:[%s460 + $0x9c] sm:$0xff]
      %v2970 = vld [vmem:[%s460 + $0xa4] sm:$0xff]
      %v2971 = vld [vmem:[%s460 + $0xac] sm:$0xff]
      %v2972 = vld [vmem:[%s460 + $0xb4] sm:$0xff]
      %v2973 = vld [vmem:[%s460 + $0xbc] sm:$0xff]
      %v2974 = vld [vmem:[%s460 + $0xc4] sm:$0xff]
      %v2975 = vld [vmem:[%s460 + $0xcc] sm:$0xff]
      %v2976 = vld [vmem:[%s460 + $0xd4] sm:$0xff]
      %v2977 = vld [vmem:[%s460 + $0xdc] sm:$0xff]
      %v2978 = vld [vmem:[%s460 + $0xe4] sm:$0xff]
      %v2979 = vld [vmem:[%s460 + $0xec] sm:$0xff]
      %v2980 = vld [vmem:[%s460 + $0xf4] sm:$0xff]
      %v2981 = vld [vmem:[%s460 + $0xfc] sm:$0xff]
      %v2982 = vld [vmem:[%s460 + $0x104] sm:$0xff]
      %v2983 = vld [vmem:[%s460 + $0x10c] sm:$0xff]
      %v2984 = vld [vmem:[%s460 + $0x114] sm:$0xff]
      %v2985 = vld [vmem:[%s460 + $0x11c] sm:$0xff]
      %v2986 = vld [vmem:[%s460 + $0x124] sm:$0xff]
      %v2987 = vld [vmem:[%s460 + $0x12c] sm:$0xff]
      %v2988 = vld [vmem:[%s460 + $0x134] sm:$0xff]
      %v2989 = vld [vmem:[%s460 + $0x13c] sm:$0xff]
      %s2990 = scalar_lea.vmem %s1, 48
      %v2991 = vld [vmem:[%s2990] sm:$0xff]
      %v2993 = vsel %vm539, %v2954, 0
      %v2996 = vsel %vm539, %v2955, 0
      %v2999 = vsel %vm539, %v2956, 0
      %v3002 = vsel %vm539, %v2957, 0
      %v3005 = vsel %vm539, %v2958, 0
      %v3008 = vsel %vm539, %v2959, 0
      %v3011 = vsel %vm539, %v2960, 0
      %v3014 = vsel %vm539, %v2961, 0
      %v3017 = vsel %vm539, %v2962, 0
      %v3020 = vsel %vm539, %v2963, 0
      %v3023 = vsel %vm539, %v2964, 0
      %v3026 = vsel %vm539, %v2965, 0
      %v3029 = vsel %vm539, %v2966, 0
      %v3032 = vsel %vm539, %v2967, 0
      %v3035 = vsel %vm539, %v2968, 0
      %v3038 = vsel %vm539, %v2969, 0
      %v3041 = vsel %vm539, %v2970, 0
      %v3044 = vsel %vm539, %v2971, 0
      %v3047 = vsel %vm539, %v2972, 0
      %v3050 = vsel %vm539, %v2973, 0
      %v3053 = vsel %vm539, %v2974, 0
      %v3056 = vsel %vm539, %v2975, 0
      %v3059 = vsel %vm539, %v2976, 0
      %v3062 = vsel %vm539, %v2977, 0
      %v3065 = vsel %vm539, %v2978, 0
      %v3068 = vsel %vm539, %v2979, 0
      %v3071 = vsel %vm539, %v2980, 0
      %v3074 = vsel %vm539, %v2981, 0
      %v3077 = vsel %vm539, %v2982, 0
      %v3080 = vsel %vm539, %v2983, 0
      %v3083 = vsel %vm539, %v2984, 0
      %v3086 = vsel %vm539, %v2985, 0
      %v3089 = vsel %vm539, %v2986, 0
      %v3092 = vsel %vm539, %v2987, 0
      %v3095 = vsel %vm539, %v2988, 0
      %v3098 = vsel %vm539, %v2989, 0
      %3100 = vmatprep.subr.mxu0 0.0
      %3101 = vmatpush1.msra.mxu0 %v2991
      %3102 = vmatprep.subr.mxu0 0.0
      %3103 = vmatpush1.msra.mxu0 0.0
      %3104 = vmatprep.subr.mxu0 0.0
      %3105 = vmatpush1.msra.mxu0 0.0
      %3106 = vmatprep.subr.mxu0 0.0
      %3107 = vmatpush1.msra.mxu0 0.0
      %3108 = vmatprep.subr.mxu0 0.0
      %3109 = vmatpush1.msra.mxu0 0.0
      %3110 = vmatprep.subr.mxu0 0.0
      %3111 = vmatpush1.msra.mxu0 0.0
      %3112 = vmatprep.subr.mxu0 0.0
      %3113 = vmatpush1.msra.mxu0 0.0
      %3114 = vmatprep.subr.mxu0 0.0
      %3115 = vmatpush1.msra.mxu0 0.0
      %3116 = vmatprep.subr.mxu0 0.0
      %3117 = vmatpush1.msra.mxu0 0.0
      %3118 = vmatprep.subr.mxu0 0.0
      %3119 = vmatpush1.msra.mxu0 0.0
      %3120 = vmatprep.subr.mxu0 0.0
      %3121 = vmatpush1.msra.mxu0 0.0
      %3122 = vmatprep.subr.mxu0 0.0
      %3123 = vmatpush1.msra.mxu0 0.0
      %3124 = vmatprep.subr.mxu0 0.0
      %3125 = vmatpush1.msra.mxu0 0.0
      %3126 = vmatprep.subr.mxu0 0.0
      %3127 = vmatpush1.msra.mxu0 0.0
      %3128 = vmatprep.subr.mxu0 0.0
      %3129 = vmatpush1.msra.mxu0 0.0
      %3130 = vmatprep.subr.mxu0 0.0
      %3131 = vmatpush1.msra.mxu0 0.0
      %3132 = vmatprep.subr.mxu0 0.0
      %3133 = vmatpush1.msra.mxu0 0.0
      %3134 = vmatprep.subr.mxu0 0.0
      %3135 = vmatpush1.msra.mxu0 0.0
      %3136 = vmatprep.subr.mxu0 0.0
      %3137 = vmatpush1.msra.mxu0 0.0
      %3138 = vmatprep.subr.mxu0 0.0
      %3139 = vmatpush1.msra.mxu0 0.0
      %3140 = vmatprep.subr.mxu0 0.0
      %3141 = vmatpush1.msra.mxu0 0.0
      %3142 = vmatprep.subr.mxu0 0.0
      %3143 = vmatpush1.msra.mxu0 0.0
      %3144 = vmatprep.subr.mxu0 0.0
      %3145 = vmatpush1.msra.mxu0 0.0
      %3146 = vmatprep.subr.mxu0 0.0
      %3147 = vmatpush1.msra.mxu0 0.0
      %3148 = vmatprep.subr.mxu0 0.0
      %3149 = vmatpush1.msra.mxu0 0.0
      %3150 = vmatprep.subr.mxu0 0.0
      %3151 = vmatpush1.msra.mxu0 0.0
      %3152 = vmatprep.subr.mxu0 0.0
      %3153 = vmatpush1.msra.mxu0 0.0
      %3154 = vmatprep.subr.mxu0 0.0
      %3155 = vmatpush1.msra.mxu0 0.0
      %3156 = vmatprep.subr.mxu0 0.0
      %3157 = vmatpush1.msra.mxu0 0.0
      %3158 = vmatprep.subr.mxu0 0.0
      %3159 = vmatpush1.msra.mxu0 0.0
      %3160 = vmatprep.subr.mxu0 0.0
      %3161 = vmatpush1.msra.mxu0 0.0
      %3162 = vmatprep.subr.mxu0 0.0
      %3163 = vmatpush1.msra.mxu0 0.0
      %3164 = vmatprep.mubr.f32.mxu0 0.0
      %3165 = vmatmul.mubr.f32.gmra.mrb[0].mxu0 %v2993
      %v3166 = vpop.f32.mrb[0].mxu0
      %v3167 = vadd.f32 0.0, %v3166
      %v3168 = vpop.f32.mrb[0].mxu0
      %3169 = vmatprep.mubr.f32.mxu0 0.0
      %3170 = vmatmul.mubr.f32.gmra.mrb[0].mxu0 %v2996
      %v3171 = vpop.f32.mrb[0].mxu0
      %v3172 = vadd.f32 0.0, %v3171
      %v3173 = vpop.f32.mrb[0].mxu0
      %3174 = vmatprep.mubr.f32.mxu0 0.0
      %3175 = vmatmul.mubr.f32.gmra.mrb[0].mxu0 %v2999
      %v3176 = vpop.f32.mrb[0].mxu0
      %v3177 = vadd.f32 0.0, %v3176
      %v3178 = vpop.f32.mrb[0].mxu0
      %3179 = vmatprep.mubr.f32.mxu0 0.0
      %3180 = vmatmul.mubr.f32.gmra.mrb[0].mxu0 %v3002
      %v3181 = vpop.f32.mrb[0].mxu0
      %v3182 = vadd.f32 0.0, %v3181
      %v3183 = vpop.f32.mrb[0].mxu0
      %3184 = vmatprep.mubr.f32.mxu0 0.0
      %3185 = vmatmul.mubr.f32.gmra.mrb[0].mxu0 %v3005
      %v3186 = vpop.f32.mrb[0].mxu0
      %v3187 = vadd.f32 0.0, %v3186
      %v3188 = vpop.f32.mrb[0].mxu0
      %3189 = vmatprep.mubr.f32.mxu0 0.0
      %3190 = vmatmul.mubr.f32.gmra.mrb[0].mxu0 %v3008
      %v3191 = vpop.f32.mrb[0].mxu0
      %v3192 = vadd.f32 0.0, %v3191
      %v3193 = vpop.f32.mrb[0].mxu0
      %3194 = vmatprep.mubr.f32.mxu0 0.0
      %3195 = vmatmul.mubr.f32.gmra.mrb[0].mxu0 %v3011
      %v3196 = vpop.f32.mrb[0].mxu0
      %v3197 = vadd.f32 0.0, %v3196
      %v3198 = vpop.f32.mrb[0].mxu0
      %3199 = vmatprep.mubr.f32.mxu0 0.0
      %3200 = vmatmul.mubr.f32.gmra.mrb[0].mxu0 %v3014
      %v3201 = vpop.f32.mrb[0].mxu0
      %v3202 = vadd.f32 0.0, %v3201
      %v3203 = vpop.f32.mrb[0].mxu0
      %3204 = vmatprep.mubr.f32.mxu0 0.0
      %3205 = vmatmul.mubr.f32.gmra.mrb[0].mxu0 %v3017
      %v3206 = vpop.f32.mrb[0].mxu0
      %v3207 = vadd.f32 0.0, %v3206
      %v3208 = vpop.f32.mrb[0].mxu0
      %3209 = vmatprep.mubr.f32.mxu0 0.0
      %3210 = vmatmul.mubr.f32.gmra.mrb[0].mxu0 %v3020
      %v3211 = vpop.f32.mrb[0].mxu0
      %v3212 = vadd.f32 0.0, %v3211
      %v3213 = vpop.f32.mrb[0].mxu0
      %3214 = vmatprep.mubr.f32.mxu0 0.0
      %3215 = vmatmul.mubr.f32.gmra.mrb[0].mxu0 %v3023
      %v3216 = vpop.f32.mrb[0].mxu0
      %v3217 = vadd.f32 0.0, %v3216
      %v3218 = vpop.f32.mrb[0].mxu0
      %3219 = vmatprep.mubr.f32.mxu0 0.0
      %3220 = vmatmul.mubr.f32.gmra.mrb[0].mxu0 %v3026
      %v3221 = vpop.f32.mrb[0].mxu0
      %v3222 = vadd.f32 0.0, %v3221
      %v3223 = vpop.f32.mrb[0].mxu0
      %3224 = vmatprep.mubr.f32.mxu0 0.0
      %3225 = vmatmul.mubr.f32.gmra.mrb[0].mxu0 %v3029
      %v3226 = vpop.f32.mrb[0].mxu0
      %v3227 = vadd.f32 0.0, %v3226
      %v3228 = vpop.f32.mrb[0].mxu0
      %3229 = vmatprep.mubr.f32.mxu0 0.0
      %3230 = vmatmul.mubr.f32.gmra.mrb[0].mxu0 %v3032
      %v3231 = vpop.f32.mrb[0].mxu0
      %v3232 = vadd.f32 0.0, %v3231
      %v3233 = vpop.f32.mrb[0].mxu0
      %3234 = vmatprep.mubr.f32.mxu0 0.0
      %3235 = vmatmul.mubr.f32.gmra.mrb[0].mxu0 %v3035
      %v3236 = vpop.f32.mrb[0].mxu0
      %v3237 = vadd.f32 0.0, %v3236
      %v3238 = vpop.f32.mrb[0].mxu0
      %3239 = vmatprep.mubr.f32.mxu0 0.0
      %3240 = vmatmul.mubr.f32.gmra.mrb[0].mxu0 %v3038
      %v3241 = vpop.f32.mrb[0].mxu0
      %v3242 = vadd.f32 0.0, %v3241
      %v3243 = vpop.f32.mrb[0].mxu0
      %3244 = vmatprep.mubr.f32.mxu0 0.0
      %3245 = vmatmul.mubr.f32.gmra.mrb[0].mxu0 %v3041
      %v3246 = vpop.f32.mrb[0].mxu0
      %v3247 = vadd.f32 0.0, %v3246
      %v3248 = vpop.f32.mrb[0].mxu0
      %3249 = vmatprep.mubr.f32.mxu0 0.0
      %3250 = vmatmul.mubr.f32.gmra.mrb[0].mxu0 %v3044
      %v3251 = vpop.f32.mrb[0].mxu0
      %v3252 = vadd.f32 0.0, %v3251
      %v3253 = vpop.f32.mrb[0].mxu0
      %3254 = vmatprep.mubr.f32.mxu0 0.0
      %3255 = vmatmul.mubr.f32.gmra.mrb[0].mxu0 %v3047
      %v3256 = vpop.f32.mrb[0].mxu0
      %v3257 = vadd.f32 0.0, %v3256
      %v3258 = vpop.f32.mrb[0].mxu0
      %3259 = vmatprep.mubr.f32.mxu0 0.0
      %3260 = vmatmul.mubr.f32.gmra.mrb[0].mxu0 %v3050
      %v3261 = vpop.f32.mrb[0].mxu0
      %v3262 = vadd.f32 0.0, %v3261
      %v3263 = vpop.f32.mrb[0].mxu0
      %3264 = vmatprep.mubr.f32.mxu0 0.0
      %3265 = vmatmul.mubr.f32.gmra.mrb[0].mxu0 %v3053
      %v3266 = vpop.f32.mrb[0].mxu0
      %v3267 = vadd.f32 0.0, %v3266
      %v3268 = vpop.f32.mrb[0].mxu0
      %3269 = vmatprep.mubr.f32.mxu0 0.0
      %3270 = vmatmul.mubr.f32.gmra.mrb[0].mxu0 %v3056
      %v3271 = vpop.f32.mrb[0].mxu0
      %v3272 = vadd.f32 0.0, %v3271
      %v3273 = vpop.f32.mrb[0].mxu0
      %3274 = vmatprep.mubr.f32.mxu0 0.0
      %3275 = vmatmul.mubr.f32.gmra.mrb[0].mxu0 %v3059
      %v3276 = vpop.f32.mrb[0].mxu0
      %v3277 = vadd.f32 0.0, %v3276
      %v3278 = vpop.f32.mrb[0].mxu0
      %3279 = vmatprep.mubr.f32.mxu0 0.0
      %3280 = vmatmul.mubr.f32.gmra.mrb[0].mxu0 %v3062
      %v3281 = vpop.f32.mrb[0].mxu0
      %v3282 = vadd.f32 0.0, %v3281
      %v3283 = vpop.f32.mrb[0].mxu0
      %3284 = vmatprep.mubr.f32.mxu0 0.0
      %3285 = vmatmul.mubr.f32.gmra.mrb[0].mxu0 %v3065
      %v3286 = vpop.f32.mrb[0].mxu0
      %v3287 = vadd.f32 0.0, %v3286
      %v3288 = vpop.f32.mrb[0].mxu0
      %3289 = vmatprep.mubr.f32.mxu0 0.0
      %3290 = vmatmul.mubr.f32.gmra.mrb[0].mxu0 %v3068
      %v3291 = vpop.f32.mrb[0].mxu0
      %v3292 = vadd.f32 0.0, %v3291
      %v3293 = vpop.f32.mrb[0].mxu0
      %3294 = vmatprep.mubr.f32.mxu0 0.0
      %3295 = vmatmul.mubr.f32.gmra.mrb[0].mxu0 %v3071
      %v3296 = vpop.f32.mrb[0].mxu0
      %v3297 = vadd.f32 0.0, %v3296
      %v3298 = vpop.f32.mrb[0].mxu0
      %3299 = vmatprep.mubr.f32.mxu0 0.0
      %3300 = vmatmul.mubr.f32.gmra.mrb[0].mxu0 %v3074
      %v3301 = vpop.f32.mrb[0].mxu0
      %v3302 = vadd.f32 0.0, %v3301
      %v3303 = vpop.f32.mrb[0].mxu0
      %3304 = vmatprep.mubr.f32.mxu0 0.0
      %3305 = vmatmul.mubr.f32.gmra.mrb[0].mxu0 %v3077
      %v3306 = vpop.f32.mrb[0].mxu0
      %v3307 = vadd.f32 0.0, %v3306
      %v3308 = vpop.f32.mrb[0].mxu0
      %3309 = vmatprep.mubr.f32.mxu0 0.0
      %3310 = vmatmul.mubr.f32.gmra.mrb[0].mxu0 %v3080
      %v3311 = vpop.f32.mrb[0].mxu0
      %v3312 = vadd.f32 0.0, %v3311
      %v3313 = vpop.f32.mrb[0].mxu0
      %3314 = vmatprep.mubr.f32.mxu0 0.0
      %3315 = vmatmul.mubr.f32.gmra.mrb[0].mxu0 %v3083
      %v3316 = vpop.f32.mrb[0].mxu0
      %v3317 = vadd.f32 0.0, %v3316
      %v3318 = vpop.f32.mrb[0].mxu0
      %3319 = vmatprep.mubr.f32.mxu0 0.0
      %3320 = vmatmul.mubr.f32.gmra.mrb[0].mxu0 %v3086
      %v3321 = vpop.f32.mrb[0].mxu0
      %v3322 = vadd.f32 0.0, %v3321
      %v3323 = vpop.f32.mrb[0].mxu0
      %3324 = vmatprep.mubr.f32.mxu0 0.0
      %3325 = vmatmul.mubr.f32.gmra.mrb[0].mxu0 %v3089
      %v3326 = vpop.f32.mrb[0].mxu0
      %v3327 = vadd.f32 0.0, %v3326
      %v3328 = vpop.f32.mrb[0].mxu0
      %3329 = vmatprep.mubr.f32.mxu0 0.0
      %3330 = vmatmul.mubr.f32.gmra.mrb[0].mxu0 %v3092
      %v3331 = vpop.f32.mrb[0].mxu0
      %v3332 = vadd.f32 0.0, %v3331
      %v3333 = vpop.f32.mrb[0].mxu0
      %3334 = vmatprep.mubr.f32.mxu0 0.0
      %3335 = vmatmul.mubr.f32.gmra.mrb[0].mxu0 %v3095
      %v3336 = vpop.f32.mrb[0].mxu0
      %v3337 = vadd.f32 0.0, %v3336
      %v3338 = vpop.f32.mrb[0].mxu0
      %3339 = vmatprep.mubr.f32.mxu0 0.0
      %3340 = vmatmul.mubr.f32.gmra.mrb[0].mxu0 %v3098
      %v3341 = vpop.f32.mrb[0].mxu0
      %v3342 = vadd.f32 0.0, %v3341
      %v3343 = vpop.f32.mrb[0].mxu0
      %3344 = vdwg.mxu0
      %v3345 = vadd.f32 %v2918, %v3167
      %v3346 = vadd.f32 %v2919, %v3172
      %v3347 = vadd.f32 %v2920, %v3177
      %v3348 = vadd.f32 %v2921, %v3182
      %v3349 = vadd.f32 %v2922, %v3187
      %v3350 = vadd.f32 %v2923, %v3192
      %v3351 = vadd.f32 %v2924, %v3197
      %v3352 = vadd.f32 %v2925, %v3202
      %v3353 = vadd.f32 %v2926, %v3207
      %v3354 = vadd.f32 %v2927, %v3212
      %v3355 = vadd.f32 %v2928, %v3217
      %v3356 = vadd.f32 %v2929, %v3222
      %v3357 = vadd.f32 %v2930, %v3227
      %v3358 = vadd.f32 %v2931, %v3232
      %v3359 = vadd.f32 %v2932, %v3237
      %v3360 = vadd.f32 %v2933, %v3242
      %v3361 = vadd.f32 %v2934, %v3247
      %v3362 = vadd.f32 %v2935, %v3252
      %v3363 = vadd.f32 %v2936, %v3257
      %v3364 = vadd.f32 %v2937, %v3262
      %v3365 = vadd.f32 %v2938, %v3267
      %v3366 = vadd.f32 %v2939, %v3272
      %v3367 = vadd.f32 %v2940, %v3277
      %v3368 = vadd.f32 %v2941, %v3282
      %v3369 = vadd.f32 %v2942, %v3287
      %v3370 = vadd.f32 %v2943, %v3292
      %v3371 = vadd.f32 %v2944, %v3297
      %v3372 = vadd.f32 %v2945, %v3302
      %v3373 = vadd.f32 %v2946, %v3307
      %v3374 = vadd.f32 %v2947, %v3312
      %v3375 = vadd.f32 %v2948, %v3317
      %v3376 = vadd.f32 %v2949, %v3322
      %v3377 = vadd.f32 %v2950, %v3327
      %v3378 = vadd.f32 %v2951, %v3332
      %v3379 = vadd.f32 %v2952, %v3337
      %v3380 = vadd.f32 %v2953, %v3342
      %v3381 = vld [vmem:[%s460 + $0x25] sm:$0xff]
      %v3382 = vld [vmem:[%s460 + $0x2d] sm:$0xff]
      %v3383 = vld [vmem:[%s460 + $0x35] sm:$0xff]
      %v3384 = vld [vmem:[%s460 + $0x3d] sm:$0xff]
      %v3385 = vld [vmem:[%s460 + $0x45] sm:$0xff]
      %v3386 = vld [vmem:[%s460 + $0x4d] sm:$0xff]
      %v3387 = vld [vmem:[%s460 + $0x55] sm:$0xff]
      %v3388 = vld [vmem:[%s460 + $0x5d] sm:$0xff]
      %v3389 = vld [vmem:[%s460 + $0x65] sm:$0xff]
      %v3390 = vld [vmem:[%s460 + $0x6d] sm:$0xff]
      %v3391 = vld [vmem:[%s460 + $0x75] sm:$0xff]
      %v3392 = vld [vmem:[%s460 + $0x7d] sm:$0xff]
      %v3393 = vld [vmem:[%s460 + $0x85] sm:$0xff]
      %v3394 = vld [vmem:[%s460 + $0x8d] sm:$0xff]
      %v3395 = vld [vmem:[%s460 + $0x95] sm:$0xff]
      %v3396 = vld [vmem:[%s460 + $0x9d] sm:$0xff]
      %v3397 = vld [vmem:[%s460 + $0xa5] sm:$0xff]
      %v3398 = vld [vmem:[%s460 + $0xad] sm:$0xff]
      %v3399 = vld [vmem:[%s460 + $0xb5] sm:$0xff]
      %v3400 = vld [vmem:[%s460 + $0xbd] sm:$0xff]
      %v3401 = vld [vmem:[%s460 + $0xc5] sm:$0xff]
      %v3402 = vld [vmem:[%s460 + $0xcd] sm:$0xff]
      %v3403 = vld [vmem:[%s460 + $0xd5] sm:$0xff]
      %v3404 = vld [vmem:[%s460 + $0xdd] sm:$0xff]
      %v3405 = vld [vmem:[%s460 + $0xe5] sm:$0xff]
      %v3406 = vld [vmem:[%s460 + $0xed] sm:$0xff]
      %v3407 = vld [vmem:[%s460 + $0xf5] sm:$0xff]
      %v3408 = vld [vmem:[%s460 + $0xfd] sm:$0xff]
      %v3409 = vld [vmem:[%s460 + $0x105] sm:$0xff]
      %v3410 = vld [vmem:[%s460 + $0x10d] sm:$0xff]
      %v3411 = vld [vmem:[%s460 + $0x115] sm:$0xff]
      %v3412 = vld [vmem:[%s460 + $0x11d] sm:$0xff]
      %v3413 = vld [vmem:[%s460 + $0x125] sm:$0xff]
      %v3414 = vld [vmem:[%s460 + $0x12d] sm:$0xff]
      %v3415 = vld [vmem:[%s460 + $0x135] sm:$0xff]
      %v3416 = vld [vmem:[%s460 + $0x13d] sm:$0xff]
      %s3417 = scalar_lea.vmem %s1, 56
      %v3418 = vld [vmem:[%s3417] sm:$0xff]
      %v3420 = vsel %vm539, %v3381, 0
      %v3423 = vsel %vm539, %v3382, 0
      %v3426 = vsel %vm539, %v3383, 0
      %v3429 = vsel %vm539, %v3384, 0
      %v3432 = vsel %vm539, %v3385, 0
      %v3435 = vsel %vm539, %v3386, 0
      %v3438 = vsel %vm539, %v3387, 0
      %v3441 = vsel %vm539, %v3388, 0
      %v3444 = vsel %vm539, %v3389, 0
      %v3447 = vsel %vm539, %v3390, 0
      %v3450 = vsel %vm539, %v3391, 0
      %v3453 = vsel %vm539, %v3392, 0
      %v3456 = vsel %vm539, %v3393, 0
      %v3459 = vsel %vm539, %v3394, 0
      %v3462 = vsel %vm539, %v3395, 0
      %v3465 = vsel %vm539, %v3396, 0
      %v3468 = vsel %vm539, %v3397, 0
      %v3471 = vsel %vm539, %v3398, 0
      %v3474 = vsel %vm539, %v3399, 0
      %v3477 = vsel %vm539, %v3400, 0
      %v3480 = vsel %vm539, %v3401, 0
      %v3483 = vsel %vm539, %v3402, 0
      %v3486 = vsel %vm539, %v3403, 0
      %v3489 = vsel %vm539, %v3404, 0
      %v3492 = vsel %vm539, %v3405, 0
      %v3495 = vsel %vm539, %v3406, 0
      %v3498 = vsel %vm539, %v3407, 0
      %v3501 = vsel %vm539, %v3408, 0
      %v3504 = vsel %vm539, %v3409, 0
      %v3507 = vsel %vm539, %v3410, 0
      %v3510 = vsel %vm539, %v3411, 0
      %v3513 = vsel %vm539, %v3412, 0
      %v3516 = vsel %vm539, %v3413, 0
      %v3519 = vsel %vm539, %v3414, 0
      %v3522 = vsel %vm539, %v3415, 0
      %v3525 = vsel %vm539, %v3416, 0
      %3527 = vmatprep.subr.mxu0 0.0
      %3528 = vmatpush1.msra.mxu0 %v3418
      %3529 = vmatprep.subr.mxu0 0.0
      %3530 = vmatpush1.msra.mxu0 0.0
      %3531 = vmatprep.subr.mxu0 0.0
      %3532 = vmatpush1.msra.mxu0 0.0
      %3533 = vmatprep.subr.mxu0 0.0
      %3534 = vmatpush1.msra.mxu0 0.0
      %3535 = vmatprep.subr.mxu0 0.0
      %3536 = vmatpush1.msra.mxu0 0.0
      %3537 = vmatprep.subr.mxu0 0.0
      %3538 = vmatpush1.msra.mxu0 0.0
      %3539 = vmatprep.subr.mxu0 0.0
      %3540 = vmatpush1.msra.mxu0 0.0
      %3541 = vmatprep.subr.mxu0 0.0
      %3542 = vmatpush1.msra.mxu0 0.0
      %3543 = vmatprep.subr.mxu0 0.0
      %3544 = vmatpush1.msra.mxu0 0.0
      %3545 = vmatprep.subr.mxu0 0.0
      %3546 = vmatpush1.msra.mxu0 0.0
      %3547 = vmatprep.subr.mxu0 0.0
      %3548 = vmatpush1.msra.mxu0 0.0
      %3549 = vmatprep.subr.mxu0 0.0
      %3550 = vmatpush1.msra.mxu0 0.0
      %3551 = vmatprep.subr.mxu0 0.0
      %3552 = vmatpush1.msra.mxu0 0.0
      %3553 = vmatprep.subr.mxu0 0.0
      %3554 = vmatpush1.msra.mxu0 0.0
      %3555 = vmatprep.subr.mxu0 0.0
      %3556 = vmatpush1.msra.mxu0 0.0
      %3557 = vmatprep.subr.mxu0 0.0
      %3558 = vmatpush1.msra.mxu0 0.0
      %3559 = vmatprep.subr.mxu0 0.0
      %3560 = vmatpush1.msra.mxu0 0.0
      %3561 = vmatprep.subr.mxu0 0.0
      %3562 = vmatpush1.msra.mxu0 0.0
      %3563 = vmatprep.subr.mxu0 0.0
      %3564 = vmatpush1.msra.mxu0 0.0
      %3565 = vmatprep.subr.mxu0 0.0
      %3566 = vmatpush1.msra.mxu0 0.0
      %3567 = vmatprep.subr.mxu0 0.0
      %3568 = vmatpush1.msra.mxu0 0.0
      %3569 = vmatprep.subr.mxu0 0.0
      %3570 = vmatpush1.msra.mxu0 0.0
      %3571 = vmatprep.subr.mxu0 0.0
      %3572 = vmatpush1.msra.mxu0 0.0
      %3573 = vmatprep.subr.mxu0 0.0
      %3574 = vmatpush1.msra.mxu0 0.0
      %3575 = vmatprep.subr.mxu0 0.0
      %3576 = vmatpush1.msra.mxu0 0.0
      %3577 = vmatprep.subr.mxu0 0.0
      %3578 = vmatpush1.msra.mxu0 0.0
      %3579 = vmatprep.subr.mxu0 0.0
      %3580 = vmatpush1.msra.mxu0 0.0
      %3581 = vmatprep.subr.mxu0 0.0
      %3582 = vmatpush1.msra.mxu0 0.0
      %3583 = vmatprep.subr.mxu0 0.0
      %3584 = vmatpush1.msra.mxu0 0.0
      %3585 = vmatprep.subr.mxu0 0.0
      %3586 = vmatpush1.msra.mxu0 0.0
      %3587 = vmatprep.subr.mxu0 0.0
      %3588 = vmatpush1.msra.mxu0 0.0
      %3589 = vmatprep.subr.mxu0 0.0
      %3590 = vmatpush1.msra.mxu0 0.0
      %3591 = vmatprep.mubr.f32.mxu0 0.0
      %3592 = vmatmul.mubr.f32.gmra.mrb[0].mxu0 %v3420
      %v3593 = vpop.f32.mrb[0].mxu0
      %v3594 = vadd.f32 0.0, %v3593
      %v3595 = vpop.f32.mrb[0].mxu0
      %3596 = vmatprep.mubr.f32.mxu0 0.0
      %3597 = vmatmul.mubr.f32.gmra.mrb[0].mxu0 %v3423
      %v3598 = vpop.f32.mrb[0].mxu0
      %v3599 = vadd.f32 0.0, %v3598
      %v3600 = vpop.f32.mrb[0].mxu0
      %3601 = vmatprep.mubr.f32.mxu0 0.0
      %3602 = vmatmul.mubr.f32.gmra.mrb[0].mxu0 %v3426
      %v3603 = vpop.f32.mrb[0].mxu0
      %v3604 = vadd.f32 0.0, %v3603
      %v3605 = vpop.f32.mrb[0].mxu0
      %3606 = vmatprep.mubr.f32.mxu0 0.0
      %3607 = vmatmul.mubr.f32.gmra.mrb[0].mxu0 %v3429
      %v3608 = vpop.f32.mrb[0].mxu0
      %v3609 = vadd.f32 0.0, %v3608
      %v3610 = vpop.f32.mrb[0].mxu0
      %3611 = vmatprep.mubr.f32.mxu0 0.0
      %3612 = vmatmul.mubr.f32.gmra.mrb[0].mxu0 %v3432
      %v3613 = vpop.f32.mrb[0].mxu0
      %v3614 = vadd.f32 0.0, %v3613
      %v3615 = vpop.f32.mrb[0].mxu0
      %3616 = vmatprep.mubr.f32.mxu0 0.0
      %3617 = vmatmul.mubr.f32.gmra.mrb[0].mxu0 %v3435
      %v3618 = vpop.f32.mrb[0].mxu0
      %v3619 = vadd.f32 0.0, %v3618
      %v3620 = vpop.f32.mrb[0].mxu0
      %3621 = vmatprep.mubr.f32.mxu0 0.0
      %3622 = vmatmul.mubr.f32.gmra.mrb[0].mxu0 %v3438
      %v3623 = vpop.f32.mrb[0].mxu0
      %v3624 = vadd.f32 0.0, %v3623
      %v3625 = vpop.f32.mrb[0].mxu0
      %3626 = vmatprep.mubr.f32.mxu0 0.0
      %3627 = vmatmul.mubr.f32.gmra.mrb[0].mxu0 %v3441
      %v3628 = vpop.f32.mrb[0].mxu0
      %v3629 = vadd.f32 0.0, %v3628
      %v3630 = vpop.f32.mrb[0].mxu0
      %3631 = vmatprep.mubr.f32.mxu0 0.0
      %3632 = vmatmul.mubr.f32.gmra.mrb[0].mxu0 %v3444
      %v3633 = vpop.f32.mrb[0].mxu0
      %v3634 = vadd.f32 0.0, %v3633
      %v3635 = vpop.f32.mrb[0].mxu0
      %3636 = vmatprep.mubr.f32.mxu0 0.0
      %3637 = vmatmul.mubr.f32.gmra.mrb[0].mxu0 %v3447
      %v3638 = vpop.f32.mrb[0].mxu0
      %v3639 = vadd.f32 0.0, %v3638
      %v3640 = vpop.f32.mrb[0].mxu0
      %3641 = vmatprep.mubr.f32.mxu0 0.0
      %3642 = vmatmul.mubr.f32.gmra.mrb[0].mxu0 %v3450
      %v3643 = vpop.f32.mrb[0].mxu0
      %v3644 = vadd.f32 0.0, %v3643
      %v3645 = vpop.f32.mrb[0].mxu0
      %3646 = vmatprep.mubr.f32.mxu0 0.0
      %3647 = vmatmul.mubr.f32.gmra.mrb[0].mxu0 %v3453
      %v3648 = vpop.f32.mrb[0].mxu0
      %v3649 = vadd.f32 0.0, %v3648
      %v3650 = vpop.f32.mrb[0].mxu0
      %3651 = vmatprep.mubr.f32.mxu0 0.0
      %3652 = vmatmul.mubr.f32.gmra.mrb[0].mxu0 %v3456
      %v3653 = vpop.f32.mrb[0].mxu0
      %v3654 = vadd.f32 0.0, %v3653
      %v3655 = vpop.f32.mrb[0].mxu0
      %3656 = vmatprep.mubr.f32.mxu0 0.0
      %3657 = vmatmul.mubr.f32.gmra.mrb[0].mxu0 %v3459
      %v3658 = vpop.f32.mrb[0].mxu0
      %v3659 = vadd.f32 0.0, %v3658
      %v3660 = vpop.f32.mrb[0].mxu0
      %3661 = vmatprep.mubr.f32.mxu0 0.0
      %3662 = vmatmul.mubr.f32.gmra.mrb[0].mxu0 %v3462
      %v3663 = vpop.f32.mrb[0].mxu0
      %v3664 = vadd.f32 0.0, %v3663
      %v3665 = vpop.f32.mrb[0].mxu0
      %3666 = vmatprep.mubr.f32.mxu0 0.0
      %3667 = vmatmul.mubr.f32.gmra.mrb[0].mxu0 %v3465
      %v3668 = vpop.f32.mrb[0].mxu0
      %v3669 = vadd.f32 0.0, %v3668
      %v3670 = vpop.f32.mrb[0].mxu0
      %3671 = vmatprep.mubr.f32.mxu0 0.0
      %3672 = vmatmul.mubr.f32.gmra.mrb[0].mxu0 %v3468
      %v3673 = vpop.f32.mrb[0].mxu0
      %v3674 = vadd.f32 0.0, %v3673
      %v3675 = vpop.f32.mrb[0].mxu0
      %3676 = vmatprep.mubr.f32.mxu0 0.0
      %3677 = vmatmul.mubr.f32.gmra.mrb[0].mxu0 %v3471
      %v3678 = vpop.f32.mrb[0].mxu0
      %v3679 = vadd.f32 0.0, %v3678
      %v3680 = vpop.f32.mrb[0].mxu0
      %3681 = vmatprep.mubr.f32.mxu0 0.0
      %3682 = vmatmul.mubr.f32.gmra.mrb[0].mxu0 %v3474
      %v3683 = vpop.f32.mrb[0].mxu0
      %v3684 = vadd.f32 0.0, %v3683
      %v3685 = vpop.f32.mrb[0].mxu0
      %3686 = vmatprep.mubr.f32.mxu0 0.0
      %3687 = vmatmul.mubr.f32.gmra.mrb[0].mxu0 %v3477
      %v3688 = vpop.f32.mrb[0].mxu0
      %v3689 = vadd.f32 0.0, %v3688
      %v3690 = vpop.f32.mrb[0].mxu0
      %3691 = vmatprep.mubr.f32.mxu0 0.0
      %3692 = vmatmul.mubr.f32.gmra.mrb[0].mxu0 %v3480
      %v3693 = vpop.f32.mrb[0].mxu0
      %v3694 = vadd.f32 0.0, %v3693
      %v3695 = vpop.f32.mrb[0].mxu0
      %3696 = vmatprep.mubr.f32.mxu0 0.0
      %3697 = vmatmul.mubr.f32.gmra.mrb[0].mxu0 %v3483
      %v3698 = vpop.f32.mrb[0].mxu0
      %v3699 = vadd.f32 0.0, %v3698
      %v3700 = vpop.f32.mrb[0].mxu0
      %3701 = vmatprep.mubr.f32.mxu0 0.0
      %3702 = vmatmul.mubr.f32.gmra.mrb[0].mxu0 %v3486
      %v3703 = vpop.f32.mrb[0].mxu0
      %v3704 = vadd.f32 0.0, %v3703
      %v3705 = vpop.f32.mrb[0].mxu0
      %3706 = vmatprep.mubr.f32.mxu0 0.0
      %3707 = vmatmul.mubr.f32.gmra.mrb[0].mxu0 %v3489
      %v3708 = vpop.f32.mrb[0].mxu0
      %v3709 = vadd.f32 0.0, %v3708
      %v3710 = vpop.f32.mrb[0].mxu0
      %3711 = vmatprep.mubr.f32.mxu0 0.0
      %3712 = vmatmul.mubr.f32.gmra.mrb[0].mxu0 %v3492
      %v3713 = vpop.f32.mrb[0].mxu0
      %v3714 = vadd.f32 0.0, %v3713
      %v3715 = vpop.f32.mrb[0].mxu0
      %3716 = vmatprep.mubr.f32.mxu0 0.0
      %3717 = vmatmul.mubr.f32.gmra.mrb[0].mxu0 %v3495
      %v3718 = vpop.f32.mrb[0].mxu0
      %v3719 = vadd.f32 0.0, %v3718
      %v3720 = vpop.f32.mrb[0].mxu0
      %3721 = vmatprep.mubr.f32.mxu0 0.0
      %3722 = vmatmul.mubr.f32.gmra.mrb[0].mxu0 %v3498
      %v3723 = vpop.f32.mrb[0].mxu0
      %v3724 = vadd.f32 0.0, %v3723
      %v3725 = vpop.f32.mrb[0].mxu0
      %3726 = vmatprep.mubr.f32.mxu0 0.0
      %3727 = vmatmul.mubr.f32.gmra.mrb[0].mxu0 %v3501
      %v3728 = vpop.f32.mrb[0].mxu0
      %v3729 = vadd.f32 0.0, %v3728
      %v3730 = vpop.f32.mrb[0].mxu0
      %3731 = vmatprep.mubr.f32.mxu0 0.0
      %3732 = vmatmul.mubr.f32.gmra.mrb[0].mxu0 %v3504
      %v3733 = vpop.f32.mrb[0].mxu0
      %v3734 = vadd.f32 0.0, %v3733
      %v3735 = vpop.f32.mrb[0].mxu0
      %3736 = vmatprep.mubr.f32.mxu0 0.0
      %3737 = vmatmul.mubr.f32.gmra.mrb[0].mxu0 %v3507
      %v3738 = vpop.f32.mrb[0].mxu0
      %v3739 = vadd.f32 0.0, %v3738
      %v3740 = vpop.f32.mrb[0].mxu0
      %3741 = vmatprep.mubr.f32.mxu0 0.0
      %3742 = vmatmul.mubr.f32.gmra.mrb[0].mxu0 %v3510
      %v3743 = vpop.f32.mrb[0].mxu0
      %v3744 = vadd.f32 0.0, %v3743
      %v3745 = vpop.f32.mrb[0].mxu0
      %3746 = vmatprep.mubr.f32.mxu0 0.0
      %3747 = vmatmul.mubr.f32.gmra.mrb[0].mxu0 %v3513
      %v3748 = vpop.f32.mrb[0].mxu0
      %v3749 = vadd.f32 0.0, %v3748
      %v3750 = vpop.f32.mrb[0].mxu0
      %3751 = vmatprep.mubr.f32.mxu0 0.0
      %3752 = vmatmul.mubr.f32.gmra.mrb[0].mxu0 %v3516
      %v3753 = vpop.f32.mrb[0].mxu0
      %v3754 = vadd.f32 0.0, %v3753
      %v3755 = vpop.f32.mrb[0].mxu0
      %3756 = vmatprep.mubr.f32.mxu0 0.0
      %3757 = vmatmul.mubr.f32.gmra.mrb[0].mxu0 %v3519
      %v3758 = vpop.f32.mrb[0].mxu0
      %v3759 = vadd.f32 0.0, %v3758
      %v3760 = vpop.f32.mrb[0].mxu0
      %3761 = vmatprep.mubr.f32.mxu0 0.0
      %3762 = vmatmul.mubr.f32.gmra.mrb[0].mxu0 %v3522
      %v3763 = vpop.f32.mrb[0].mxu0
      %v3764 = vadd.f32 0.0, %v3763
      %v3765 = vpop.f32.mrb[0].mxu0
      %3766 = vmatprep.mubr.f32.mxu0 0.0
      %3767 = vmatmul.mubr.f32.gmra.mrb[0].mxu0 %v3525
      %v3768 = vpop.f32.mrb[0].mxu0
      %v3769 = vadd.f32 0.0, %v3768
      %v3770 = vpop.f32.mrb[0].mxu0
      %3771 = vdwg.mxu0
      %v3772 = vadd.f32 %v3345, %v3594
      %v3773 = vadd.f32 %v3346, %v3599
      %v3774 = vadd.f32 %v3347, %v3604
      %v3775 = vadd.f32 %v3348, %v3609
      %v3776 = vadd.f32 %v3349, %v3614
      %v3777 = vadd.f32 %v3350, %v3619
      %v3778 = vadd.f32 %v3351, %v3624
      %v3779 = vadd.f32 %v3352, %v3629
      %v3780 = vadd.f32 %v3353, %v3634
      %v3781 = vadd.f32 %v3354, %v3639
      %v3782 = vadd.f32 %v3355, %v3644
      %v3783 = vadd.f32 %v3356, %v3649
      %v3784 = vadd.f32 %v3357, %v3654
      %v3785 = vadd.f32 %v3358, %v3659
      %v3786 = vadd.f32 %v3359, %v3664
      %v3787 = vadd.f32 %v3360, %v3669
      %v3788 = vadd.f32 %v3361, %v3674
      %v3789 = vadd.f32 %v3362, %v3679
      %v3790 = vadd.f32 %v3363, %v3684
      %v3791 = vadd.f32 %v3364, %v3689
      %v3792 = vadd.f32 %v3365, %v3694
      %v3793 = vadd.f32 %v3366, %v3699
      %v3794 = vadd.f32 %v3367, %v3704
      %v3795 = vadd.f32 %v3368, %v3709
      %v3796 = vadd.f32 %v3369, %v3714
      %v3797 = vadd.f32 %v3370, %v3719
      %v3798 = vadd.f32 %v3371, %v3724
      %v3799 = vadd.f32 %v3372, %v3729
      %v3800 = vadd.f32 %v3373, %v3734
      %v3801 = vadd.f32 %v3374, %v3739
      %v3802 = vadd.f32 %v3375, %v3744
      %v3803 = vadd.f32 %v3376, %v3749
      %v3804 = vadd.f32 %v3377, %v3754
      %v3805 = vadd.f32 %v3378, %v3759
      %v3806 = vadd.f32 %v3379, %v3764
      %v3807 = vadd.f32 %v3380, %v3769
      %v3808 = vld [vmem:[%s460 + $0x26] sm:$0xff]
      %v3809 = vld [vmem:[%s460 + $0x2e] sm:$0xff]
      %v3810 = vld [vmem:[%s460 + $0x36] sm:$0xff]
      %v3811 = vld [vmem:[%s460 + $0x3e] sm:$0xff]
      %v3812 = vld [vmem:[%s460 + $0x46] sm:$0xff]
      %v3813 = vld [vmem:[%s460 + $0x4e] sm:$0xff]
      %v3814 = vld [vmem:[%s460 + $0x56] sm:$0xff]
      %v3815 = vld [vmem:[%s460 + $0x5e] sm:$0xff]
      %v3816 = vld [vmem:[%s460 + $0x66] sm:$0xff]
      %v3817 = vld [vmem:[%s460 + $0x6e] sm:$0xff]
      %v3818 = vld [vmem:[%s460 + $0x76] sm:$0xff]
      %v3819 = vld [vmem:[%s460 + $0x7e] sm:$0xff]
      %v3820 = vld [vmem:[%s460 + $0x86] sm:$0xff]
      %v3821 = vld [vmem:[%s460 + $0x8e] sm:$0xff]
      %v3822 = vld [vmem:[%s460 + $0x96] sm:$0xff]
      %v3823 = vld [vmem:[%s460 + $0x9e] sm:$0xff]
      %v3824 = vld [vmem:[%s460 + $0xa6] sm:$0xff]
      %v3825 = vld [vmem:[%s460 + $0xae] sm:$0xff]
      %v3826 = vld [vmem:[%s460 + $0xb6] sm:$0xff]
      %v3827 = vld [vmem:[%s460 + $0xbe] sm:$0xff]
      %v3828 = vld [vmem:[%s460 + $0xc6] sm:$0xff]
      %v3829 = vld [vmem:[%s460 + $0xce] sm:$0xff]
      %v3830 = vld [vmem:[%s460 + $0xd6] sm:$0xff]
      %v3831 = vld [vmem:[%s460 + $0xde] sm:$0xff]
      %v3832 = vld [vmem:[%s460 + $0xe6] sm:$0xff]
      %v3833 = vld [vmem:[%s460 + $0xee] sm:$0xff]
      %v3834 = vld [vmem:[%s460 + $0xf6] sm:$0xff]
      %v3835 = vld [vmem:[%s460 + $0xfe] sm:$0xff]
      %v3836 = vld [vmem:[%s460 + $0x106] sm:$0xff]
      %v3837 = vld [vmem:[%s460 + $0x10e] sm:$0xff]
      %v3838 = vld [vmem:[%s460 + $0x116] sm:$0xff]
      %v3839 = vld [vmem:[%s460 + $0x11e] sm:$0xff]
      %v3840 = vld [vmem:[%s460 + $0x126] sm:$0xff]
      %v3841 = vld [vmem:[%s460 + $0x12e] sm:$0xff]
      %v3842 = vld [vmem:[%s460 + $0x136] sm:$0xff]
      %v3843 = vld [vmem:[%s460 + $0x13e] sm:$0xff]
      %s3844 = scalar_lea.vmem %s1, 64
      %v3845 = vld [vmem:[%s3844] sm:$0xff]
      %v3847 = vsel %vm539, %v3808, 0
      %v3850 = vsel %vm539, %v3809, 0
      %v3853 = vsel %vm539, %v3810, 0
      %v3856 = vsel %vm539, %v3811, 0
      %v3859 = vsel %vm539, %v3812, 0
      %v3862 = vsel %vm539, %v3813, 0
      %v3865 = vsel %vm539, %v3814, 0
      %v3868 = vsel %vm539, %v3815, 0
      %v3871 = vsel %vm539, %v3816, 0
      %v3874 = vsel %vm539, %v3817, 0
      %v3877 = vsel %vm539, %v3818, 0
      %v3880 = vsel %vm539, %v3819, 0
      %v3883 = vsel %vm539, %v3820, 0
      %v3886 = vsel %vm539, %v3821, 0
      %v3889 = vsel %vm539, %v3822, 0
      %v3892 = vsel %vm539, %v3823, 0
      %v3895 = vsel %vm539, %v3824, 0
      %v3898 = vsel %vm539, %v3825, 0
      %v3901 = vsel %vm539, %v3826, 0
      %v3904 = vsel %vm539, %v3827, 0
      %v3907 = vsel %vm539, %v3828, 0
      %v3910 = vsel %vm539, %v3829, 0
      %v3913 = vsel %vm539, %v3830, 0
      %v3916 = vsel %vm539, %v3831, 0
      %v3919 = vsel %vm539, %v3832, 0
      %v3922 = vsel %vm539, %v3833, 0
      %v3925 = vsel %vm539, %v3834, 0
      %v3928 = vsel %vm539, %v3835, 0
      %v3931 = vsel %vm539, %v3836, 0
      %v3934 = vsel %vm539, %v3837, 0
      %v3937 = vsel %vm539, %v3838, 0
      %v3940 = vsel %vm539, %v3839, 0
      %v3943 = vsel %vm539, %v3840, 0
      %v3946 = vsel %vm539, %v3841, 0
      %v3949 = vsel %vm539, %v3842, 0
      %v3952 = vsel %vm539, %v3843, 0
      %3954 = vmatprep.subr.mxu0 0.0
      %3955 = vmatpush1.msra.mxu0 %v3845
      %3956 = vmatprep.subr.mxu0 0.0
      %3957 = vmatpush1.msra.mxu0 0.0
      %3958 = vmatprep.subr.mxu0 0.0
      %3959 = vmatpush1.msra.mxu0 0.0
      %3960 = vmatprep.subr.mxu0 0.0
      %3961 = vmatpush1.msra.mxu0 0.0
      %3962 = vmatprep.subr.mxu0 0.0
      %3963 = vmatpush1.msra.mxu0 0.0
      %3964 = vmatprep.subr.mxu0 0.0
      %3965 = vmatpush1.msra.mxu0 0.0
      %3966 = vmatprep.subr.mxu0 0.0
      %3967 = vmatpush1.msra.mxu0 0.0
      %3968 = vmatprep.subr.mxu0 0.0
      %3969 = vmatpush1.msra.mxu0 0.0
      %3970 = vmatprep.subr.mxu0 0.0
      %3971 = vmatpush1.msra.mxu0 0.0
      %3972 = vmatprep.subr.mxu0 0.0
      %3973 = vmatpush1.msra.mxu0 0.0
      %3974 = vmatprep.subr.mxu0 0.0
      %3975 = vmatpush1.msra.mxu0 0.0
      %3976 = vmatprep.subr.mxu0 0.0
      %3977 = vmatpush1.msra.mxu0 0.0
      %3978 = vmatprep.subr.mxu0 0.0
      %3979 = vmatpush1.msra.mxu0 0.0
      %3980 = vmatprep.subr.mxu0 0.0
      %3981 = vmatpush1.msra.mxu0 0.0
      %3982 = vmatprep.subr.mxu0 0.0
      %3983 = vmatpush1.msra.mxu0 0.0
      %3984 = vmatprep.subr.mxu0 0.0
      %3985 = vmatpush1.msra.mxu0 0.0
      %3986 = vmatprep.subr.mxu0 0.0
      %3987 = vmatpush1.msra.mxu0 0.0
      %3988 = vmatprep.subr.mxu0 0.0
      %3989 = vmatpush1.msra.mxu0 0.0
      %3990 = vmatprep.subr.mxu0 0.0
      %3991 = vmatpush1.msra.mxu0 0.0
      %3992 = vmatprep.subr.mxu0 0.0
      %3993 = vmatpush1.msra.mxu0 0.0
      %3994 = vmatprep.subr.mxu0 0.0
      %3995 = vmatpush1.msra.mxu0 0.0
      %3996 = vmatprep.subr.mxu0 0.0
      %3997 = vmatpush1.msra.mxu0 0.0
      %3998 = vmatprep.subr.mxu0 0.0
      %3999 = vmatpush1.msra.mxu0 0.0
      %4000 = vmatprep.subr.mxu0 0.0
      %4001 = vmatpush1.msra.mxu0 0.0
      %4002 = vmatprep.subr.mxu0 0.0
      %4003 = vmatpush1.msra.mxu0 0.0
      %4004 = vmatprep.subr.mxu0 0.0
      %4005 = vmatpush1.msra.mxu0 0.0
      %4006 = vmatprep.subr.mxu0 0.0
      %4007 = vmatpush1.msra.mxu0 0.0
      %4008 = vmatprep.subr.mxu0 0.0
      %4009 = vmatpush1.msra.mxu0 0.0
      %4010 = vmatprep.subr.mxu0 0.0
      %4011 = vmatpush1.msra.mxu0 0.0
      %4012 = vmatprep.subr.mxu0 0.0
      %4013 = vmatpush1.msra.mxu0 0.0
      %4014 = vmatprep.subr.mxu0 0.0
      %4015 = vmatpush1.msra.mxu0 0.0
      %4016 = vmatprep.subr.mxu0 0.0
      %4017 = vmatpush1.msra.mxu0 0.0
      %4018 = vmatprep.mubr.f32.mxu0 0.0
      %4019 = vmatmul.mubr.f32.gmra.mrb[0].mxu0 %v3847
      %v4020 = vpop.f32.mrb[0].mxu0
      %v4021 = vadd.f32 0.0, %v4020
      %v4022 = vpop.f32.mrb[0].mxu0
      %4023 = vmatprep.mubr.f32.mxu0 0.0
      %4024 = vmatmul.mubr.f32.gmra.mrb[0].mxu0 %v3850
      %v4025 = vpop.f32.mrb[0].mxu0
      %v4026 = vadd.f32 0.0, %v4025
      %v4027 = vpop.f32.mrb[0].mxu0
      %4028 = vmatprep.mubr.f32.mxu0 0.0
      %4029 = vmatmul.mubr.f32.gmra.mrb[0].mxu0 %v3853
      %v4030 = vpop.f32.mrb[0].mxu0
      %v4031 = vadd.f32 0.0, %v4030
      %v4032 = vpop.f32.mrb[0].mxu0
      %4033 = vmatprep.mubr.f32.mxu0 0.0
      %4034 = vmatmul.mubr.f32.gmra.mrb[0].mxu0 %v3856
      %v4035 = vpop.f32.mrb[0].mxu0
      %v4036 = vadd.f32 0.0, %v4035
      %v4037 = vpop.f32.mrb[0].mxu0
      %4038 = vmatprep.mubr.f32.mxu0 0.0
      %4039 = vmatmul.mubr.f32.gmra.mrb[0].mxu0 %v3859
      %v4040 = vpop.f32.mrb[0].mxu0
      %v4041 = vadd.f32 0.0, %v4040
      %v4042 = vpop.f32.mrb[0].mxu0
      %4043 = vmatprep.mubr.f32.mxu0 0.0
      %4044 = vmatmul.mubr.f32.gmra.mrb[0].mxu0 %v3862
      %v4045 = vpop.f32.mrb[0].mxu0
      %v4046 = vadd.f32 0.0, %v4045
      %v4047 = vpop.f32.mrb[0].mxu0
      %4048 = vmatprep.mubr.f32.mxu0 0.0
      %4049 = vmatmul.mubr.f32.gmra.mrb[0].mxu0 %v3865
      %v4050 = vpop.f32.mrb[0].mxu0
      %v4051 = vadd.f32 0.0, %v4050
      %v4052 = vpop.f32.mrb[0].mxu0
      %4053 = vmatprep.mubr.f32.mxu0 0.0
      %4054 = vmatmul.mubr.f32.gmra.mrb[0].mxu0 %v3868
      %v4055 = vpop.f32.mrb[0].mxu0
      %v4056 = vadd.f32 0.0, %v4055
      %v4057 = vpop.f32.mrb[0].mxu0
      %4058 = vmatprep.mubr.f32.mxu0 0.0
      %4059 = vmatmul.mubr.f32.gmra.mrb[0].mxu0 %v3871
      %v4060 = vpop.f32.mrb[0].mxu0
      %v4061 = vadd.f32 0.0, %v4060
      %v4062 = vpop.f32.mrb[0].mxu0
      %4063 = vmatprep.mubr.f32.mxu0 0.0
      %4064 = vmatmul.mubr.f32.gmra.mrb[0].mxu0 %v3874
      %v4065 = vpop.f32.mrb[0].mxu0
      %v4066 = vadd.f32 0.0, %v4065
      %v4067 = vpop.f32.mrb[0].mxu0
      %4068 = vmatprep.mubr.f32.mxu0 0.0
      %4069 = vmatmul.mubr.f32.gmra.mrb[0].mxu0 %v3877
      %v4070 = vpop.f32.mrb[0].mxu0
      %v4071 = vadd.f32 0.0, %v4070
      %v4072 = vpop.f32.mrb[0].mxu0
      %4073 = vmatprep.mubr.f32.mxu0 0.0
      %4074 = vmatmul.mubr.f32.gmra.mrb[0].mxu0 %v3880
      %v4075 = vpop.f32.mrb[0].mxu0
      %v4076 = vadd.f32 0.0, %v4075
      %v4077 = vpop.f32.mrb[0].mxu0
      %4078 = vmatprep.mubr.f32.mxu0 0.0
      %4079 = vmatmul.mubr.f32.gmra.mrb[0].mxu0 %v3883
      %v4080 = vpop.f32.mrb[0].mxu0
      %v4081 = vadd.f32 0.0, %v4080
      %v4082 = vpop.f32.mrb[0].mxu0
      %4083 = vmatprep.mubr.f32.mxu0 0.0
      %4084 = vmatmul.mubr.f32.gmra.mrb[0].mxu0 %v3886
      %v4085 = vpop.f32.mrb[0].mxu0
      %v4086 = vadd.f32 0.0, %v4085
      %v4087 = vpop.f32.mrb[0].mxu0
      %4088 = vmatprep.mubr.f32.mxu0 0.0
      %4089 = vmatmul.mubr.f32.gmra.mrb[0].mxu0 %v3889
      %v4090 = vpop.f32.mrb[0].mxu0
      %v4091 = vadd.f32 0.0, %v4090
      %v4092 = vpop.f32.mrb[0].mxu0
      %4093 = vmatprep.mubr.f32.mxu0 0.0
      %4094 = vmatmul.mubr.f32.gmra.mrb[0].mxu0 %v3892
      %v4095 = vpop.f32.mrb[0].mxu0
      %v4096 = vadd.f32 0.0, %v4095
      %v4097 = vpop.f32.mrb[0].mxu0
      %4098 = vmatprep.mubr.f32.mxu0 0.0
      %4099 = vmatmul.mubr.f32.gmra.mrb[0].mxu0 %v3895
      %v4100 = vpop.f32.mrb[0].mxu0
      %v4101 = vadd.f32 0.0, %v4100
      %v4102 = vpop.f32.mrb[0].mxu0
      %4103 = vmatprep.mubr.f32.mxu0 0.0
      %4104 = vmatmul.mubr.f32.gmra.mrb[0].mxu0 %v3898
      %v4105 = vpop.f32.mrb[0].mxu0
      %v4106 = vadd.f32 0.0, %v4105
      %v4107 = vpop.f32.mrb[0].mxu0
      %4108 = vmatprep.mubr.f32.mxu0 0.0
      %4109 = vmatmul.mubr.f32.gmra.mrb[0].mxu0 %v3901
      %v4110 = vpop.f32.mrb[0].mxu0
      %v4111 = vadd.f32 0.0, %v4110
      %v4112 = vpop.f32.mrb[0].mxu0
      %4113 = vmatprep.mubr.f32.mxu0 0.0
      %4114 = vmatmul.mubr.f32.gmra.mrb[0].mxu0 %v3904
      %v4115 = vpop.f32.mrb[0].mxu0
      %v4116 = vadd.f32 0.0, %v4115
      %v4117 = vpop.f32.mrb[0].mxu0
      %4118 = vmatprep.mubr.f32.mxu0 0.0
      %4119 = vmatmul.mubr.f32.gmra.mrb[0].mxu0 %v3907
      %v4120 = vpop.f32.mrb[0].mxu0
      %v4121 = vadd.f32 0.0, %v4120
      %v4122 = vpop.f32.mrb[0].mxu0
      %4123 = vmatprep.mubr.f32.mxu0 0.0
      %4124 = vmatmul.mubr.f32.gmra.mrb[0].mxu0 %v3910
      %v4125 = vpop.f32.mrb[0].mxu0
      %v4126 = vadd.f32 0.0, %v4125
      %v4127 = vpop.f32.mrb[0].mxu0
      %4128 = vmatprep.mubr.f32.mxu0 0.0
      %4129 = vmatmul.mubr.f32.gmra.mrb[0].mxu0 %v3913
      %v4130 = vpop.f32.mrb[0].mxu0
      %v4131 = vadd.f32 0.0, %v4130
      %v4132 = vpop.f32.mrb[0].mxu0
      %4133 = vmatprep.mubr.f32.mxu0 0.0
      %4134 = vmatmul.mubr.f32.gmra.mrb[0].mxu0 %v3916
      %v4135 = vpop.f32.mrb[0].mxu0
      %v4136 = vadd.f32 0.0, %v4135
      %v4137 = vpop.f32.mrb[0].mxu0
      %4138 = vmatprep.mubr.f32.mxu0 0.0
      %4139 = vmatmul.mubr.f32.gmra.mrb[0].mxu0 %v3919
      %v4140 = vpop.f32.mrb[0].mxu0
      %v4141 = vadd.f32 0.0, %v4140
      %v4142 = vpop.f32.mrb[0].mxu0
      %4143 = vmatprep.mubr.f32.mxu0 0.0
      %4144 = vmatmul.mubr.f32.gmra.mrb[0].mxu0 %v3922
      %v4145 = vpop.f32.mrb[0].mxu0
      %v4146 = vadd.f32 0.0, %v4145
      %v4147 = vpop.f32.mrb[0].mxu0
      %4148 = vmatprep.mubr.f32.mxu0 0.0
      %4149 = vmatmul.mubr.f32.gmra.mrb[0].mxu0 %v3925
      %v4150 = vpop.f32.mrb[0].mxu0
      %v4151 = vadd.f32 0.0, %v4150
      %v4152 = vpop.f32.mrb[0].mxu0
      %4153 = vmatprep.mubr.f32.mxu0 0.0
      %4154 = vmatmul.mubr.f32.gmra.mrb[0].mxu0 %v3928
      %v4155 = vpop.f32.mrb[0].mxu0
      %v4156 = vadd.f32 0.0, %v4155
      %v4157 = vpop.f32.mrb[0].mxu0
      %4158 = vmatprep.mubr.f32.mxu0 0.0
      %4159 = vmatmul.mubr.f32.gmra.mrb[0].mxu0 %v3931
      %v4160 = vpop.f32.mrb[0].mxu0
      %v4161 = vadd.f32 0.0, %v4160
      %v4162 = vpop.f32.mrb[0].mxu0
      %4163 = vmatprep.mubr.f32.mxu0 0.0
      %4164 = vmatmul.mubr.f32.gmra.mrb[0].mxu0 %v3934
      %v4165 = vpop.f32.mrb[0].mxu0
      %v4166 = vadd.f32 0.0, %v4165
      %v4167 = vpop.f32.mrb[0].mxu0
      %4168 = vmatprep.mubr.f32.mxu0 0.0
      %4169 = vmatmul.mubr.f32.gmra.mrb[0].mxu0 %v3937
      %v4170 = vpop.f32.mrb[0].mxu0
      %v4171 = vadd.f32 0.0, %v4170
      %v4172 = vpop.f32.mrb[0].mxu0
      %4173 = vmatprep.mubr.f32.mxu0 0.0
      %4174 = vmatmul.mubr.f32.gmra.mrb[0].mxu0 %v3940
      %v4175 = vpop.f32.mrb[0].mxu0
      %v4176 = vadd.f32 0.0, %v4175
      %v4177 = vpop.f32.mrb[0].mxu0
      %4178 = vmatprep.mubr.f32.mxu0 0.0
      %4179 = vmatmul.mubr.f32.gmra.mrb[0].mxu0 %v3943
      %v4180 = vpop.f32.mrb[0].mxu0
      %v4181 = vadd.f32 0.0, %v4180
      %v4182 = vpop.f32.mrb[0].mxu0
      %4183 = vmatprep.mubr.f32.mxu0 0.0
      %4184 = vmatmul.mubr.f32.gmra.mrb[0].mxu0 %v3946
      %v4185 = vpop.f32.mrb[0].mxu0
      %v4186 = vadd.f32 0.0, %v4185
      %v4187 = vpop.f32.mrb[0].mxu0
      %4188 = vmatprep.mubr.f32.mxu0 0.0
      %4189 = vmatmul.mubr.f32.gmra.mrb[0].mxu0 %v3949
      %v4190 = vpop.f32.mrb[0].mxu0
      %v4191 = vadd.f32 0.0, %v4190
      %v4192 = vpop.f32.mrb[0].mxu0
      %4193 = vmatprep.mubr.f32.mxu0 0.0
      %4194 = vmatmul.mubr.f32.gmra.mrb[0].mxu0 %v3952
      %v4195 = vpop.f32.mrb[0].mxu0
      %v4196 = vadd.f32 0.0, %v4195
      %v4197 = vpop.f32.mrb[0].mxu0
      %4198 = vdwg.mxu0
      %v4199 = vadd.f32 %v3772, %v4021
      %v4200 = vadd.f32 %v3773, %v4026
      %v4201 = vadd.f32 %v3774, %v4031
      %v4202 = vadd.f32 %v3775, %v4036
      %v4203 = vadd.f32 %v3776, %v4041
      %v4204 = vadd.f32 %v3777, %v4046
      %v4205 = vadd.f32 %v3778, %v4051
      %v4206 = vadd.f32 %v3779, %v4056
      %v4207 = vadd.f32 %v3780, %v4061
      %v4208 = vadd.f32 %v3781, %v4066
      %v4209 = vadd.f32 %v3782, %v4071
      %v4210 = vadd.f32 %v3783, %v4076
      %v4211 = vadd.f32 %v3784, %v4081
      %v4212 = vadd.f32 %v3785, %v4086
      %v4213 = vadd.f32 %v3786, %v4091
      %v4214 = vadd.f32 %v3787, %v4096
      %v4215 = vadd.f32 %v3788, %v4101
      %v4216 = vadd.f32 %v3789, %v4106
      %v4217 = vadd.f32 %v3790, %v4111
      %v4218 = vadd.f32 %v3791, %v4116
      %v4219 = vadd.f32 %v3792, %v4121
      %v4220 = vadd.f32 %v3793, %v4126
      %v4221 = vadd.f32 %v3794, %v4131
      %v4222 = vadd.f32 %v3795, %v4136
      %v4223 = vadd.f32 %v3796, %v4141
      %v4224 = vadd.f32 %v3797, %v4146
      %v4225 = vadd.f32 %v3798, %v4151
      %v4226 = vadd.f32 %v3799, %v4156
      %v4227 = vadd.f32 %v3800, %v4161
      %v4228 = vadd.f32 %v3801, %v4166
      %v4229 = vadd.f32 %v3802, %v4171
      %v4230 = vadd.f32 %v3803, %v4176
      %v4231 = vadd.f32 %v3804, %v4181
      %v4232 = vadd.f32 %v3805, %v4186
      %v4233 = vadd.f32 %v3806, %v4191
      %v4234 = vadd.f32 %v3807, %v4196
      %v4235 = vld [vmem:[%s2] sm:$0x1]
      %v4237 = vlaneseq
      %v4238 = vshrl.u32 %v4237, 7
      %v4239 = vsub.s32 0, %v4238
      %v4240 = vrot.slane %v4235, %v4239
      %v4242 = vadd.f32 %v4199, %v4240
      %v4243 = vadd.f32 %v4200, %v4240
      %v4244 = vadd.f32 %v4201, %v4240
      %v4245 = vadd.f32 %v4202, %v4240
      %v4246 = vadd.f32 %v4203, %v4240
      %v4247 = vadd.f32 %v4204, %v4240
      %v4248 = vadd.f32 %v4205, %v4240
      %v4249 = vadd.f32 %v4206, %v4240
      %v4250 = vadd.f32 %v4207, %v4240
      %v4251 = vadd.f32 %v4208, %v4240
      %v4252 = vadd.f32 %v4209, %v4240
      %v4253 = vadd.f32 %v4210, %v4240
      %v4254 = vadd.f32 %v4211, %v4240
      %v4255 = vadd.f32 %v4212, %v4240
      %v4256 = vadd.f32 %v4213, %v4240
      %v4257 = vadd.f32 %v4214, %v4240
      %v4258 = vadd.f32 %v4215, %v4240
      %v4259 = vadd.f32 %v4216, %v4240
      %v4260 = vadd.f32 %v4217, %v4240
      %v4261 = vadd.f32 %v4218, %v4240
      %v4262 = vadd.f32 %v4219, %v4240
      %v4263 = vadd.f32 %v4220, %v4240
      %v4264 = vadd.f32 %v4221, %v4240
      %v4265 = vadd.f32 %v4222, %v4240
      %v4266 = vadd.f32 %v4223, %v4240
      %v4267 = vadd.f32 %v4224, %v4240
      %v4268 = vadd.f32 %v4225, %v4240
      %v4269 = vadd.f32 %v4226, %v4240
      %v4270 = vadd.f32 %v4227, %v4240
      %v4271 = vadd.f32 %v4228, %v4240
      %v4272 = vadd.f32 %v4229, %v4240
      %v4273 = vadd.f32 %v4230, %v4240
      %v4274 = vadd.f32 %v4231, %v4240
      %v4275 = vadd.f32 %v4232, %v4240
      %v4276 = vadd.f32 %v4233, %v4240
      %v4277 = vadd.f32 %v4234, %v4240
      %v4278 = vmax.f32 %v4242, 0.0
      %v4279 = vmax.f32 %v4243, 0.0
      %v4280 = vmax.f32 %v4244, 0.0
      %v4281 = vmax.f32 %v4245, 0.0
      %v4282 = vmax.f32 %v4246, 0.0
      %v4283 = vmax.f32 %v4247, 0.0
      %v4284 = vmax.f32 %v4248, 0.0
      %v4285 = vmax.f32 %v4249, 0.0
      %v4286 = vmax.f32 %v4250, 0.0
      %v4287 = vmax.f32 %v4251, 0.0
      %v4288 = vmax.f32 %v4252, 0.0
      %v4289 = vmax.f32 %v4253, 0.0
      %v4290 = vmax.f32 %v4254, 0.0
      %v4291 = vmax.f32 %v4255, 0.0
      %v4292 = vmax.f32 %v4256, 0.0
      %v4293 = vmax.f32 %v4257, 0.0
      %v4294 = vmax.f32 %v4258, 0.0
      %v4295 = vmax.f32 %v4259, 0.0
      %v4296 = vmax.f32 %v4260, 0.0
      %v4297 = vmax.f32 %v4261, 0.0
      %v4298 = vmax.f32 %v4262, 0.0
      %v4299 = vmax.f32 %v4263, 0.0
      %v4300 = vmax.f32 %v4264, 0.0
      %v4301 = vmax.f32 %v4265, 0.0
      %v4302 = vmax.f32 %v4266, 0.0
      %v4303 = vmax.f32 %v4267, 0.0
      %v4304 = vmax.f32 %v4268, 0.0
      %v4305 = vmax.f32 %v4269, 0.0
      %v4306 = vmax.f32 %v4270, 0.0
      %v4307 = vmax.f32 %v4271, 0.0
      %v4308 = vmax.f32 %v4272, 0.0
      %v4309 = vmax.f32 %v4273, 0.0
      %v4310 = vmax.f32 %v4274, 0.0
      %v4311 = vmax.f32 %v4275, 0.0
      %v4312 = vmax.f32 %v4276, 0.0
      %v4313 = vmax.f32 %v4277, 0.0
      %v4314 = vld [vmem:[%s3] sm:$0x7]
      %v4316 = vlaneseq
      %v4317 = vshrl.u32 %v4316, 7
      %v4318 = vsub.s32 0, %v4317
      %v4319 = vrot.slane %v4314, %v4318
      %v4320 = vlaneseq
      %v4321 = vshrl.u32 %v4320, 7
      %v4322 = vsub.s32 1, %v4321
      %v4323 = vrot.slane %v4314, %v4322
      %v4324 = vlaneseq
      %v4325 = vshrl.u32 %v4324, 7
      %v4326 = vsub.s32 2, %v4325
      %v4327 = vrot.slane %v4314, %v4326
      %vm4330 = vcmask 261120
      %v4331 = vsel %vm4330, %v4327, 0
      %4333 = vmatprep.subr.mxu0 0.0
      %4334 = vmatpush1.msra.mxu0 %v4278
      %4335 = vmatprep.subr.mxu0 0.0
      %4336 = vmatpush1.msra.mxu0 %v4279
      %4337 = vmatprep.subr.mxu0 0.0
      %4338 = vmatpush1.msra.mxu0 %v4280
      %4339 = vmatprep.subr.mxu0 0.0
      %4340 = vmatpush1.msra.mxu0 %v4281
      %4341 = vmatprep.subr.mxu0 0.0
      %4342 = vmatpush1.msra.mxu0 %v4282
      %4343 = vmatprep.subr.mxu0 0.0
      %4344 = vmatpush1.msra.mxu0 %v4283
      %4345 = vmatprep.subr.mxu0 0.0
      %4346 = vmatpush1.msra.mxu0 %v4284
      %4347 = vmatprep.subr.mxu0 0.0
      %4348 = vmatpush1.msra.mxu0 %v4285
      %4349 = vmatprep.subr.mxu0 0.0
      %4350 = vmatpush1.msra.mxu0 %v4286
      %4351 = vmatprep.subr.mxu0 0.0
      %4352 = vmatpush1.msra.mxu0 %v4287
      %4353 = vmatprep.subr.mxu0 0.0
      %4354 = vmatpush1.msra.mxu0 %v4288
      %4355 = vmatprep.subr.mxu0 0.0
      %4356 = vmatpush1.msra.mxu0 %v4289
      %4357 = vmatprep.subr.mxu0 0.0
      %4358 = vmatpush1.msra.mxu0 %v4290
      %4359 = vmatprep.subr.mxu0 0.0
      %4360 = vmatpush1.msra.mxu0 %v4291
      %4361 = vmatprep.subr.mxu0 0.0
      %4362 = vmatpush1.msra.mxu0 %v4292
      %4363 = vmatprep.subr.mxu0 0.0
      %4364 = vmatpush1.msra.mxu0 %v4293
      %4365 = vmatprep.subr.mxu0 0.0
      %4366 = vmatpush1.msra.mxu0 %v4294
      %4367 = vmatprep.subr.mxu0 0.0
      %4368 = vmatpush1.msra.mxu0 %v4295
      %4369 = vmatprep.subr.mxu0 0.0
      %4370 = vmatpush1.msra.mxu0 %v4296
      %4371 = vmatprep.subr.mxu0 0.0
      %4372 = vmatpush1.msra.mxu0 %v4297
      %4373 = vmatprep.subr.mxu0 0.0
      %4374 = vmatpush1.msra.mxu0 %v4298
      %4375 = vmatprep.subr.mxu0 0.0
      %4376 = vmatpush1.msra.mxu0 %v4299
      %4377 = vmatprep.subr.mxu0 0.0
      %4378 = vmatpush1.msra.mxu0 %v4300
      %4379 = vmatprep.subr.mxu0 0.0
      %4380 = vmatpush1.msra.mxu0 %v4301
      %4381 = vmatprep.subr.mxu0 0.0
      %4382 = vmatpush1.msra.mxu0 %v4302
      %4383 = vmatprep.subr.mxu0 0.0
      %4384 = vmatpush1.msra.mxu0 %v4303
      %4385 = vmatprep.subr.mxu0 0.0
      %4386 = vmatpush1.msra.mxu0 %v4304
      %4387 = vmatprep.subr.mxu0 0.0
      %4388 = vmatpush1.msra.mxu0 %v4305
      %4389 = vmatprep.subr.mxu0 0.0
      %4390 = vmatpush1.msra.mxu0 %v4306
      %4391 = vmatprep.subr.mxu0 0.0
      %4392 = vmatpush1.msra.mxu0 %v4307
      %4393 = vmatprep.subr.mxu0 0.0
      %4394 = vmatpush1.msra.mxu0 %v4308
      %4395 = vmatprep.subr.mxu0 0.0
      %4396 = vmatpush1.msra.mxu0 %v4309
      %4397 = vmatprep.mubr.f32.mxu0 %v4323
      %4398 = vmatmul.mubr.f32.gmra.mrb[0].mxu0 %v4319
      %v4399 = vpop.f32.mrb[0].mxu0
      %v4400 = vadd.f32 0.0, %v4399
      %v4401 = vpop.f32.mrb[0].mxu0
      %4402 = vdwg.mxu0
      %4403 = vmatprep.subr.mxu0 0.0
      %4404 = vmatpush1.msra.mxu0 %v4310
      %4405 = vmatprep.subr.mxu0 0.0
      %4406 = vmatpush1.msra.mxu0 %v4311
      %4407 = vmatprep.subr.mxu0 0.0
      %4408 = vmatpush1.msra.mxu0 %v4312
      %4409 = vmatprep.subr.mxu0 0.0
      %4410 = vmatpush1.msra.mxu0 %v4313
      %4411 = vmatprep.subr.mxu0 0.0
      %4412 = vmatpush1.msra.mxu0 0.0
      %4413 = vmatprep.subr.mxu0 0.0
      %4414 = vmatpush1.msra.mxu0 0.0
      %4415 = vmatprep.subr.mxu0 0.0
      %4416 = vmatpush1.msra.mxu0 0.0
      %4417 = vmatprep.subr.mxu0 0.0
      %4418 = vmatpush1.msra.mxu0 0.0
      %4419 = vmatprep.subr.mxu0 0.0
      %4420 = vmatpush1.msra.mxu0 0.0
      %4421 = vmatprep.subr.mxu0 0.0
      %4422 = vmatpush1.msra.mxu0 0.0
      %4423 = vmatprep.subr.mxu0 0.0
      %4424 = vmatpush1.msra.mxu0 0.0
      %4425 = vmatprep.subr.mxu0 0.0
      %4426 = vmatpush1.msra.mxu0 0.0
      %4427 = vmatprep.subr.mxu0 0.0
      %4428 = vmatpush1.msra.mxu0 0.0
      %4429 = vmatprep.subr.mxu0 0.0
      %4430 = vmatpush1.msra.mxu0 0.0
      %4431 = vmatprep.subr.mxu0 0.0
      %4432 = vmatpush1.msra.mxu0 0.0
      %4433 = vmatprep.subr.mxu0 0.0
      %4434 = vmatpush1.msra.mxu0 0.0
      %4435 = vmatprep.subr.mxu0 0.0
      %4436 = vmatpush1.msra.mxu0 0.0
      %4437 = vmatprep.subr.mxu0 0.0
      %4438 = vmatpush1.msra.mxu0 0.0
      %4439 = vmatprep.subr.mxu0 0.0
      %4440 = vmatpush1.msra.mxu0 0.0
      %4441 = vmatprep.subr.mxu0 0.0
      %4442 = vmatpush1.msra.mxu0 0.0
      %4443 = vmatprep.subr.mxu0 0.0
      %4444 = vmatpush1.msra.mxu0 0.0
      %4445 = vmatprep.subr.mxu0 0.0
      %4446 = vmatpush1.msra.mxu0 0.0
      %4447 = vmatprep.subr.mxu0 0.0
      %4448 = vmatpush1.msra.mxu0 0.0
      %4449 = vmatprep.subr.mxu0 0.0
      %4450 = vmatpush1.msra.mxu0 0.0
      %4451 = vmatprep.subr.mxu0 0.0
      %4452 = vmatpush1.msra.mxu0 0.0
      %4453 = vmatprep.subr.mxu0 0.0
      %4454 = vmatpush1.msra.mxu0 0.0
      %4455 = vmatprep.subr.mxu0 0.0
      %4456 = vmatpush1.msra.mxu0 0.0
      %4457 = vmatprep.subr.mxu0 0.0
      %4458 = vmatpush1.msra.mxu0 0.0
      %4459 = vmatprep.subr.mxu0 0.0
      %4460 = vmatpush1.msra.mxu0 0.0
      %4461 = vmatprep.subr.mxu0 0.0
      %4462 = vmatpush1.msra.mxu0 0.0
      %4463 = vmatprep.subr.mxu0 0.0
      %4464 = vmatpush1.msra.mxu0 0.0
      %4465 = vmatprep.subr.mxu0 0.0
      %4466 = vmatpush1.msra.mxu0 0.0
      %4467 = vmatprep.mubr.f32.mxu0 0.0
      %4468 = vmatmul.mubr.f32.gmra.mrb[0].mxu0 %v4331
      %v4469 = vpop.f32.mrb[0].mxu0
      %v4470 = vadd.f32 %v4400, %v4469
      %v4471 = vpop.f32.mrb[0].mxu0
      %4472 = vdwg.mxu0
      %v4473 = vld [vmem:[%s4] sm:$0xff]
      %v4474 = vld [vmem:[%s4 + $0x8] sm:$0xff]
      %v4475 = vld [vmem:[%s4 + $0x10] sm:$0xff]
      %v4476 = vld [vmem:[%s4 + $0x18] sm:$0xff]
      %v4477 = vld [vmem:[%s4 + $0x20] sm:$0xff]
      %v4478 = vld [vmem:[%s4 + $0x28] sm:$0xff]
      %v4479 = vld [vmem:[%s4 + $0x30] sm:$0xff]
      %v4480 = vld [vmem:[%s4 + $0x38] sm:$0xff]
      %v4481 = vld [vmem:[%s5] sm:$0x1]
      %vm4482 = vcmask 523264
      %v4484 = vsel %vm4482, %v4470, 0
      %4486 = vmatprep.subr.mxu0 0.0
      %4487 = vmatpush1.msra.mxu0 %v4473
      %4488 = vmatprep.subr.mxu0 0.0
      %4489 = vmatpush1.msra.mxu0 %v4474
      %4490 = vmatprep.subr.mxu0 0.0
      %4491 = vmatpush1.msra.mxu0 %v4475
      %4492 = vmatprep.subr.mxu0 0.0
      %4493 = vmatpush1.msra.mxu0 %v4476
      %4494 = vmatprep.subr.mxu0 0.0
      %4495 = vmatpush1.msra.mxu0 %v4477
      %4496 = vmatprep.subr.mxu0 0.0
      %4497 = vmatpush1.msra.mxu0 %v4478
      %4498 = vmatprep.subr.mxu0 0.0
      %4499 = vmatpush1.msra.mxu0 %v4479
      %4500 = vmatprep.subr.mxu0 0.0
      %4501 = vmatpush1.msra.mxu0 %v4480
      %4502 = vmatprep.subr.mxu0 0.0
      %4503 = vmatpush1.msra.mxu0 0.0
      %4504 = vmatprep.subr.mxu0 0.0
      %4505 = vmatpush1.msra.mxu0 0.0
      %4506 = vmatprep.subr.mxu0 0.0
      %4507 = vmatpush1.msra.mxu0 0.0
      %4508 = vmatprep.subr.mxu0 0.0
      %4509 = vmatpush1.msra.mxu0 0.0
      %4510 = vmatprep.subr.mxu0 0.0
      %4511 = vmatpush1.msra.mxu0 0.0
      %4512 = vmatprep.subr.mxu0 0.0
      %4513 = vmatpush1.msra.mxu0 0.0
      %4514 = vmatprep.subr.mxu0 0.0
      %4515 = vmatpush1.msra.mxu0 0.0
      %4516 = vmatprep.subr.mxu0 0.0
      %4517 = vmatpush1.msra.mxu0 0.0
      %4518 = vmatprep.subr.mxu0 0.0
      %4519 = vmatpush1.msra.mxu0 0.0
      %4520 = vmatprep.subr.mxu0 0.0
      %4521 = vmatpush1.msra.mxu0 0.0
      %4522 = vmatprep.subr.mxu0 0.0
      %4523 = vmatpush1.msra.mxu0 0.0
      %4524 = vmatprep.subr.mxu0 0.0
      %4525 = vmatpush1.msra.mxu0 0.0
      %4526 = vmatprep.subr.mxu0 0.0
      %4527 = vmatpush1.msra.mxu0 0.0
      %4528 = vmatprep.subr.mxu0 0.0
      %4529 = vmatpush1.msra.mxu0 0.0
      %4530 = vmatprep.subr.mxu0 0.0
      %4531 = vmatpush1.msra.mxu0 0.0
      %4532 = vmatprep.subr.mxu0 0.0
      %4533 = vmatpush1.msra.mxu0 0.0
      %4534 = vmatprep.subr.mxu0 0.0
      %4535 = vmatpush1.msra.mxu0 0.0
      %4536 = vmatprep.subr.mxu0 0.0
      %4537 = vmatpush1.msra.mxu0 0.0
      %4538 = vmatprep.subr.mxu0 0.0
      %4539 = vmatpush1.msra.mxu0 0.0
      %4540 = vmatprep.subr.mxu0 0.0
      %4541 = vmatpush1.msra.mxu0 0.0
      %4542 = vmatprep.subr.mxu0 0.0
      %4543 = vmatpush1.msra.mxu0 0.0
      %4544 = vmatprep.subr.mxu0 0.0
      %4545 = vmatpush1.msra.mxu0 0.0
      %4546 = vmatprep.subr.mxu0 0.0
      %4547 = vmatpush1.msra.mxu0 0.0
      %4548 = vmatprep.subr.mxu0 0.0
      %4549 = vmatpush1.msra.mxu0 0.0
      %4550 = vmatprep.mubr.f32.mxu0 0.0
      %4551 = vmatmul.mubr.f32.gmra.mrb[0].mxu0 %v4484
      %v4552 = vpop.f32.mrb[0].mxu0
      %v4553 = vadd.f32 %v4481, %v4552
      %v4554 = vpop.f32.mrb[0].mxu0
      %4555 = vdwg.mxu0
      %v4556 = vmax.f32 %v4553, 0.0
      %v4557 = vld [vmem:[%s6] sm:$0xff]
      %v4558 = vld [vmem:[%s6 + $0x8] sm:$0xff]
      %v4559 = vld [vmem:[%s6 + $0x10] sm:$0xff]
      %v4560 = vld [vmem:[%s6 + $0x18] sm:$0xff]
      %v4561 = vld [vmem:[%s6 + $0x20] sm:$0xff]
      %v4562 = vld [vmem:[%s6 + $0x28] sm:$0xff]
      %v4563 = vld [vmem:[%s6 + $0x30] sm:$0xff]
      %v4564 = vld [vmem:[%s6 + $0x38] sm:$0xff]
      %v4565 = vld [vmem:[%s6 + $0x40] sm:$0xff]
      %v4566 = vld [vmem:[%s6 + $0x48] sm:$0xff]
      %v4567 = vld [vmem:[%s6 + $0x50] sm:$0xff]
      %v4568 = vld [vmem:[%s6 + $0x58] sm:$0xff]
      %v4569 = vld [vmem:[%s6 + $0x60] sm:$0xff]
      %v4570 = vld [vmem:[%s6 + $0x68] sm:$0xff]
      %v4571 = vld [vmem:[%s6 + $0x70] sm:$0xff]
      %v4572 = vld [vmem:[%s6 + $0x78] sm:$0xff]
      %v4573 = vld [vmem:[%s6 + $0x80] sm:$0xff]
      %v4574 = vld [vmem:[%s6 + $0x88] sm:$0xff]
      %v4575 = vld [vmem:[%s6 + $0x90] sm:$0xff]
      %v4576 = vld [vmem:[%s6 + $0x98] sm:$0xff]
      %v4577 = vld [vmem:[%s6 + $0xa0] sm:$0xff]
      %v4578 = vld [vmem:[%s6 + $0xa8] sm:$0xff]
      %v4579 = vld [vmem:[%s6 + $0xb0] sm:$0xff]
      %v4580 = vld [vmem:[%s6 + $0xb8] sm:$0xff]
      %v4581 = vld [vmem:[%s6 + $0xc0] sm:$0xff]
      %v4582 = vld [vmem:[%s6 + $0xc8] sm:$0xff]
      %v4583 = vld [vmem:[%s6 + $0xd0] sm:$0xff]
      %v4584 = vld [vmem:[%s6 + $0xd8] sm:$0xff]
      %v4585 = vld [vmem:[%s6 + $0xe0] sm:$0xff]
      %v4586 = vld [vmem:[%s6 + $0xe8] sm:$0xff]
      %v4587 = vld [vmem:[%s6 + $0xf0] sm:$0xff]
      %v4588 = vld [vmem:[%s6 + $0xf8] sm:$0xff]
      %v4589 = vld [vmem:[%s7] sm:$0x3]
      %v4591 = vlaneseq
      %v4592 = vshrl.u32 %v4591, 7
      %v4593 = vsub.s32 0, %v4592
      %v4594 = vrot.slane %v4589, %v4593
      %v4595 = vlaneseq
      %v4596 = vshrl.u32 %v4595, 7
      %v4597 = vsub.s32 1, %v4596
      %v4598 = vrot.slane %v4589, %v4597
      %4601 = vmatprep.subr.mxu0 %v4558
      %4602 = vmatpush1.msra.mxu0 %v4557
      %4603 = vmatprep.subr.mxu0 %v4560
      %4604 = vmatpush1.msra.mxu0 %v4559
      %4605 = vmatprep.subr.mxu0 %v4562
      %4606 = vmatpush1.msra.mxu0 %v4561
      %4607 = vmatprep.subr.mxu0 %v4564
      %4608 = vmatpush1.msra.mxu0 %v4563
      %4609 = vmatprep.subr.mxu0 %v4566
      %4610 = vmatpush1.msra.mxu0 %v4565
      %4611 = vmatprep.subr.mxu0 %v4568
      %4612 = vmatpush1.msra.mxu0 %v4567
      %4613 = vmatprep.subr.mxu0 %v4570
      %4614 = vmatpush1.msra.mxu0 %v4569
      %4615 = vmatprep.subr.mxu0 %v4572
      %4616 = vmatpush1.msra.mxu0 %v4571
      %4617 = vmatprep.subr.mxu0 %v4574
      %4618 = vmatpush1.msra.mxu0 %v4573
      %4619 = vmatprep.subr.mxu0 %v4576
      %4620 = vmatpush1.msra.mxu0 %v4575
      %4621 = vmatprep.subr.mxu0 %v4578
      %4622 = vmatpush1.msra.mxu0 %v4577
      %4623 = vmatprep.subr.mxu0 %v4580
      %4624 = vmatpush1.msra.mxu0 %v4579
      %4625 = vmatprep.subr.mxu0 %v4582
      %4626 = vmatpush1.msra.mxu0 %v4581
      %4627 = vmatprep.subr.mxu0 %v4584
      %4628 = vmatpush1.msra.mxu0 %v4583
      %4629 = vmatprep.subr.mxu0 %v4586
      %4630 = vmatpush1.msra.mxu0 %v4585
      %4631 = vmatprep.subr.mxu0 %v4588
      %4632 = vmatpush1.msra.mxu0 %v4587
      %4633 = vmatprep.subr.mxu0 0.0
      %4634 = vmatpush1.msra.mxu0 0.0
      %4635 = vmatprep.subr.mxu0 0.0
      %4636 = vmatpush1.msra.mxu0 0.0
      %4637 = vmatprep.subr.mxu0 0.0
      %4638 = vmatpush1.msra.mxu0 0.0
      %4639 = vmatprep.subr.mxu0 0.0
      %4640 = vmatpush1.msra.mxu0 0.0
      %4641 = vmatprep.subr.mxu0 0.0
      %4642 = vmatpush1.msra.mxu0 0.0
      %4643 = vmatprep.subr.mxu0 0.0
      %4644 = vmatpush1.msra.mxu0 0.0
      %4645 = vmatprep.subr.mxu0 0.0
      %4646 = vmatpush1.msra.mxu0 0.0
      %4647 = vmatprep.subr.mxu0 0.0
      %4648 = vmatpush1.msra.mxu0 0.0
      %4649 = vmatprep.subr.mxu0 0.0
      %4650 = vmatpush1.msra.mxu0 0.0
      %4651 = vmatprep.subr.mxu0 0.0
      %4652 = vmatpush1.msra.mxu0 0.0
      %4653 = vmatprep.subr.mxu0 0.0
      %4654 = vmatpush1.msra.mxu0 0.0
      %4655 = vmatprep.subr.mxu0 0.0
      %4656 = vmatpush1.msra.mxu0 0.0
      %4657 = vmatprep.subr.mxu0 0.0
      %4658 = vmatpush1.msra.mxu0 0.0
      %4659 = vmatprep.subr.mxu0 0.0
      %4660 = vmatpush1.msra.mxu0 0.0
      %4661 = vmatprep.subr.mxu0 0.0
      %4662 = vmatpush1.msra.mxu0 0.0
      %4663 = vmatprep.subr.mxu0 0.0
      %4664 = vmatpush1.msra.mxu0 0.0
      %4665 = vmatprep.mubr.f32.mxu0 0.0
      %4666 = vmatmul.mubr.f32.gmra.mrb[0].mxu0 %v4556
      %v4667 = vpop.f32.mrb[0].mxu0
      %v4668 = vadd.f32 %v4594, %v4667
      %v4669 = vpop.f32.mrb[0].mxu0
      %v4670 = vadd.f32 %v4598, %v4669
      %4671 = vdwg.mxu0
      %v4672 = vmax.f32 %v4668, 0.0
      %v4673 = vmax.f32 %v4670, 0.0
      %v4674 = vld [vmem:[%s8] sm:$0xff]
      %v4675 = vld [vmem:[%s8 + $0x8] sm:$0xff]
      %v4676 = vld [vmem:[%s8 + $0x10] sm:$0xff]
      %v4677 = vld [vmem:[%s8 + $0x18] sm:$0xff]
      %v4678 = vld [vmem:[%s8 + $0x20] sm:$0xff]
      %v4679 = vld [vmem:[%s8 + $0x28] sm:$0xff]
      %v4680 = vld [vmem:[%s8 + $0x30] sm:$0xff]
      %v4681 = vld [vmem:[%s8 + $0x38] sm:$0xff]
      %v4682 = vld [vmem:[%s8 + $0x40] sm:$0xff]
      %v4683 = vld [vmem:[%s8 + $0x48] sm:$0xff]
      %v4684 = vld [vmem:[%s8 + $0x50] sm:$0xff]
      %v4685 = vld [vmem:[%s8 + $0x58] sm:$0xff]
      %v4686 = vld [vmem:[%s8 + $0x60] sm:$0xff]
      %v4687 = vld [vmem:[%s8 + $0x68] sm:$0xff]
      %v4688 = vld [vmem:[%s8 + $0x70] sm:$0xff]
      %v4689 = vld [vmem:[%s8 + $0x78] sm:$0xff]
      %v4690 = vld [vmem:[%s8 + $0x80] sm:$0xff]
      %v4691 = vld [vmem:[%s8 + $0x88] sm:$0xff]
      %v4692 = vld [vmem:[%s8 + $0x90] sm:$0xff]
      %v4693 = vld [vmem:[%s8 + $0x98] sm:$0xff]
      %v4694 = vld [vmem:[%s8 + $0xa0] sm:$0xff]
      %v4695 = vld [vmem:[%s8 + $0xa8] sm:$0xff]
      %v4696 = vld [vmem:[%s8 + $0xb0] sm:$0xff]
      %v4697 = vld [vmem:[%s8 + $0xb8] sm:$0xff]
      %v4698 = vld [vmem:[%s8 + $0xc0] sm:$0xff]
      %v4699 = vld [vmem:[%s8 + $0xc8] sm:$0xff]
      %v4700 = vld [vmem:[%s8 + $0xd0] sm:$0xff]
      %v4701 = vld [vmem:[%s8 + $0xd8] sm:$0xff]
      %v4702 = vld [vmem:[%s8 + $0xe0] sm:$0xff]
      %v4703 = vld [vmem:[%s8 + $0xe8] sm:$0xff]
      %v4704 = vld [vmem:[%s8 + $0xf0] sm:$0xff]
      %v4705 = vld [vmem:[%s8 + $0xf8] sm:$0xff]
      %v4706 = vld [vmem:[%s8 + $0x100] sm:$0xff]
      %v4707 = vld [vmem:[%s8 + $0x108] sm:$0xff]
      %v4708 = vld [vmem:[%s8 + $0x110] sm:$0xff]
      %v4709 = vld [vmem:[%s8 + $0x118] sm:$0xff]
      %v4710 = vld [vmem:[%s8 + $0x120] sm:$0xff]
      %v4711 = vld [vmem:[%s8 + $0x128] sm:$0xff]
      %v4712 = vld [vmem:[%s8 + $0x130] sm:$0xff]
      %v4713 = vld [vmem:[%s8 + $0x138] sm:$0xff]
      %v4714 = vld [vmem:[%s8 + $0x140] sm:$0xff]
      %v4715 = vld [vmem:[%s8 + $0x148] sm:$0xff]
      %v4716 = vld [vmem:[%s8 + $0x150] sm:$0xff]
      %v4717 = vld [vmem:[%s8 + $0x158] sm:$0xff]
      %v4718 = vld [vmem:[%s8 + $0x160] sm:$0xff]
      %v4719 = vld [vmem:[%s8 + $0x168] sm:$0xff]
      %v4720 = vld [vmem:[%s8 + $0x170] sm:$0xff]
      %v4721 = vld [vmem:[%s8 + $0x178] sm:$0xff]
      %v4722 = vld [vmem:[%s8 + $0x180] sm:$0xff]
      %v4723 = vld [vmem:[%s8 + $0x188] sm:$0xff]
      %v4724 = vld [vmem:[%s8 + $0x190] sm:$0xff]
      %v4725 = vld [vmem:[%s8 + $0x198] sm:$0xff]
      %v4726 = vld [vmem:[%s8 + $0x1a0] sm:$0xff]
      %v4727 = vld [vmem:[%s8 + $0x1a8] sm:$0xff]
      %v4728 = vld [vmem:[%s8 + $0x1b0] sm:$0xff]
      %v4729 = vld [vmem:[%s8 + $0x1b8] sm:$0xff]
      %v4730 = vld [vmem:[%s8 + $0x1c0] sm:$0xff]
      %v4731 = vld [vmem:[%s8 + $0x1c8] sm:$0xff]
      %v4732 = vld [vmem:[%s8 + $0x1d0] sm:$0xff]
      %v4733 = vld [vmem:[%s8 + $0x1d8] sm:$0xff]
      %v4734 = vld [vmem:[%s8 + $0x1e0] sm:$0xff]
      %v4735 = vld [vmem:[%s8 + $0x1e8] sm:$0xff]
      %v4736 = vld [vmem:[%s8 + $0x1f0] sm:$0xff]
      %v4737 = vld [vmem:[%s8 + $0x1f8] sm:$0xff]
      %v4738 = vld [vmem:[%s8 + $0x200] sm:$0xff]
      %v4739 = vld [vmem:[%s8 + $0x208] sm:$0xff]
      %v4740 = vld [vmem:[%s8 + $0x210] sm:$0xff]
      %v4741 = vld [vmem:[%s8 + $0x218] sm:$0xff]
      %v4742 = vld [vmem:[%s8 + $0x220] sm:$0xff]
      %v4743 = vld [vmem:[%s8 + $0x228] sm:$0xff]
      %v4744 = vld [vmem:[%s8 + $0x230] sm:$0xff]
      %v4745 = vld [vmem:[%s8 + $0x238] sm:$0xff]
      %v4746 = vld [vmem:[%s8 + $0x240] sm:$0xff]
      %v4747 = vld [vmem:[%s8 + $0x248] sm:$0xff]
      %v4748 = vld [vmem:[%s8 + $0x250] sm:$0xff]
      %v4749 = vld [vmem:[%s8 + $0x258] sm:$0xff]
      %v4750 = vld [vmem:[%s8 + $0x260] sm:$0xff]
      %v4751 = vld [vmem:[%s8 + $0x268] sm:$0xff]
      %v4752 = vld [vmem:[%s8 + $0x270] sm:$0xff]
      %v4753 = vld [vmem:[%s8 + $0x278] sm:$0xff]
      %v4754 = vld [vmem:[%s8 + $0x280] sm:$0xff]
      %v4755 = vld [vmem:[%s8 + $0x288] sm:$0xff]
      %v4756 = vld [vmem:[%s8 + $0x290] sm:$0xff]
      %v4757 = vld [vmem:[%s8 + $0x298] sm:$0xff]
      %v4758 = vld [vmem:[%s8 + $0x2a0] sm:$0xff]
      %v4759 = vld [vmem:[%s8 + $0x2a8] sm:$0xff]
      %v4760 = vld [vmem:[%s8 + $0x2b0] sm:$0xff]
      %v4761 = vld [vmem:[%s8 + $0x2b8] sm:$0xff]
      %v4762 = vld [vmem:[%s8 + $0x2c0] sm:$0xff]
      %v4763 = vld [vmem:[%s8 + $0x2c8] sm:$0xff]
      %v4764 = vld [vmem:[%s8 + $0x2d0] sm:$0xff]
      %v4765 = vld [vmem:[%s8 + $0x2d8] sm:$0xff]
      %v4766 = vld [vmem:[%s8 + $0x2e0] sm:$0xff]
      %v4767 = vld [vmem:[%s8 + $0x2e8] sm:$0xff]
      %v4768 = vld [vmem:[%s8 + $0x2f0] sm:$0xff]
      %v4769 = vld [vmem:[%s8 + $0x2f8] sm:$0xff]
      %v4770 = vld [vmem:[%s8 + $0x300] sm:$0xff]
      %v4771 = vld [vmem:[%s8 + $0x308] sm:$0xff]
      %v4772 = vld [vmem:[%s8 + $0x310] sm:$0xff]
      %v4773 = vld [vmem:[%s8 + $0x318] sm:$0xff]
      %v4774 = vld [vmem:[%s8 + $0x320] sm:$0xff]
      %v4775 = vld [vmem:[%s8 + $0x328] sm:$0xff]
      %v4776 = vld [vmem:[%s8 + $0x330] sm:$0xff]
      %v4777 = vld [vmem:[%s8 + $0x338] sm:$0xff]
      %v4778 = vld [vmem:[%s8 + $0x340] sm:$0xff]
      %v4779 = vld [vmem:[%s8 + $0x348] sm:$0xff]
      %v4780 = vld [vmem:[%s8 + $0x350] sm:$0xff]
      %v4781 = vld [vmem:[%s8 + $0x358] sm:$0xff]
      %v4782 = vld [vmem:[%s8 + $0x360] sm:$0xff]
      %v4783 = vld [vmem:[%s8 + $0x368] sm:$0xff]
      %v4784 = vld [vmem:[%s8 + $0x370] sm:$0xff]
      %v4785 = vld [vmem:[%s8 + $0x378] sm:$0xff]
      %v4786 = vld [vmem:[%s8 + $0x380] sm:$0xff]
      %v4787 = vld [vmem:[%s8 + $0x388] sm:$0xff]
      %v4788 = vld [vmem:[%s8 + $0x390] sm:$0xff]
      %v4789 = vld [vmem:[%s8 + $0x398] sm:$0xff]
      %v4790 = vld [vmem:[%s8 + $0x3a0] sm:$0xff]
      %v4791 = vld [vmem:[%s8 + $0x3a8] sm:$0xff]
      %v4792 = vld [vmem:[%s8 + $0x3b0] sm:$0xff]
      %v4793 = vld [vmem:[%s8 + $0x3b8] sm:$0xff]
      %v4794 = vld [vmem:[%s8 + $0x3c0] sm:$0xff]
      %v4795 = vld [vmem:[%s8 + $0x3c8] sm:$0xff]
      %v4796 = vld [vmem:[%s8 + $0x3d0] sm:$0xff]
      %v4797 = vld [vmem:[%s8 + $0x3d8] sm:$0xff]
      %v4798 = vld [vmem:[%s8 + $0x3e0] sm:$0xff]
      %v4799 = vld [vmem:[%s8 + $0x3e8] sm:$0xff]
      %v4800 = vld [vmem:[%s8 + $0x3f0] sm:$0xff]
      %v4801 = vld [vmem:[%s8 + $0x3f8] sm:$0xff]
      %v4802 = vld [vmem:[%s9] sm:$0xf]
      %v4804 = vlaneseq
      %v4805 = vshrl.u32 %v4804, 7
      %v4806 = vsub.s32 0, %v4805
      %v4807 = vrot.slane %v4802, %v4806
      %v4808 = vlaneseq
      %v4809 = vshrl.u32 %v4808, 7
      %v4810 = vsub.s32 1, %v4809
      %v4811 = vrot.slane %v4802, %v4810
      %v4812 = vlaneseq
      %v4813 = vshrl.u32 %v4812, 7
      %v4814 = vsub.s32 2, %v4813
      %v4815 = vrot.slane %v4802, %v4814
      %v4816 = vlaneseq
      %v4817 = vshrl.u32 %v4816, 7
      %v4818 = vsub.s32 3, %v4817
      %v4819 = vrot.slane %v4802, %v4818
      %4824 = vmatprep.subr.mxu0 %v4675
      %4825 = vmatpush1.msra.mxu0 %v4674
      %4826 = vmatprep.subr.mxu0 %v4679
      %4827 = vmatpush1.msra.mxu0 %v4678
      %4828 = vmatprep.subr.mxu0 %v4683
      %4829 = vmatpush1.msra.mxu0 %v4682
      %4830 = vmatprep.subr.mxu0 %v4687
      %4831 = vmatpush1.msra.mxu0 %v4686
      %4832 = vmatprep.subr.mxu0 %v4691
      %4833 = vmatpush1.msra.mxu0 %v4690
      %4834 = vmatprep.subr.mxu0 %v4695
      %4835 = vmatpush1.msra.mxu0 %v4694
      %4836 = vmatprep.subr.mxu0 %v4699
      %4837 = vmatpush1.msra.mxu0 %v4698
      %4838 = vmatprep.subr.mxu0 %v4703
      %4839 = vmatpush1.msra.mxu0 %v4702
      %4840 = vmatprep.subr.mxu0 %v4707
      %4841 = vmatpush1.msra.mxu0 %v4706
      %4842 = vmatprep.subr.mxu0 %v4711
      %4843 = vmatpush1.msra.mxu0 %v4710
      %4844 = vmatprep.subr.mxu0 %v4715
      %4845 = vmatpush1.msra.mxu0 %v4714
      %4846 = vmatprep.subr.mxu0 %v4719
      %4847 = vmatpush1.msra.mxu0 %v4718
      %4848 = vmatprep.subr.mxu0 %v4723
      %4849 = vmatpush1.msra.mxu0 %v4722
      %4850 = vmatprep.subr.mxu0 %v4727
      %4851 = vmatpush1.msra.mxu0 %v4726
      %4852 = vmatprep.subr.mxu0 %v4731
      %4853 = vmatpush1.msra.mxu0 %v4730
      %4854 = vmatprep.subr.mxu0 %v4735
      %4855 = vmatpush1.msra.mxu0 %v4734
      %4856 = vmatprep.subr.mxu0 %v4739
      %4857 = vmatpush1.msra.mxu0 %v4738
      %4858 = vmatprep.subr.mxu0 %v4743
      %4859 = vmatpush1.msra.mxu0 %v4742
      %4860 = vmatprep.subr.mxu0 %v4747
      %4861 = vmatpush1.msra.mxu0 %v4746
      %4862 = vmatprep.subr.mxu0 %v4751
      %4863 = vmatpush1.msra.mxu0 %v4750
      %4864 = vmatprep.subr.mxu0 %v4755
      %4865 = vmatpush1.msra.mxu0 %v4754
      %4866 = vmatprep.subr.mxu0 %v4759
      %4867 = vmatpush1.msra.mxu0 %v4758
      %4868 = vmatprep.subr.mxu0 %v4763
      %4869 = vmatpush1.msra.mxu0 %v4762
      %4870 = vmatprep.subr.mxu0 %v4767
      %4871 = vmatpush1.msra.mxu0 %v4766
      %4872 = vmatprep.subr.mxu0 %v4771
      %4873 = vmatpush1.msra.mxu0 %v4770
      %4874 = vmatprep.subr.mxu0 %v4775
      %4875 = vmatpush1.msra.mxu0 %v4774
      %4876 = vmatprep.subr.mxu0 %v4779
      %4877 = vmatpush1.msra.mxu0 %v4778
      %4878 = vmatprep.subr.mxu0 %v4783
      %4879 = vmatpush1.msra.mxu0 %v4782
      %4880 = vmatprep.subr.mxu0 %v4787
      %4881 = vmatpush1.msra.mxu0 %v4786
      %4882 = vmatprep.subr.mxu0 %v4791
      %4883 = vmatpush1.msra.mxu0 %v4790
      %4884 = vmatprep.subr.mxu0 %v4795
      %4885 = vmatpush1.msra.mxu0 %v4794
      %4886 = vmatprep.subr.mxu0 %v4799
      %4887 = vmatpush1.msra.mxu0 %v4798
      %4888 = vmatprep.mubr.f32.mxu0 %v4673
      %4889 = vmatmul.mubr.f32.gmra.mrb[0].mxu0 %v4672
      %v4890 = vpop.f32.mrb[0].mxu0
      %v4891 = vadd.f32 %v4807, %v4890
      %v4892 = vpop.f32.mrb[0].mxu0
      %v4893 = vadd.f32 %v4811, %v4892
      %4894 = vdwg.mxu0
      %4895 = vmatprep.subr.mxu0 %v4677
      %4896 = vmatpush1.msra.mxu0 %v4676
      %4897 = vmatprep.subr.mxu0 %v4681
      %4898 = vmatpush1.msra.mxu0 %v4680
      %4899 = vmatprep.subr.mxu0 %v4685
      %4900 = vmatpush1.msra.mxu0 %v4684
      %4901 = vmatprep.subr.mxu0 %v4689
      %4902 = vmatpush1.msra.mxu0 %v4688
      %4903 = vmatprep.subr.mxu0 %v4693
      %4904 = vmatpush1.msra.mxu0 %v4692
      %4905 = vmatprep.subr.mxu0 %v4697
      %4906 = vmatpush1.msra.mxu0 %v4696
      %4907 = vmatprep.subr.mxu0 %v4701
      %4908 = vmatpush1.msra.mxu0 %v4700
      %4909 = vmatprep.subr.mxu0 %v4705
      %4910 = vmatpush1.msra.mxu0 %v4704
      %4911 = vmatprep.subr.mxu0 %v4709
      %4912 = vmatpush1.msra.mxu0 %v4708
      %4913 = vmatprep.subr.mxu0 %v4713
      %4914 = vmatpush1.msra.mxu0 %v4712
      %4915 = vmatprep.subr.mxu0 %v4717
      %4916 = vmatpush1.msra.mxu0 %v4716
      %4917 = vmatprep.subr.mxu0 %v4721
      %4918 = vmatpush1.msra.mxu0 %v4720
      %4919 = vmatprep.subr.mxu0 %v4725
      %4920 = vmatpush1.msra.mxu0 %v4724
      %4921 = vmatprep.subr.mxu0 %v4729
      %4922 = vmatpush1.msra.mxu0 %v4728
      %4923 = vmatprep.subr.mxu0 %v4733
      %4924 = vmatpush1.msra.mxu0 %v4732
      %4925 = vmatprep.subr.mxu0 %v4737
      %4926 = vmatpush1.msra.mxu0 %v4736
      %4927 = vmatprep.subr.mxu0 %v4741
      %4928 = vmatpush1.msra.mxu0 %v4740
      %4929 = vmatprep.subr.mxu0 %v4745
      %4930 = vmatpush1.msra.mxu0 %v4744
      %4931 = vmatprep.subr.mxu0 %v4749
      %4932 = vmatpush1.msra.mxu0 %v4748
      %4933 = vmatprep.subr.mxu0 %v4753
      %4934 = vmatpush1.msra.mxu0 %v4752
      %4935 = vmatprep.subr.mxu0 %v4757
      %4936 = vmatpush1.msra.mxu0 %v4756
      %4937 = vmatprep.subr.mxu0 %v4761
      %4938 = vmatpush1.msra.mxu0 %v4760
      %4939 = vmatprep.subr.mxu0 %v4765
      %4940 = vmatpush1.msra.mxu0 %v4764
      %4941 = vmatprep.subr.mxu0 %v4769
      %4942 = vmatpush1.msra.mxu0 %v4768
      %4943 = vmatprep.subr.mxu0 %v4773
      %4944 = vmatpush1.msra.mxu0 %v4772
      %4945 = vmatprep.subr.mxu0 %v4777
      %4946 = vmatpush1.msra.mxu0 %v4776
      %4947 = vmatprep.subr.mxu0 %v4781
      %4948 = vmatpush1.msra.mxu0 %v4780
      %4949 = vmatprep.subr.mxu0 %v4785
      %4950 = vmatpush1.msra.mxu0 %v4784
      %4951 = vmatprep.subr.mxu0 %v4789
      %4952 = vmatpush1.msra.mxu0 %v4788
      %4953 = vmatprep.subr.mxu0 %v4793
      %4954 = vmatpush1.msra.mxu0 %v4792
      %4955 = vmatprep.subr.mxu0 %v4797
      %4956 = vmatpush1.msra.mxu0 %v4796
      %4957 = vmatprep.subr.mxu0 %v4801
      %4958 = vmatpush1.msra.mxu0 %v4800
      %4959 = vmatprep.mubr.f32.mxu0 %v4673
      %4960 = vmatmul.mubr.f32.gmra.mrb[0].mxu0 %v4672
      %v4961 = vpop.f32.mrb[0].mxu0
      %v4962 = vadd.f32 %v4815, %v4961
      %v4963 = vpop.f32.mrb[0].mxu0
      %v4964 = vadd.f32 %v4819, %v4963
      %4965 = vdwg.mxu0
      %v4966 = vmax.f32 %v4891, 0.0
      %v4967 = vmax.f32 %v4893, 0.0
      %v4968 = vmax.f32 %v4962, 0.0
      %v4969 = vmax.f32 %v4964, 0.0
      %v4970 = vld [vmem:[%s10] sm:$0xff]
      %v4971 = vld [vmem:[%s10 + $0x8] sm:$0xff]
      %v4972 = vld [vmem:[%s10 + $0x10] sm:$0xff]
      %v4973 = vld [vmem:[%s10 + $0x18] sm:$0xff]
      %v4974 = vld [vmem:[%s10 + $0x20] sm:$0xff]
      %v4975 = vld [vmem:[%s10 + $0x28] sm:$0xff]
      %v4976 = vld [vmem:[%s10 + $0x30] sm:$0xff]
      %v4977 = vld [vmem:[%s10 + $0x38] sm:$0xff]
      %v4978 = vld [vmem:[%s10 + $0x40] sm:$0xff]
      %v4979 = vld [vmem:[%s10 + $0x48] sm:$0xff]
      %v4980 = vld [vmem:[%s10 + $0x50] sm:$0xff]
      %v4981 = vld [vmem:[%s10 + $0x58] sm:$0xff]
      %v4982 = vld [vmem:[%s10 + $0x60] sm:$0xff]
      %v4983 = vld [vmem:[%s10 + $0x68] sm:$0xff]
      %v4984 = vld [vmem:[%s10 + $0x70] sm:$0xff]
      %v4985 = vld [vmem:[%s10 + $0x78] sm:$0xff]
      %v4986 = vld [vmem:[%s10 + $0x80] sm:$0xff]
      %v4987 = vld [vmem:[%s10 + $0x88] sm:$0xff]
      %v4988 = vld [vmem:[%s10 + $0x90] sm:$0xff]
      %v4989 = vld [vmem:[%s10 + $0x98] sm:$0xff]
      %v4990 = vld [vmem:[%s10 + $0xa0] sm:$0xff]
      %v4991 = vld [vmem:[%s10 + $0xa8] sm:$0xff]
      %v4992 = vld [vmem:[%s10 + $0xb0] sm:$0xff]
      %v4993 = vld [vmem:[%s10 + $0xb8] sm:$0xff]
      %v4994 = vld [vmem:[%s10 + $0xc0] sm:$0xff]
      %v4995 = vld [vmem:[%s10 + $0xc8] sm:$0xff]
      %v4996 = vld [vmem:[%s10 + $0xd0] sm:$0xff]
      %v4997 = vld [vmem:[%s10 + $0xd8] sm:$0xff]
      %v4998 = vld [vmem:[%s10 + $0xe0] sm:$0xff]
      %v4999 = vld [vmem:[%s10 + $0xe8] sm:$0xff]
      %v5000 = vld [vmem:[%s10 + $0xf0] sm:$0xff]
      %v5001 = vld [vmem:[%s10 + $0xf8] sm:$0xff]
      %v5002 = vld [vmem:[%s10 + $0x100] sm:$0xff]
      %v5003 = vld [vmem:[%s10 + $0x108] sm:$0xff]
      %v5004 = vld [vmem:[%s10 + $0x110] sm:$0xff]
      %v5005 = vld [vmem:[%s10 + $0x118] sm:$0xff]
      %v5006 = vld [vmem:[%s10 + $0x120] sm:$0xff]
      %v5007 = vld [vmem:[%s10 + $0x128] sm:$0xff]
      %v5008 = vld [vmem:[%s10 + $0x130] sm:$0xff]
      %v5009 = vld [vmem:[%s10 + $0x138] sm:$0xff]
      %v5010 = vld [vmem:[%s10 + $0x140] sm:$0xff]
      %v5011 = vld [vmem:[%s10 + $0x148] sm:$0xff]
      %v5012 = vld [vmem:[%s10 + $0x150] sm:$0xff]
      %v5013 = vld [vmem:[%s10 + $0x158] sm:$0xff]
      %v5014 = vld [vmem:[%s10 + $0x160] sm:$0xff]
      %v5015 = vld [vmem:[%s10 + $0x168] sm:$0xff]
      %v5016 = vld [vmem:[%s10 + $0x170] sm:$0xff]
      %v5017 = vld [vmem:[%s10 + $0x178] sm:$0xff]
      %v5018 = vld [vmem:[%s10 + $0x180] sm:$0xff]
      %v5019 = vld [vmem:[%s10 + $0x188] sm:$0xff]
      %v5020 = vld [vmem:[%s10 + $0x190] sm:$0xff]
      %v5021 = vld [vmem:[%s10 + $0x198] sm:$0xff]
      %v5022 = vld [vmem:[%s10 + $0x1a0] sm:$0xff]
      %v5023 = vld [vmem:[%s10 + $0x1a8] sm:$0xff]
      %v5024 = vld [vmem:[%s10 + $0x1b0] sm:$0xff]
      %v5025 = vld [vmem:[%s10 + $0x1b8] sm:$0xff]
      %v5026 = vld [vmem:[%s10 + $0x1c0] sm:$0xff]
      %v5027 = vld [vmem:[%s10 + $0x1c8] sm:$0xff]
      %v5028 = vld [vmem:[%s10 + $0x1d0] sm:$0xff]
      %v5029 = vld [vmem:[%s10 + $0x1d8] sm:$0xff]
      %v5030 = vld [vmem:[%s10 + $0x1e0] sm:$0xff]
      %v5031 = vld [vmem:[%s10 + $0x1e8] sm:$0xff]
      %v5032 = vld [vmem:[%s10 + $0x1f0] sm:$0xff]
      %v5033 = vld [vmem:[%s10 + $0x1f8] sm:$0xff]
      %v5034 = vld [vmem:[%s10 + $0x200] sm:$0xff]
      %v5035 = vld [vmem:[%s10 + $0x208] sm:$0xff]
      %v5036 = vld [vmem:[%s10 + $0x210] sm:$0xff]
      %v5037 = vld [vmem:[%s10 + $0x218] sm:$0xff]
      %v5038 = vld [vmem:[%s10 + $0x220] sm:$0xff]
      %v5039 = vld [vmem:[%s10 + $0x228] sm:$0xff]
      %v5040 = vld [vmem:[%s10 + $0x230] sm:$0xff]
      %v5041 = vld [vmem:[%s10 + $0x238] sm:$0xff]
      %v5042 = vld [vmem:[%s10 + $0x240] sm:$0xff]
      %v5043 = vld [vmem:[%s10 + $0x248] sm:$0xff]
      %v5044 = vld [vmem:[%s10 + $0x250] sm:$0xff]
      %v5045 = vld [vmem:[%s10 + $0x258] sm:$0xff]
      %v5046 = vld [vmem:[%s10 + $0x260] sm:$0xff]
      %v5047 = vld [vmem:[%s10 + $0x268] sm:$0xff]
      %v5048 = vld [vmem:[%s10 + $0x270] sm:$0xff]
      %v5049 = vld [vmem:[%s10 + $0x278] sm:$0xff]
      %v5050 = vld [vmem:[%s10 + $0x280] sm:$0xff]
      %v5051 = vld [vmem:[%s10 + $0x288] sm:$0xff]
      %v5052 = vld [vmem:[%s10 + $0x290] sm:$0xff]
      %v5053 = vld [vmem:[%s10 + $0x298] sm:$0xff]
      %v5054 = vld [vmem:[%s10 + $0x2a0] sm:$0xff]
      %v5055 = vld [vmem:[%s10 + $0x2a8] sm:$0xff]
      %v5056 = vld [vmem:[%s10 + $0x2b0] sm:$0xff]
      %v5057 = vld [vmem:[%s10 + $0x2b8] sm:$0xff]
      %v5058 = vld [vmem:[%s10 + $0x2c0] sm:$0xff]
      %v5059 = vld [vmem:[%s10 + $0x2c8] sm:$0xff]
      %v5060 = vld [vmem:[%s10 + $0x2d0] sm:$0xff]
      %v5061 = vld [vmem:[%s10 + $0x2d8] sm:$0xff]
      %v5062 = vld [vmem:[%s10 + $0x2e0] sm:$0xff]
      %v5063 = vld [vmem:[%s10 + $0x2e8] sm:$0xff]
      %v5064 = vld [vmem:[%s10 + $0x2f0] sm:$0xff]
      %v5065 = vld [vmem:[%s10 + $0x2f8] sm:$0xff]
      %v5066 = vld [vmem:[%s10 + $0x300] sm:$0xff]
      %v5067 = vld [vmem:[%s10 + $0x308] sm:$0xff]
      %v5068 = vld [vmem:[%s10 + $0x310] sm:$0xff]
      %v5069 = vld [vmem:[%s10 + $0x318] sm:$0xff]
      %v5070 = vld [vmem:[%s10 + $0x320] sm:$0xff]
      %v5071 = vld [vmem:[%s10 + $0x328] sm:$0xff]
      %v5072 = vld [vmem:[%s10 + $0x330] sm:$0xff]
      %v5073 = vld [vmem:[%s10 + $0x338] sm:$0xff]
      %v5074 = vld [vmem:[%s10 + $0x340] sm:$0xff]
      %v5075 = vld [vmem:[%s10 + $0x348] sm:$0xff]
      %v5076 = vld [vmem:[%s10 + $0x350] sm:$0xff]
      %v5077 = vld [vmem:[%s10 + $0x358] sm:$0xff]
      %v5078 = vld [vmem:[%s10 + $0x360] sm:$0xff]
      %v5079 = vld [vmem:[%s10 + $0x368] sm:$0xff]
      %v5080 = vld [vmem:[%s10 + $0x370] sm:$0xff]
      %v5081 = vld [vmem:[%s10 + $0x378] sm:$0xff]
      %v5082 = vld [vmem:[%s10 + $0x380] sm:$0xff]
      %v5083 = vld [vmem:[%s10 + $0x388] sm:$0xff]
      %v5084 = vld [vmem:[%s10 + $0x390] sm:$0xff]
      %v5085 = vld [vmem:[%s10 + $0x398] sm:$0xff]
      %v5086 = vld [vmem:[%s10 + $0x3a0] sm:$0xff]
      %v5087 = vld [vmem:[%s10 + $0x3a8] sm:$0xff]
      %v5088 = vld [vmem:[%s10 + $0x3b0] sm:$0xff]
      %v5089 = vld [vmem:[%s10 + $0x3b8] sm:$0xff]
      %v5090 = vld [vmem:[%s10 + $0x3c0] sm:$0xff]
      %v5091 = vld [vmem:[%s10 + $0x3c8] sm:$0xff]
      %v5092 = vld [vmem:[%s10 + $0x3d0] sm:$0xff]
      %v5093 = vld [vmem:[%s10 + $0x3d8] sm:$0xff]
      %v5094 = vld [vmem:[%s10 + $0x3e0] sm:$0xff]
      %v5095 = vld [vmem:[%s10 + $0x3e8] sm:$0xff]
      %v5096 = vld [vmem:[%s10 + $0x3f0] sm:$0xff]
      %v5097 = vld [vmem:[%s10 + $0x3f8] sm:$0xff]
      %v5098 = vld [vmem:[%s11] sm:$0x3]
      %v5100 = vlaneseq
      %v5101 = vshrl.u32 %v5100, 7
      %v5102 = vsub.s32 0, %v5101
      %v5103 = vrot.slane %v5098, %v5102
      %v5104 = vlaneseq
      %v5105 = vshrl.u32 %v5104, 7
      %v5106 = vsub.s32 1, %v5105
      %v5107 = vrot.slane %v5098, %v5106
      %5110 = vmatprep.subr.mxu0 %v4971
      %5111 = vmatpush1.msra.mxu0 %v4970
      %5112 = vmatprep.subr.mxu0 %v4973
      %5113 = vmatpush1.msra.mxu0 %v4972
      %5114 = vmatprep.subr.mxu0 %v4975
      %5115 = vmatpush1.msra.mxu0 %v4974
      %5116 = vmatprep.subr.mxu0 %v4977
      %5117 = vmatpush1.msra.mxu0 %v4976
      %5118 = vmatprep.subr.mxu0 %v4979
      %5119 = vmatpush1.msra.mxu0 %v4978
      %5120 = vmatprep.subr.mxu0 %v4981
      %5121 = vmatpush1.msra.mxu0 %v4980
      %5122 = vmatprep.subr.mxu0 %v4983
      %5123 = vmatpush1.msra.mxu0 %v4982
      %5124 = vmatprep.subr.mxu0 %v4985
      %5125 = vmatpush1.msra.mxu0 %v4984
      %5126 = vmatprep.subr.mxu0 %v4987
      %5127 = vmatpush1.msra.mxu0 %v4986
      %5128 = vmatprep.subr.mxu0 %v4989
      %5129 = vmatpush1.msra.mxu0 %v4988
      %5130 = vmatprep.subr.mxu0 %v4991
      %5131 = vmatpush1.msra.mxu0 %v4990
      %5132 = vmatprep.subr.mxu0 %v4993
      %5133 = vmatpush1.msra.mxu0 %v4992
      %5134 = vmatprep.subr.mxu0 %v4995
      %5135 = vmatpush1.msra.mxu0 %v4994
      %5136 = vmatprep.subr.mxu0 %v4997
      %5137 = vmatpush1.msra.mxu0 %v4996
      %5138 = vmatprep.subr.mxu0 %v4999
      %5139 = vmatpush1.msra.mxu0 %v4998
      %5140 = vmatprep.subr.mxu0 %v5001
      %5141 = vmatpush1.msra.mxu0 %v5000
      %5142 = vmatprep.subr.mxu0 %v5003
      %5143 = vmatpush1.msra.mxu0 %v5002
      %5144 = vmatprep.subr.mxu0 %v5005
      %5145 = vmatpush1.msra.mxu0 %v5004
      %5146 = vmatprep.subr.mxu0 %v5007
      %5147 = vmatpush1.msra.mxu0 %v5006
      %5148 = vmatprep.subr.mxu0 %v5009
      %5149 = vmatpush1.msra.mxu0 %v5008
      %5150 = vmatprep.subr.mxu0 %v5011
      %5151 = vmatpush1.msra.mxu0 %v5010
      %5152 = vmatprep.subr.mxu0 %v5013
      %5153 = vmatpush1.msra.mxu0 %v5012
      %5154 = vmatprep.subr.mxu0 %v5015
      %5155 = vmatpush1.msra.mxu0 %v5014
      %5156 = vmatprep.subr.mxu0 %v5017
      %5157 = vmatpush1.msra.mxu0 %v5016
      %5158 = vmatprep.subr.mxu0 %v5019
      %5159 = vmatpush1.msra.mxu0 %v5018
      %5160 = vmatprep.subr.mxu0 %v5021
      %5161 = vmatpush1.msra.mxu0 %v5020
      %5162 = vmatprep.subr.mxu0 %v5023
      %5163 = vmatpush1.msra.mxu0 %v5022
      %5164 = vmatprep.subr.mxu0 %v5025
      %5165 = vmatpush1.msra.mxu0 %v5024
      %5166 = vmatprep.subr.mxu0 %v5027
      %5167 = vmatpush1.msra.mxu0 %v5026
      %5168 = vmatprep.subr.mxu0 %v5029
      %5169 = vmatpush1.msra.mxu0 %v5028
      %5170 = vmatprep.subr.mxu0 %v5031
      %5171 = vmatpush1.msra.mxu0 %v5030
      %5172 = vmatprep.subr.mxu0 %v5033
      %5173 = vmatpush1.msra.mxu0 %v5032
      %5174 = vmatprep.mubr.f32.mxu0 %v4967
      %5175 = vmatmul.mubr.f32.gmra.mrb[0].mxu0 %v4966
      %v5176 = vpop.f32.mrb[0].mxu0
      %v5177 = vadd.f32 %v5103, %v5176
      %v5178 = vpop.f32.mrb[0].mxu0
      %v5179 = vadd.f32 %v5107, %v5178
      %5180 = vdwg.mxu0
      %5181 = vmatprep.subr.mxu0 %v5035
      %5182 = vmatpush1.msra.mxu0 %v5034
      %5183 = vmatprep.subr.mxu0 %v5037
      %5184 = vmatpush1.msra.mxu0 %v5036
      %5185 = vmatprep.subr.mxu0 %v5039
      %5186 = vmatpush1.msra.mxu0 %v5038
      %5187 = vmatprep.subr.mxu0 %v5041
      %5188 = vmatpush1.msra.mxu0 %v5040
      %5189 = vmatprep.subr.mxu0 %v5043
      %5190 = vmatpush1.msra.mxu0 %v5042
      %5191 = vmatprep.subr.mxu0 %v5045
      %5192 = vmatpush1.msra.mxu0 %v5044
      %5193 = vmatprep.subr.mxu0 %v5047
      %5194 = vmatpush1.msra.mxu0 %v5046
      %5195 = vmatprep.subr.mxu0 %v5049
      %5196 = vmatpush1.msra.mxu0 %v5048
      %5197 = vmatprep.subr.mxu0 %v5051
      %5198 = vmatpush1.msra.mxu0 %v5050
      %5199 = vmatprep.subr.mxu0 %v5053
      %5200 = vmatpush1.msra.mxu0 %v5052
      %5201 = vmatprep.subr.mxu0 %v5055
      %5202 = vmatpush1.msra.mxu0 %v5054
      %5203 = vmatprep.subr.mxu0 %v5057
      %5204 = vmatpush1.msra.mxu0 %v5056
      %5205 = vmatprep.subr.mxu0 %v5059
      %5206 = vmatpush1.msra.mxu0 %v5058
      %5207 = vmatprep.subr.mxu0 %v5061
      %5208 = vmatpush1.msra.mxu0 %v5060
      %5209 = vmatprep.subr.mxu0 %v5063
      %5210 = vmatpush1.msra.mxu0 %v5062
      %5211 = vmatprep.subr.mxu0 %v5065
      %5212 = vmatpush1.msra.mxu0 %v5064
      %5213 = vmatprep.subr.mxu0 %v5067
      %5214 = vmatpush1.msra.mxu0 %v5066
      %5215 = vmatprep.subr.mxu0 %v5069
      %5216 = vmatpush1.msra.mxu0 %v5068
      %5217 = vmatprep.subr.mxu0 %v5071
      %5218 = vmatpush1.msra.mxu0 %v5070
      %5219 = vmatprep.subr.mxu0 %v5073
      %5220 = vmatpush1.msra.mxu0 %v5072
      %5221 = vmatprep.subr.mxu0 %v5075
      %5222 = vmatpush1.msra.mxu0 %v5074
      %5223 = vmatprep.subr.mxu0 %v5077
      %5224 = vmatpush1.msra.mxu0 %v5076
      %5225 = vmatprep.subr.mxu0 %v5079
      %5226 = vmatpush1.msra.mxu0 %v5078
      %5227 = vmatprep.subr.mxu0 %v5081
      %5228 = vmatpush1.msra.mxu0 %v5080
      %5229 = vmatprep.subr.mxu0 %v5083
      %5230 = vmatpush1.msra.mxu0 %v5082
      %5231 = vmatprep.subr.mxu0 %v5085
      %5232 = vmatpush1.msra.mxu0 %v5084
      %5233 = vmatprep.subr.mxu0 %v5087
      %5234 = vmatpush1.msra.mxu0 %v5086
      %5235 = vmatprep.subr.mxu0 %v5089
      %5236 = vmatpush1.msra.mxu0 %v5088
      %5237 = vmatprep.subr.mxu0 %v5091
      %5238 = vmatpush1.msra.mxu0 %v5090
      %5239 = vmatprep.subr.mxu0 %v5093
      %5240 = vmatpush1.msra.mxu0 %v5092
      %5241 = vmatprep.subr.mxu0 %v5095
      %5242 = vmatpush1.msra.mxu0 %v5094
      %5243 = vmatprep.subr.mxu0 %v5097
      %5244 = vmatpush1.msra.mxu0 %v5096
      %5245 = vmatprep.mubr.f32.mxu0 %v4969
      %5246 = vmatmul.mubr.f32.gmra.mrb[0].mxu0 %v4968
      %v5247 = vpop.f32.mrb[0].mxu0
      %v5248 = vadd.f32 %v5177, %v5247
      %v5249 = vpop.f32.mrb[0].mxu0
      %v5250 = vadd.f32 %v5179, %v5249
      %5251 = vdwg.mxu0
      %v5252 = vmax.f32 %v5248, 0.0
      %v5253 = vmax.f32 %v5250, 0.0
      %v5254 = vld [vmem:[%s12] sm:$0xff]
      %v5255 = vld [vmem:[%s12 + $0x8] sm:$0xff]
      %v5256 = vld [vmem:[%s12 + $0x10] sm:$0xff]
      %v5257 = vld [vmem:[%s12 + $0x18] sm:$0xff]
      %v5258 = vld [vmem:[%s12 + $0x20] sm:$0xff]
      %v5259 = vld [vmem:[%s12 + $0x28] sm:$0xff]
      %v5260 = vld [vmem:[%s12 + $0x30] sm:$0xff]
      %v5261 = vld [vmem:[%s12 + $0x38] sm:$0xff]
      %v5262 = vld [vmem:[%s12 + $0x40] sm:$0xff]
      %v5263 = vld [vmem:[%s12 + $0x48] sm:$0xff]
      %v5264 = vld [vmem:[%s12 + $0x50] sm:$0xff]
      %v5265 = vld [vmem:[%s12 + $0x58] sm:$0xff]
      %v5266 = vld [vmem:[%s12 + $0x60] sm:$0xff]
      %v5267 = vld [vmem:[%s12 + $0x68] sm:$0xff]
      %v5268 = vld [vmem:[%s12 + $0x70] sm:$0xff]
      %v5269 = vld [vmem:[%s12 + $0x78] sm:$0xff]
      %v5270 = vld [vmem:[%s12 + $0x80] sm:$0xff]
      %v5271 = vld [vmem:[%s12 + $0x88] sm:$0xff]
      %v5272 = vld [vmem:[%s12 + $0x90] sm:$0xff]
      %v5273 = vld [vmem:[%s12 + $0x98] sm:$0xff]
      %v5274 = vld [vmem:[%s12 + $0xa0] sm:$0xff]
      %v5275 = vld [vmem:[%s12 + $0xa8] sm:$0xff]
      %v5276 = vld [vmem:[%s12 + $0xb0] sm:$0xff]
      %v5277 = vld [vmem:[%s12 + $0xb8] sm:$0xff]
      %v5278 = vld [vmem:[%s12 + $0xc0] sm:$0xff]
      %v5279 = vld [vmem:[%s12 + $0xc8] sm:$0xff]
      %v5280 = vld [vmem:[%s12 + $0xd0] sm:$0xff]
      %v5281 = vld [vmem:[%s12 + $0xd8] sm:$0xff]
      %v5282 = vld [vmem:[%s12 + $0xe0] sm:$0xff]
      %v5283 = vld [vmem:[%s12 + $0xe8] sm:$0xff]
      %v5284 = vld [vmem:[%s12 + $0xf0] sm:$0xff]
      %v5285 = vld [vmem:[%s12 + $0xf8] sm:$0xff]
      %v5286 = vld [vmem:[%s13] sm:$0x1]
      %5287 = vmatprep.subr.mxu0 0.0
      %5288 = vmatpush1.msra.mxu0 %v5254
      %5289 = vmatprep.subr.mxu0 0.0
      %5290 = vmatpush1.msra.mxu0 %v5255
      %5291 = vmatprep.subr.mxu0 0.0
      %5292 = vmatpush1.msra.mxu0 %v5256
      %5293 = vmatprep.subr.mxu0 0.0
      %5294 = vmatpush1.msra.mxu0 %v5257
      %5295 = vmatprep.subr.mxu0 0.0
      %5296 = vmatpush1.msra.mxu0 %v5258
      %5297 = vmatprep.subr.mxu0 0.0
      %5298 = vmatpush1.msra.mxu0 %v5259
      %5299 = vmatprep.subr.mxu0 0.0
      %5300 = vmatpush1.msra.mxu0 %v5260
      %5301 = vmatprep.subr.mxu0 0.0
      %5302 = vmatpush1.msra.mxu0 %v5261
      %5303 = vmatprep.subr.mxu0 0.0
      %5304 = vmatpush1.msra.mxu0 %v5262
      %5305 = vmatprep.subr.mxu0 0.0
      %5306 = vmatpush1.msra.mxu0 %v5263
      %5307 = vmatprep.subr.mxu0 0.0
      %5308 = vmatpush1.msra.mxu0 %v5264
      %5309 = vmatprep.subr.mxu0 0.0
      %5310 = vmatpush1.msra.mxu0 %v5265
      %5311 = vmatprep.subr.mxu0 0.0
      %5312 = vmatpush1.msra.mxu0 %v5266
      %5313 = vmatprep.subr.mxu0 0.0
      %5314 = vmatpush1.msra.mxu0 %v5267
      %5315 = vmatprep.subr.mxu0 0.0
      %5316 = vmatpush1.msra.mxu0 %v5268
      %5317 = vmatprep.subr.mxu0 0.0
      %5318 = vmatpush1.msra.mxu0 %v5269
      %5319 = vmatprep.subr.mxu0 0.0
      %5320 = vmatpush1.msra.mxu0 %v5270
      %5321 = vmatprep.subr.mxu0 0.0
      %5322 = vmatpush1.msra.mxu0 %v5271
      %5323 = vmatprep.subr.mxu0 0.0
      %5324 = vmatpush1.msra.mxu0 %v5272
      %5325 = vmatprep.subr.mxu0 0.0
      %5326 = vmatpush1.msra.mxu0 %v5273
      %5327 = vmatprep.subr.mxu0 0.0
      %5328 = vmatpush1.msra.mxu0 %v5274
      %5329 = vmatprep.subr.mxu0 0.0
      %5330 = vmatpush1.msra.mxu0 %v5275
      %5331 = vmatprep.subr.mxu0 0.0
      %5332 = vmatpush1.msra.mxu0 %v5276
      %5333 = vmatprep.subr.mxu0 0.0
      %5334 = vmatpush1.msra.mxu0 %v5277
      %5335 = vmatprep.subr.mxu0 0.0
      %5336 = vmatpush1.msra.mxu0 %v5278
      %5337 = vmatprep.subr.mxu0 0.0
      %5338 = vmatpush1.msra.mxu0 %v5279
      %5339 = vmatprep.subr.mxu0 0.0
      %5340 = vmatpush1.msra.mxu0 %v5280
      %5341 = vmatprep.subr.mxu0 0.0
      %5342 = vmatpush1.msra.mxu0 %v5281
      %5343 = vmatprep.subr.mxu0 0.0
      %5344 = vmatpush1.msra.mxu0 %v5282
      %5345 = vmatprep.subr.mxu0 0.0
      %5346 = vmatpush1.msra.mxu0 %v5283
      %5347 = vmatprep.subr.mxu0 0.0
      %5348 = vmatpush1.msra.mxu0 %v5284
      %5349 = vmatprep.subr.mxu0 0.0
      %5350 = vmatpush1.msra.mxu0 %v5285
      %5351 = vmatprep.mubr.f32.mxu0 %v5253
      %5352 = vmatmul.mubr.f32.gmra.mrb[0].mxu0 %v5252
      %v5353 = vpop.f32.mrb[0].mxu0
      %v5354 = vadd.f32 %v5286, %v5353
      %v5355 = vpop.f32.mrb[0].mxu0
      %5356 = vdwg.mxu0
      %v5357 = vxor.u32 %v5354, 2147483648
      %v5358 = vmul.f32 %v5357, 1.442695
      %v5359 = vpow.pop %v5358
      %v5360 = vadd.f32 %v5359, 1.0
      %v5361 = vrcp.pop %v5360
      %v5362 = vmul.f32 1.0, %v5361
      %5363 = vst [vmem:[%s463] sm:$0x1] %v5362
      %p5364 = scmp.lt.s32.totalorder %s25, 1
      %s5365 = scalar_select %p5364, %s25, 1
      %s5366 = scalar_lea.vmem %s14, %s5365
      // Predicated region
      $region77: #{net_forward.1} parent=75 // pred_check
        %p5367 = pneg %p342
      $region78: #{net_forward.1} parent=75 // pred_check_branch
        %5369 = sbr.rel (%p5367) target = $region80
      $region79: #{net_forward.1} parent=75 // pred_region
        _
      $region80: #{net_forward.1} parent=75 // pred_fallthru
        _
    $region76: #{net_forward.1} parent=5 // pred_fallthru
      _
    %p5370 = scmp.le.s32.totalorder 2, %s20
    // Predicated region
    $region81: #{net_forward.1} parent=5 // pred_check
      %p5371 = pneg %p5370
    $region82: #{net_forward.1} parent=5 // pred_check_branch
      %5373 = sbr.rel (%p5371) target = $region84
    $region83: #{net_forward.1} parent=5 // pred_region
      %s5374 = ssub.s32 %s20, 2
      // Predicated region
      $region85: #{net_forward.1} parent=83 // pred_check
        %p5375 = pneg %p348
      $region86: #{net_forward.1} parent=83 // pred_check_branch
        %5377 = sbr.rel (%p5375) target = $region88
      $region87: #{net_forward.1} parent=83 // pred_region
        %p5378 = scmp.lt.s32.totalorder %s26, 1
        %s5379 = scalar_select %p5378, %s26, 1
        %s5380 = scalar_lea.vmem %s14, %s5379
      $region88: #{net_forward.1} parent=83 // pred_fallthru
        _
    $region84: #{net_forward.1} parent=5 // pred_fallthru
      _
  $region6: #{net_forward.1} parent=0 // loop_footer
    %s24 = sadd.s32 1, %s20
  $region7: #{net_forward.1} parent=0 // loop_footer_branch
    %19 = sbr.rel target = $region3
  $region8: #{net_forward.1} parent=0 // loop_exit
    _

</llo_original>
